<compile_context>
chip_gen: v6e
topology: v6e:2x2x1
jax: 0.10.0
libtpu: 0.0.40
codegen_flags: <defaults>
</compile_context>

<pallas_src>
import numpy as np
import jax
import jax.numpy as jnp
from jax import lax
from jax.experimental import pallas as pl
from jax.experimental.pallas import tpu as pltpu

LEAKY_SLOPE = 0.15
BN_EPS = 1e-5


def _round_up(x, m):
    return ((x + m - 1) // m) * m


def _layer_geoms(input_channels, base_filters, embedding_size, H, W):
    chans = [input_channels, base_filters, base_filters * 2, base_filters * 4,
             base_filters * 8, embedding_size]
    geoms = []
    h, w = H, W
    for i in range(5):
        pool = i < 4
        if pool:
            assert h % 2 == 0 and w % 2 == 0, "spatial dims must stay even for MaxPool2d(2)"
        wn = w // 2 if pool else w
        geoms.append(dict(H=h, W=w, Cin=chans[i], Cout=chans[i + 1], pool=pool,
                          hrows=_round_up(h + 2, 8),       # 8-aligned per-image row block
                          li=w * chans[i],                 # input lane width: (w, ci) packed
                          wn=wn, outw=wn * chans[i + 1]))  # output lane width: (wo, co) packed
        if pool:
            h, w = h // 2, w // 2
    return geoms


def _build_conv_mats(kern, scale, g):
    """Fold the 3x3 kernel, the W-direction 'SAME' zero padding, the BN scale and (for pooled
    layers) the W-direction half of MaxPool2d(2) into per-kh block-Toeplitz matrices.

    Returns [Me, Mo] (pooled: even / odd output columns) or [M] (last layer); each matrix has
    shape [3, W*Cin, Wn*Cout] so the conv becomes 3 lane-dense MXU matmuls over row-shifted
    slices of the padded activation buffer."""
    ks = kern.astype(jnp.float32) * scale.astype(jnp.float32)[None, None, None, :]
    Wi, Wn = g["W"], g["wn"]
    stride = 2 if g["pool"] else 1
    mats = []
    for par in ((0, 1) if g["pool"] else (0,)):
        per_dh = []
        for dh in range(3):
            m = jnp.zeros((Wi * g["Cin"], Wn * g["Cout"]), jnp.float32)
            for dw in range(3):
                sel = np.zeros((Wi, Wn), np.float32)
                for wo in range(Wn):
                    w_src = stride * wo + par + dw - 1
                    if 0 <= w_src < Wi:                     # W-direction zero padding
                        sel[w_src, wo] = 1.0
                m = m + jnp.kron(jnp.asarray(sel), ks[dh, dw])
            per_dh.append(m)
        mats.append(jnp.stack(per_dh, axis=0))
    return mats


# ------------------------- fused Pallas kernel -------------------------

def _make_kernel(geoms, B2):
    n_layers = len(geoms)
    n_pool = sum(1 for g in geoms if g["pool"])

    def leaky(v):
        return jnp.where(v >= 0.0, v, LEAKY_SLOPE * v)

    def kernel(*refs):
        pos = 0
        xin_ref = refs[pos]; pos += 1
        layer_refs = []
        for g in geoms:
            n = 3 if g["pool"] else 2                       # (Me, Mo, bias) or (M, bias)
            layer_refs.append(refs[pos:pos + n]); pos += n
        (arows_ref, alanes_ref, dmat_ref,
         w1_ref, b1_ref, w2_ref, b2_ref) = refs[pos:pos + 7]; pos += 7
        out_ref = refs[pos]; pos += 1
        x_bufs = refs[pos:pos + n_layers]; pos += n_layers
        stage_bufs = refs[pos:pos + n_pool]

        # Zero the (tiny) padded activation buffers once: pad rows stay zero and interiors
        # are overwritten below, so no uninitialized VMEM is ever read.
        for buf in x_bufs:
            buf[...] = jnp.zeros_like(buf)

        # Scatter the raw input rows into layer 1's padded buffer (B2 contiguous row copies).
        g0 = geoms[0]
        for b in range(B2):
            x_bufs[0][pl.ds(b * g0["hrows"] + 1, g0["H"]), :] = \
                xin_ref[pl.ds(b * g0["H"], g0["H"]), :]

        stage_i = 0
        y = None
        for i, g in enumerate(geoms):
            cur = x_bufs[i]
            hrows = g["hrows"]
            rspan = B2 * hrows - 2
            if g["pool"]:
                me_ref, mo_ref, bias_ref = layer_refs[i]
                ye = yo = None
                for dh in range(3):                         # conv = 3 lane-dense MXU matmuls
                    xs = cur[pl.ds(dh, rspan), :]
                    te = jnp.dot(xs, me_ref[dh], preferred_element_type=jnp.float32)
                    to = jnp.dot(xs, mo_ref[dh], preferred_element_type=jnp.float32)
                    ye = te if ye is None else ye + te
                    yo = to if yo is None else yo + to
                # BN bias + LeakyReLU (Dropout = identity), then the W-half of MaxPool2d(2).
                wmax = jnp.maximum(leaky(ye + bias_ref[...]), leaky(yo + bias_ref[...]))
                st = stage_bufs[stage_i]; stage_i += 1
                st[pl.ds(0, rspan), :] = wmax
                # H-half of the pool: strided row-pair max straight into the next layer's
                # zero-padded buffer (B2 full-lane-width copies, no compaction loop).
                gn = geoms[i + 1]
                hn = g["H"] // 2
                for b in range(B2):
                    if hn > 1:
                        r0 = st[pl.ds(b * hrows, hn, stride=2), :]
                        r1 = st[pl.ds(b * hrows + 1, hn, stride=2), :]
                    else:
                        r0 = st[pl.ds(b * hrows, 1), :]
                        r1 = st[pl.ds(b * hrows + 1, 1), :]
                    x_bufs[i + 1][pl.ds(b * gn["hrows"] + 1, hn), :] = jnp.maximum(r0, r1)
            else:
                m_ref, bias_ref = layer_refs[i]
                y = None
                for dh in range(3):
                    xs = cur[pl.ds(dh, rspan), :]
                    t = jnp.dot(xs, m_ref[dh], preferred_element_type=jnp.float32)
                    y = t if y is None else y + t
                y = leaky(y + bias_ref[...])

        # AdaptiveAvgPool2d((1,1)) + flatten: two tiny selection/averaging matmuls.
        emb = jnp.dot(arows_ref[...], y, preferred_element_type=jnp.float32)
        emb = jnp.dot(emb, alanes_ref[...], preferred_element_type=jnp.float32)
        # F.normalize(p=2, dim=1): x / max(||x||, 1e-12), via EUP rsqrt.
        ssq = jnp.sum(emb * emb, axis=1, keepdims=True)
        emb = emb * lax.rsqrt(jnp.maximum(ssq, 1e-24))
        # Similarity head on (e1 - e2)^2; the subtraction is a [N, 2N] +/-1 matmul so no
        # value row-slicing is needed.
        d = jnp.dot(dmat_ref[...], emb, preferred_element_type=jnp.float32)
        d = d * d
        hdn = jnp.dot(d, w1_ref[...], preferred_element_type=jnp.float32) + b1_ref[...]
        hdn = leaky(hdn)
        s = jnp.dot(hdn, w2_ref[...], preferred_element_type=jnp.float32) + b2_ref[...]
        out_ref[...] = jax.nn.sigmoid(s)

    return kernel


# ------------------------- wrapper -------------------------

def siamese_forward(params, x1, x2):
    N, Cin, H, W = x1.shape
    base = params["convs"][0]["k"].shape[3]
    E = params["convs"][-1]["k"].shape[3]
    B2 = 2 * N
    geoms = _layer_geoms(Cin, base, E, H, W)

    # Stack both siamese inputs; NCHW -> [B2*H, W*Cin] rows (lane index = w*Cin + ci).
    x = jnp.concatenate([x1, x2], axis=0).astype(jnp.float32)
    x = jnp.transpose(x, (0, 2, 3, 1)).reshape(B2 * H, W * Cin)

    inputs = [x]
    for g, lyr in zip(geoms, params["convs"]):
        inputs.extend(_build_conv_mats(lyr["k"], lyr["scale"], g))
        inputs.append(jnp.tile(lyr["bias"].astype(jnp.float32),
                               (g["wn"],)).reshape(1, g["outw"]))

    # AdaptiveAvgPool((1,1)) row/lane averaging matrices, and the (e1 - e2) matrix.
    g5 = geoms[-1]
    rspan5 = B2 * g5["hrows"] - 2
    arows = np.zeros((B2, rspan5), np.float32)
    for b in range(B2):
        for h in range(g5["H"]):
            arows[b, b * g5["hrows"] + h] = 1.0 / float(g5["H"] * g5["W"])
    alanes = np.zeros((g5["W"] * E, E), np.float32)
    for w in range(g5["W"]):
        alanes[w * E:(w + 1) * E, :] += np.eye(E, dtype=np.float32)
    dmat = np.zeros((N, B2), np.float32)
    dmat[np.arange(N), np.arange(N)] = 1.0
    dmat[np.arange(N), N + np.arange(N)] = -1.0
    inputs += [jnp.asarray(arows), jnp.asarray(alanes), jnp.asarray(dmat),
               params["w1"], params["b1"], params["w2"], params["b2"]]

    # VMEM scratch: padded activation buffers per layer + pooling staging buffers.
    scratch = [pltpu.VMEM((B2 * g["hrows"], g["li"]), jnp.float32) for g in geoms]
    scratch += [pltpu.VMEM((B2 * g["hrows"], g["outw"]), jnp.float32)
                for g in geoms if g["pool"]]

    kernel = _make_kernel(geoms, B2)
    return pl.pallas_call(
        kernel,
        out_shape=jax.ShapeDtypeStruct((N, 1), jnp.float32),
        in_specs=[pl.BlockSpec(memory_space=pltpu.MemorySpace.VMEM)] * len(inputs),
        out_specs=pl.BlockSpec(memory_space=pltpu.MemorySpace.VMEM),
        scratch_shapes=scratch,
    )(*inputs)


# ------------------------- deterministic parameter init -------------------------

def init_params(key, input_channels=1, base_filters=8, embedding_size=32):
    chans = [input_channels, base_filters, base_filters * 2, base_filters * 4,
             base_filters * 8, embedding_size]
    convs = []
    for i in range(5):
        cin, cout = chans[i], chans[i + 1]
        key, kw, kb, kg, kbe, km, kv = jax.random.split(key, 7)
        k = jax.random.normal(kw, (3, 3, cin, cout), jnp.float32) / np.sqrt(9 * cin)
        bconv = 0.05 * jax.random.normal(kb, (cout,), jnp.float32)
        gamma = 1.0 + 0.1 * jax.random.normal(kg, (cout,), jnp.float32)
        beta = 0.05 * jax.random.normal(kbe, (cout,), jnp.float32)
        mean = 0.05 * jax.random.normal(km, (cout,), jnp.float32)
        var = 1.0 + 0.1 * jax.random.uniform(kv, (cout,), jnp.float32)
        scale = gamma / jnp.sqrt(var + BN_EPS)              # fold BN into per-channel affine
        bias = (bconv - mean) * scale + beta
        convs.append({"k": k, "scale": scale, "bias": bias})
    key, k1, kb1, k2, kb2 = jax.random.split(key, 5)
    w1 = jax.random.normal(k1, (embedding_size, 16), jnp.float32) / np.sqrt(embedding_size)
    b1 = 0.05 * jax.random.normal(kb1, (1, 16), jnp.float32)
    w2 = jax.random.normal(k2, (16, 1), jnp.float32) / 4.0
    b2 = 0.05 * jax.random.normal(kb2, (1, 1), jnp.float32)
    return {"convs": convs, "w1": w1, "b1": b1, "w2": w2, "b2": b2}


# ------------------------- pure-JAX reference (correctness check) -------------------------

def reference_forward(params, x1, x2):
    def feat(x):
        x = jnp.transpose(x, (0, 2, 3, 1)).astype(jnp.float32)
        for i, layer in enumerate(params["convs"]):
            y = lax.conv_general_dilated(x, layer["k"], (1, 1), "SAME",
                                         dimension_numbers=("NHWC", "HWIO", "NHWC"))
            y = y * layer["scale"] + layer["bias"]
            x = jnp.where(y >= 0, y, LEAKY_SLOPE * y)
            if i < 4:
                n, h, w, c = x.shape
                x = x.reshape(n, h // 2, 2, w // 2, 2, c).max(axis=(2, 4))
        emb = x.mean(axis=(1, 2))
        return emb / jnp.maximum(jnp.linalg.norm(emb, axis=1, keepdims=True), 1e-12)

    e1, e2 = feat(x1), feat(x2)
    d = (e1 - e2) ** 2
    h = d @ params["w1"] + params["b1"]
    h = jnp.where(h >= 0, h, LEAKY_SLOPE * h)
    return jax.nn.sigmoid(h @ params["w2"] + params["b2"])


if __name__ == "__main__":
    key = jax.random.PRNGKey(0)
    kp, kx1, kx2 = jax.random.split(key, 3)
    params = init_params(kp, input_channels=1, base_filters=8, embedding_size=32)
    # spatial=16 -> after four MaxPool(2): 1x1; AdaptiveAvgPool((1,1)) keeps 1x1.
    x1 = jax.random.normal(kx1, (2, 1, 16, 16), jnp.float32)
    x2 = jax.random.normal(kx2, (2, 1, 16, 16), jnp.float32)

    fwd = jax.jit(siamese_forward)
    score = jax.block_until_ready(fwd(params, x1, x2))
    ref = reference_forward(params, x1, x2)
    np.testing.assert_allclose(np.asarray(score), np.asarray(ref), rtol=2e-2, atol=2e-3)
    print("KERNEL_OK")
</pallas_src>

<mosaic_0001>
module attributes {stable_mosaic.version = 11 : i64} {
  func.func @kernel(%arg0: memref<64x16xf32, #tpu.memory_space<vmem>>, %arg1: memref<3x16x64xf32, #tpu.memory_space<vmem>>, %arg2: memref<3x16x64xf32, #tpu.memory_space<vmem>>, %arg3: memref<1x64xf32, #tpu.memory_space<vmem>>, %arg4: memref<3x64x64xf32, #tpu.memory_space<vmem>>, %arg5: memref<3x64x64xf32, #tpu.memory_space<vmem>>, %arg6: memref<1x64xf32, #tpu.memory_space<vmem>>, %arg7: memref<3x64x64xf32, #tpu.memory_space<vmem>>, %arg8: memref<3x64x64xf32, #tpu.memory_space<vmem>>, %arg9: memref<1x64xf32, #tpu.memory_space<vmem>>, %arg10: memref<3x64x64xf32, #tpu.memory_space<vmem>>, %arg11: memref<3x64x64xf32, #tpu.memory_space<vmem>>, %arg12: memref<1x64xf32, #tpu.memory_space<vmem>>, %arg13: memref<3x64x32xf32, #tpu.memory_space<vmem>>, %arg14: memref<1x32xf32, #tpu.memory_space<vmem>>, %arg15: memref<4x30xf32, #tpu.memory_space<vmem>>, %arg16: memref<32x32xf32, #tpu.memory_space<vmem>>, %arg17: memref<2x4xf32, #tpu.memory_space<vmem>>, %arg18: memref<32x16xf32, #tpu.memory_space<vmem>>, %arg19: memref<1x16xf32, #tpu.memory_space<vmem>>, %arg20: memref<16x1xf32, #tpu.memory_space<vmem>>, %arg21: memref<1x1xf32, #tpu.memory_space<vmem>>, %arg22: memref<2x1xf32, #tpu.memory_space<vmem>>, %arg23: memref<96x16xf32, #tpu.memory_space<vmem>>, %arg24: memref<64x64xf32, #tpu.memory_space<vmem>>, %arg25: memref<32x64xf32, #tpu.memory_space<vmem>>, %arg26: memref<32x64xf32, #tpu.memory_space<vmem>>, %arg27: memref<32x64xf32, #tpu.memory_space<vmem>>, %arg28: memref<96x64xf32, #tpu.memory_space<vmem>>, %arg29: memref<64x64xf32, #tpu.memory_space<vmem>>, %arg30: memref<32x64xf32, #tpu.memory_space<vmem>>, %arg31: memref<32x64xf32, #tpu.memory_space<vmem>>) attributes {dimension_semantics = [], scalar_prefetch = 0 : i64, scratch_operands = 9 : i64, tpu.core_type = #tpu.core_type<tc>} {
    %cst = arith.constant 0.000000e+00 : f32
    %0 = vector.broadcast %cst : f32 to vector<96x16xf32>
    %c0 = arith.constant 0 : index
    %c0_0 = arith.constant 0 : index
    %1 = vector.load %arg23[%c0, %c0_0] : memref<96x16xf32, #tpu.memory_space<vmem>>, vector<96x16xf32>
    tpu.vector_store %arg23[%c0, %c0_0], %0 {strides = array<i32>} : memref<96x16xf32, #tpu.memory_space<vmem>>, vector<96x16xf32>,
    %cst_1 = arith.constant 0.000000e+00 : f32
    %2 = vector.broadcast %cst_1 : f32 to vector<64x64xf32>
    %c0_2 = arith.constant 0 : index
    %c0_3 = arith.constant 0 : index
    %3 = vector.load %arg24[%c0_2, %c0_3] : memref<64x64xf32, #tpu.memory_space<vmem>>, vector<64x64xf32>
    tpu.vector_store %arg24[%c0_2, %c0_3], %2 {strides = array<i32>} : memref<64x64xf32, #tpu.memory_space<vmem>>, vector<64x64xf32>,
    %cst_4 = arith.constant 0.000000e+00 : f32
    %4 = vector.broadcast %cst_4 : f32 to vector<32x64xf32>
    %c0_5 = arith.constant 0 : index
    %c0_6 = arith.constant 0 : index
    %5 = vector.load %arg25[%c0_5, %c0_6] : memref<32x64xf32, #tpu.memory_space<vmem>>, vector<32x64xf32>
    tpu.vector_store %arg25[%c0_5, %c0_6], %4 {strides = array<i32>} : memref<32x64xf32, #tpu.memory_space<vmem>>, vector<32x64xf32>,
    %cst_7 = arith.constant 0.000000e+00 : f32
    %6 = vector.broadcast %cst_7 : f32 to vector<32x64xf32>
    %c0_8 = arith.constant 0 : index
    %c0_9 = arith.constant 0 : index
    %7 = vector.load %arg26[%c0_8, %c0_9] : memref<32x64xf32, #tpu.memory_space<vmem>>, vector<32x64xf32>
    tpu.vector_store %arg26[%c0_8, %c0_9], %6 {strides = array<i32>} : memref<32x64xf32, #tpu.memory_space<vmem>>, vector<32x64xf32>,
    %cst_10 = arith.constant 0.000000e+00 : f32
    %8 = vector.broadcast %cst_10 : f32 to vector<32x64xf32>
    %c0_11 = arith.constant 0 : index
    %c0_12 = arith.constant 0 : index
    %9 = vector.load %arg27[%c0_11, %c0_12] : memref<32x64xf32, #tpu.memory_space<vmem>>, vector<32x64xf32>
    tpu.vector_store %arg27[%c0_11, %c0_12], %8 {strides = array<i32>} : memref<32x64xf32, #tpu.memory_space<vmem>>, vector<32x64xf32>,
    %c0_13 = arith.constant 0 : index
    %c0_14 = arith.constant 0 : index
    %10 = vector.load %arg0[%c0_13, %c0_14] : memref<64x16xf32, #tpu.memory_space<vmem>>, vector<16x16xf32>
    %c1 = arith.constant 1 : index
    %c0_15 = arith.constant 0 : index
    %11 = vector.load %arg23[%c1, %c0_15] : memref<96x16xf32, #tpu.memory_space<vmem>>, vector<16x16xf32>
    tpu.vector_store %arg23[%c1, %c0_15], %10 {strides = array<i32>} : memref<96x16xf32, #tpu.memory_space<vmem>>, vector<16x16xf32>,
    %c16 = arith.constant 16 : index
    %c0_16 = arith.constant 0 : index
    %12 = vector.load %arg0[%c16, %c0_16] : memref<64x16xf32, #tpu.memory_space<vmem>>, vector<16x16xf32>
    %c25 = arith.constant 25 : index
    %c0_17 = arith.constant 0 : index
    %13 = vector.load %arg23[%c25, %c0_17] : memref<96x16xf32, #tpu.memory_space<vmem>>, vector<16x16xf32>
    tpu.vector_store %arg23[%c25, %c0_17], %12 {strides = array<i32>} : memref<96x16xf32, #tpu.memory_space<vmem>>, vector<16x16xf32>,
    %c32 = arith.constant 32 : index
    %c0_18 = arith.constant 0 : index
    %14 = vector.load %arg0[%c32, %c0_18] : memref<64x16xf32, #tpu.memory_space<vmem>>, vector<16x16xf32>
    %c49 = arith.constant 49 : index
    %c0_19 = arith.constant 0 : index
    %15 = vector.load %arg23[%c49, %c0_19] : memref<96x16xf32, #tpu.memory_space<vmem>>, vector<16x16xf32>
    tpu.vector_store %arg23[%c49, %c0_19], %14 {strides = array<i32>} : memref<96x16xf32, #tpu.memory_space<vmem>>, vector<16x16xf32>,
    %c48 = arith.constant 48 : index
    %c0_20 = arith.constant 0 : index
    %16 = vector.load %arg0[%c48, %c0_20] : memref<64x16xf32, #tpu.memory_space<vmem>>, vector<16x16xf32>
    %c73 = arith.constant 73 : index
    %c0_21 = arith.constant 0 : index
    %17 = vector.load %arg23[%c73, %c0_21] : memref<96x16xf32, #tpu.memory_space<vmem>>, vector<16x16xf32>
    tpu.vector_store %arg23[%c73, %c0_21], %16 {strides = array<i32>} : memref<96x16xf32, #tpu.memory_space<vmem>>, vector<16x16xf32>,
    %c0_22 = arith.constant 0 : index
    %c0_23 = arith.constant 0 : index
    %18 = vector.load %arg23[%c0_22, %c0_23] : memref<96x16xf32, #tpu.memory_space<vmem>>, vector<94x16xf32>
    %c0_24 = arith.constant 0 : index
    %c0_25 = arith.constant 0 : index
    %c0_26 = arith.constant 0 : index
    %19 = vector.load %arg1[%c0_24, %c0_25, %c0_26] : memref<3x16x64xf32, #tpu.memory_space<vmem>>, vector<1x16x64xf32>
    %20 = vector.shape_cast %19 : vector<1x16x64xf32> to vector<16x64xf32>
    %cst_27 = arith.constant dense<0.000000e+00> : vector<94x64xf32>
    %21 = tpu.matmul %18, %20, %cst_27 {dimension_numbers = #tpu.dot_dimension_numbers<[1], [0], [0], [1], [0, 0, 1, 1], [], []>} : vector<94x16xf32>, vector<16x64xf32>, vector<94x64xf32> -> vector<94x64xf32>
    %c0_28 = arith.constant 0 : index
    %c0_29 = arith.constant 0 : index
    %c0_30 = arith.constant 0 : index
    %22 = vector.load %arg2[%c0_28, %c0_29, %c0_30] : memref<3x16x64xf32, #tpu.memory_space<vmem>>, vector<1x16x64xf32>
    %23 = vector.shape_cast %22 : vector<1x16x64xf32> to vector<16x64xf32>
    %cst_31 = arith.constant dense<0.000000e+00> : vector<94x64xf32>
    %24 = tpu.matmul %18, %23, %cst_31 {dimension_numbers = #tpu.dot_dimension_numbers<[1], [0], [0], [1], [0, 0, 1, 1], [], []>} : vector<94x16xf32>, vector<16x64xf32>, vector<94x64xf32> -> vector<94x64xf32>
    %c1_32 = arith.constant 1 : index
    %c0_33 = arith.constant 0 : index
    %25 = vector.load %arg23[%c1_32, %c0_33] : memref<96x16xf32, #tpu.memory_space<vmem>>, vector<94x16xf32>
    %c1_34 = arith.constant 1 : index
    %c0_35 = arith.constant 0 : index
    %c0_36 = arith.constant 0 : index
    %26 = vector.load %arg1[%c1_34, %c0_35, %c0_36] : memref<3x16x64xf32, #tpu.memory_space<vmem>>, vector<1x16x64xf32>
    %27 = vector.shape_cast %26 : vector<1x16x64xf32> to vector<16x64xf32>
    %cst_37 = arith.constant dense<0.000000e+00> : vector<94x64xf32>
    %28 = tpu.matmul %25, %27, %cst_37 {dimension_numbers = #tpu.dot_dimension_numbers<[1], [0], [0], [1], [0, 0, 1, 1], [], []>} : vector<94x16xf32>, vector<16x64xf32>, vector<94x64xf32> -> vector<94x64xf32>
    %c1_38 = arith.constant 1 : index
    %c0_39 = arith.constant 0 : index
    %c0_40 = arith.constant 0 : index
    %29 = vector.load %arg2[%c1_38, %c0_39, %c0_40] : memref<3x16x64xf32, #tpu.memory_space<vmem>>, vector<1x16x64xf32>
    %30 = vector.shape_cast %29 : vector<1x16x64xf32> to vector<16x64xf32>
    %cst_41 = arith.constant dense<0.000000e+00> : vector<94x64xf32>
    %31 = tpu.matmul %25, %30, %cst_41 {dimension_numbers = #tpu.dot_dimension_numbers<[1], [0], [0], [1], [0, 0, 1, 1], [], []>} : vector<94x16xf32>, vector<16x64xf32>, vector<94x64xf32> -> vector<94x64xf32>
    %32 = arith.addf %21, %28 : vector<94x64xf32>
    %33 = arith.addf %24, %31 : vector<94x64xf32>
    %c2 = arith.constant 2 : index
    %c0_42 = arith.constant 0 : index
    %34 = vector.load %arg23[%c2, %c0_42] : memref<96x16xf32, #tpu.memory_space<vmem>>, vector<94x16xf32>
    %c2_43 = arith.constant 2 : index
    %c0_44 = arith.constant 0 : index
    %c0_45 = arith.constant 0 : index
    %35 = vector.load %arg1[%c2_43, %c0_44, %c0_45] : memref<3x16x64xf32, #tpu.memory_space<vmem>>, vector<1x16x64xf32>
    %36 = vector.shape_cast %35 : vector<1x16x64xf32> to vector<16x64xf32>
    %cst_46 = arith.constant dense<0.000000e+00> : vector<94x64xf32>
    %37 = tpu.matmul %34, %36, %cst_46 {dimension_numbers = #tpu.dot_dimension_numbers<[1], [0], [0], [1], [0, 0, 1, 1], [], []>} : vector<94x16xf32>, vector<16x64xf32>, vector<94x64xf32> -> vector<94x64xf32>
    %c2_47 = arith.constant 2 : index
    %c0_48 = arith.constant 0 : index
    %c0_49 = arith.constant 0 : index
    %38 = vector.load %arg2[%c2_47, %c0_48, %c0_49] : memref<3x16x64xf32, #tpu.memory_space<vmem>>, vector<1x16x64xf32>
    %39 = vector.shape_cast %38 : vector<1x16x64xf32> to vector<16x64xf32>
    %cst_50 = arith.constant dense<0.000000e+00> : vector<94x64xf32>
    %40 = tpu.matmul %34, %39, %cst_50 {dimension_numbers = #tpu.dot_dimension_numbers<[1], [0], [0], [1], [0, 0, 1, 1], [], []>} : vector<94x16xf32>, vector<16x64xf32>, vector<94x64xf32> -> vector<94x64xf32>
    %41 = arith.addf %32, %37 : vector<94x64xf32>
    %42 = arith.addf %33, %40 : vector<94x64xf32>
    %c0_51 = arith.constant 0 : index
    %c0_52 = arith.constant 0 : index
    %43 = vector.load %arg3[%c0_51, %c0_52] : memref<1x64xf32, #tpu.memory_space<vmem>>, vector<1x64xf32>
    %44 = vector.broadcast %43 : vector<1x64xf32> to vector<94x64xf32>
    %45 = arith.addf %41, %44 : vector<94x64xf32>
    %cst_53 = arith.constant 0.000000e+00 : f32
    %46 = vector.broadcast %cst_53 : f32 to vector<94x64xf32>
    %47 = arith.cmpf oge, %45, %46 : vector<94x64xf32>
    %cst_54 = arith.constant 1.500000e-01 : f32
    %48 = vector.broadcast %cst_54 : f32 to vector<94x64xf32>
    %49 = arith.mulf %48, %45 : vector<94x64xf32>
    %50 = arith.select %47, %45, %49 : vector<94x64xi1>, vector<94x64xf32>
    %c0_55 = arith.constant 0 : index
    %c0_56 = arith.constant 0 : index
    %51 = vector.load %arg3[%c0_55, %c0_56] : memref<1x64xf32, #tpu.memory_space<vmem>>, vector<1x64xf32>
    %52 = vector.broadcast %51 : vector<1x64xf32> to vector<94x64xf32>
    %53 = arith.addf %42, %52 : vector<94x64xf32>
    %cst_57 = arith.constant 0.000000e+00 : f32
    %54 = vector.broadcast %cst_57 : f32 to vector<94x64xf32>
    %55 = arith.cmpf oge, %53, %54 : vector<94x64xf32>
    %cst_58 = arith.constant 1.500000e-01 : f32
    %56 = vector.broadcast %cst_58 : f32 to vector<94x64xf32>
    %57 = arith.mulf %56, %53 : vector<94x64xf32>
    %58 = arith.select %55, %53, %57 : vector<94x64xi1>, vector<94x64xf32>
    %59 = arith.maximumf %50, %58 : vector<94x64xf32>
    %c0_59 = arith.constant 0 : index
    %c0_60 = arith.constant 0 : index
    %60 = vector.load %arg28[%c0_59, %c0_60] : memref<96x64xf32, #tpu.memory_space<vmem>>, vector<94x64xf32>
    tpu.vector_store %arg28[%c0_59, %c0_60], %59 {strides = array<i32>} : memref<96x64xf32, #tpu.memory_space<vmem>>, vector<94x64xf32>,
    %c0_61 = arith.constant 0 : index
    %c0_62 = arith.constant 0 : index
    %61 = tpu.strided_load %arg28[%c0_61, %c0_62] {strides = array<i32: 2, 1>} : memref<96x64xf32, #tpu.memory_space<vmem>>, vector<8x64xf32>
    %c1_63 = arith.constant 1 : index
    %c0_64 = arith.constant 0 : index
    %62 = tpu.strided_load %arg28[%c1_63, %c0_64] {strides = array<i32: 2, 1>} : memref<96x64xf32, #tpu.memory_space<vmem>>, vector<8x64xf32>
    %63 = arith.maximumf %61, %62 : vector<8x64xf32>
    %c1_65 = arith.constant 1 : index
    %c0_66 = arith.constant 0 : index
    %64 = vector.load %arg24[%c1_65, %c0_66] : memref<64x64xf32, #tpu.memory_space<vmem>>, vector<8x64xf32>
    tpu.vector_store %arg24[%c1_65, %c0_66], %63 {strides = array<i32>} : memref<64x64xf32, #tpu.memory_space<vmem>>, vector<8x64xf32>,
    %c24 = arith.constant 24 : index
    %c0_67 = arith.constant 0 : index
    %65 = tpu.strided_load %arg28[%c24, %c0_67] {strides = array<i32: 2, 1>} : memref<96x64xf32, #tpu.memory_space<vmem>>, vector<8x64xf32>
    %c25_68 = arith.constant 25 : index
    %c0_69 = arith.constant 0 : index
    %66 = tpu.strided_load %arg28[%c25_68, %c0_69] {strides = array<i32: 2, 1>} : memref<96x64xf32, #tpu.memory_space<vmem>>, vector<8x64xf32>
    %67 = arith.maximumf %65, %66 : vector<8x64xf32>
    %c17 = arith.constant 17 : index
    %c0_70 = arith.constant 0 : index
    %68 = vector.load %arg24[%c17, %c0_70] : memref<64x64xf32, #tpu.memory_space<vmem>>, vector<8x64xf32>
    tpu.vector_store %arg24[%c17, %c0_70], %67 {strides = array<i32>} : memref<64x64xf32, #tpu.memory_space<vmem>>, vector<8x64xf32>,
    %c48_71 = arith.constant 48 : index
    %c0_72 = arith.constant 0 : index
    %69 = tpu.strided_load %arg28[%c48_71, %c0_72] {strides = array<i32: 2, 1>} : memref<96x64xf32, #tpu.memory_space<vmem>>, vector<8x64xf32>
    %c49_73 = arith.constant 49 : index
    %c0_74 = arith.constant 0 : index
    %70 = tpu.strided_load %arg28[%c49_73, %c0_74] {strides = array<i32: 2, 1>} : memref<96x64xf32, #tpu.memory_space<vmem>>, vector<8x64xf32>
    %71 = arith.maximumf %69, %70 : vector<8x64xf32>
    %c33 = arith.constant 33 : index
    %c0_75 = arith.constant 0 : index
    %72 = vector.load %arg24[%c33, %c0_75] : memref<64x64xf32, #tpu.memory_space<vmem>>, vector<8x64xf32>
    tpu.vector_store %arg24[%c33, %c0_75], %71 {strides = array<i32>} : memref<64x64xf32, #tpu.memory_space<vmem>>, vector<8x64xf32>,
    %c72 = arith.constant 72 : index
    %c0_76 = arith.constant 0 : index
    %73 = tpu.strided_load %arg28[%c72, %c0_76] {strides = array<i32: 2, 1>} : memref<96x64xf32, #tpu.memory_space<vmem>>, vector<8x64xf32>
    %c73_77 = arith.constant 73 : index
    %c0_78 = arith.constant 0 : index
    %74 = tpu.strided_load %arg28[%c73_77, %c0_78] {strides = array<i32: 2, 1>} : memref<96x64xf32, #tpu.memory_space<vmem>>, vector<8x64xf32>
    %75 = arith.maximumf %73, %74 : vector<8x64xf32>
    %c49_79 = arith.constant 49 : index
    %c0_80 = arith.constant 0 : index
    %76 = vector.load %arg24[%c49_79, %c0_80] : memref<64x64xf32, #tpu.memory_space<vmem>>, vector<8x64xf32>
    tpu.vector_store %arg24[%c49_79, %c0_80], %75 {strides = array<i32>} : memref<64x64xf32, #tpu.memory_space<vmem>>, vector<8x64xf32>,
    %c0_81 = arith.constant 0 : index
    %c0_82 = arith.constant 0 : index
    %77 = vector.load %arg24[%c0_81, %c0_82] : memref<64x64xf32, #tpu.memory_space<vmem>>, vector<62x64xf32>
    %c0_83 = arith.constant 0 : index
    %c0_84 = arith.constant 0 : index
    %c0_85 = arith.constant 0 : index
    %78 = vector.load %arg4[%c0_83, %c0_84, %c0_85] : memref<3x64x64xf32, #tpu.memory_space<vmem>>, vector<1x64x64xf32>
    %79 = vector.shape_cast %78 : vector<1x64x64xf32> to vector<64x64xf32>
    %cst_86 = arith.constant dense<0.000000e+00> : vector<62x64xf32>
    %80 = tpu.matmul %77, %79, %cst_86 {dimension_numbers = #tpu.dot_dimension_numbers<[1], [0], [0], [1], [0, 0, 1, 1], [], []>} : vector<62x64xf32>, vector<64x64xf32>, vector<62x64xf32> -> vector<62x64xf32>
    %c0_87 = arith.constant 0 : index
    %c0_88 = arith.constant 0 : index
    %c0_89 = arith.constant 0 : index
    %81 = vector.load %arg5[%c0_87, %c0_88, %c0_89] : memref<3x64x64xf32, #tpu.memory_space<vmem>>, vector<1x64x64xf32>
    %82 = vector.shape_cast %81 : vector<1x64x64xf32> to vector<64x64xf32>
    %cst_90 = arith.constant dense<0.000000e+00> : vector<62x64xf32>
    %83 = tpu.matmul %77, %82, %cst_90 {dimension_numbers = #tpu.dot_dimension_numbers<[1], [0], [0], [1], [0, 0, 1, 1], [], []>} : vector<62x64xf32>, vector<64x64xf32>, vector<62x64xf32> -> vector<62x64xf32>
    %c1_91 = arith.constant 1 : index
    %c0_92 = arith.constant 0 : index
    %84 = vector.load %arg24[%c1_91, %c0_92] : memref<64x64xf32, #tpu.memory_space<vmem>>, vector<62x64xf32>
    %c1_93 = arith.constant 1 : index
    %c0_94 = arith.constant 0 : index
    %c0_95 = arith.constant 0 : index
    %85 = vector.load %arg4[%c1_93, %c0_94, %c0_95] : memref<3x64x64xf32, #tpu.memory_space<vmem>>, vector<1x64x64xf32>
    %86 = vector.shape_cast %85 : vector<1x64x64xf32> to vector<64x64xf32>
    %cst_96 = arith.constant dense<0.000000e+00> : vector<62x64xf32>
    %87 = tpu.matmul %84, %86, %cst_96 {dimension_numbers = #tpu.dot_dimension_numbers<[1], [0], [0], [1], [0, 0, 1, 1], [], []>} : vector<62x64xf32>, vector<64x64xf32>, vector<62x64xf32> -> vector<62x64xf32>
    %c1_97 = arith.constant 1 : index
    %c0_98 = arith.constant 0 : index
    %c0_99 = arith.constant 0 : index
    %88 = vector.load %arg5[%c1_97, %c0_98, %c0_99] : memref<3x64x64xf32, #tpu.memory_space<vmem>>, vector<1x64x64xf32>
    %89 = vector.shape_cast %88 : vector<1x64x64xf32> to vector<64x64xf32>
    %cst_100 = arith.constant dense<0.000000e+00> : vector<62x64xf32>
    %90 = tpu.matmul %84, %89, %cst_100 {dimension_numbers = #tpu.dot_dimension_numbers<[1], [0], [0], [1], [0, 0, 1, 1], [], []>} : vector<62x64xf32>, vector<64x64xf32>, vector<62x64xf32> -> vector<62x64xf32>
    %91 = arith.addf %80, %87 : vector<62x64xf32>
    %92 = arith.addf %83, %90 : vector<62x64xf32>
    %c2_101 = arith.constant 2 : index
    %c0_102 = arith.constant 0 : index
    %93 = vector.load %arg24[%c2_101, %c0_102] : memref<64x64xf32, #tpu.memory_space<vmem>>, vector<62x64xf32>
    %c2_103 = arith.constant 2 : index
    %c0_104 = arith.constant 0 : index
    %c0_105 = arith.constant 0 : index
    %94 = vector.load %arg4[%c2_103, %c0_104, %c0_105] : memref<3x64x64xf32, #tpu.memory_space<vmem>>, vector<1x64x64xf32>
    %95 = vector.shape_cast %94 : vector<1x64x64xf32> to vector<64x64xf32>
    %cst_106 = arith.constant dense<0.000000e+00> : vector<62x64xf32>
    %96 = tpu.matmul %93, %95, %cst_106 {dimension_numbers = #tpu.dot_dimension_numbers<[1], [0], [0], [1], [0, 0, 1, 1], [], []>} : vector<62x64xf32>, vector<64x64xf32>, vector<62x64xf32> -> vector<62x64xf32>
    %c2_107 = arith.constant 2 : index
    %c0_108 = arith.constant 0 : index
    %c0_109 = arith.constant 0 : index
    %97 = vector.load %arg5[%c2_107, %c0_108, %c0_109] : memref<3x64x64xf32, #tpu.memory_space<vmem>>, vector<1x64x64xf32>
    %98 = vector.shape_cast %97 : vector<1x64x64xf32> to vector<64x64xf32>
    %cst_110 = arith.constant dense<0.000000e+00> : vector<62x64xf32>
    %99 = tpu.matmul %93, %98, %cst_110 {dimension_numbers = #tpu.dot_dimension_numbers<[1], [0], [0], [1], [0, 0, 1, 1], [], []>} : vector<62x64xf32>, vector<64x64xf32>, vector<62x64xf32> -> vector<62x64xf32>
    %100 = arith.addf %91, %96 : vector<62x64xf32>
    %101 = arith.addf %92, %99 : vector<62x64xf32>
    %c0_111 = arith.constant 0 : index
    %c0_112 = arith.constant 0 : index
    %102 = vector.load %arg6[%c0_111, %c0_112] : memref<1x64xf32, #tpu.memory_space<vmem>>, vector<1x64xf32>
    %103 = vector.broadcast %102 : vector<1x64xf32> to vector<62x64xf32>
    %104 = arith.addf %100, %103 : vector<62x64xf32>
    %cst_113 = arith.constant 0.000000e+00 : f32
    %105 = vector.broadcast %cst_113 : f32 to vector<62x64xf32>
    %106 = arith.cmpf oge, %104, %105 : vector<62x64xf32>
    %cst_114 = arith.constant 1.500000e-01 : f32
    %107 = vector.broadcast %cst_114 : f32 to vector<62x64xf32>
    %108 = arith.mulf %107, %104 : vector<62x64xf32>
    %109 = arith.select %106, %104, %108 : vector<62x64xi1>, vector<62x64xf32>
    %c0_115 = arith.constant 0 : index
    %c0_116 = arith.constant 0 : index
    %110 = vector.load %arg6[%c0_115, %c0_116] : memref<1x64xf32, #tpu.memory_space<vmem>>, vector<1x64xf32>
    %111 = vector.broadcast %110 : vector<1x64xf32> to vector<62x64xf32>
    %112 = arith.addf %101, %111 : vector<62x64xf32>
    %cst_117 = arith.constant 0.000000e+00 : f32
    %113 = vector.broadcast %cst_117 : f32 to vector<62x64xf32>
    %114 = arith.cmpf oge, %112, %113 : vector<62x64xf32>
    %cst_118 = arith.constant 1.500000e-01 : f32
    %115 = vector.broadcast %cst_118 : f32 to vector<62x64xf32>
    %116 = arith.mulf %115, %112 : vector<62x64xf32>
    %117 = arith.select %114, %112, %116 : vector<62x64xi1>, vector<62x64xf32>
    %118 = arith.maximumf %109, %117 : vector<62x64xf32>
    %c0_119 = arith.constant 0 : index
    %c0_120 = arith.constant 0 : index
    %119 = vector.load %arg29[%c0_119, %c0_120] : memref<64x64xf32, #tpu.memory_space<vmem>>, vector<62x64xf32>
    tpu.vector_store %arg29[%c0_119, %c0_120], %118 {strides = array<i32>} : memref<64x64xf32, #tpu.memory_space<vmem>>, vector<62x64xf32>,
    %c0_121 = arith.constant 0 : index
    %c0_122 = arith.constant 0 : index
    %120 = tpu.strided_load %arg29[%c0_121, %c0_122] {strides = array<i32: 2, 1>} : memref<64x64xf32, #tpu.memory_space<vmem>>, vector<4x64xf32>
    %c1_123 = arith.constant 1 : index
    %c0_124 = arith.constant 0 : index
    %121 = tpu.strided_load %arg29[%c1_123, %c0_124] {strides = array<i32: 2, 1>} : memref<64x64xf32, #tpu.memory_space<vmem>>, vector<4x64xf32>
    %122 = arith.maximumf %120, %121 : vector<4x64xf32>
    %c1_125 = arith.constant 1 : index
    %c0_126 = arith.constant 0 : index
    %123 = vector.load %arg25[%c1_125, %c0_126] : memref<32x64xf32, #tpu.memory_space<vmem>>, vector<4x64xf32>
    tpu.vector_store %arg25[%c1_125, %c0_126], %122 {strides = array<i32>} : memref<32x64xf32, #tpu.memory_space<vmem>>, vector<4x64xf32>,
    %c16_127 = arith.constant 16 : index
    %c0_128 = arith.constant 0 : index
    %124 = tpu.strided_load %arg29[%c16_127, %c0_128] {strides = array<i32: 2, 1>} : memref<64x64xf32, #tpu.memory_space<vmem>>, vector<4x64xf32>
    %c17_129 = arith.constant 17 : index
    %c0_130 = arith.constant 0 : index
    %125 = tpu.strided_load %arg29[%c17_129, %c0_130] {strides = array<i32: 2, 1>} : memref<64x64xf32, #tpu.memory_space<vmem>>, vector<4x64xf32>
    %126 = arith.maximumf %124, %125 : vector<4x64xf32>
    %c9 = arith.constant 9 : index
    %c0_131 = arith.constant 0 : index
    %127 = vector.load %arg25[%c9, %c0_131] : memref<32x64xf32, #tpu.memory_space<vmem>>, vector<4x64xf32>
    tpu.vector_store %arg25[%c9, %c0_131], %126 {strides = array<i32>} : memref<32x64xf32, #tpu.memory_space<vmem>>, vector<4x64xf32>,
    %c32_132 = arith.constant 32 : index
    %c0_133 = arith.constant 0 : index
    %128 = tpu.strided_load %arg29[%c32_132, %c0_133] {strides = array<i32: 2, 1>} : memref<64x64xf32, #tpu.memory_space<vmem>>, vector<4x64xf32>
    %c33_134 = arith.constant 33 : index
    %c0_135 = arith.constant 0 : index
    %129 = tpu.strided_load %arg29[%c33_134, %c0_135] {strides = array<i32: 2, 1>} : memref<64x64xf32, #tpu.memory_space<vmem>>, vector<4x64xf32>
    %130 = arith.maximumf %128, %129 : vector<4x64xf32>
    %c17_136 = arith.constant 17 : index
    %c0_137 = arith.constant 0 : index
    %131 = vector.load %arg25[%c17_136, %c0_137] : memref<32x64xf32, #tpu.memory_space<vmem>>, vector<4x64xf32>
    tpu.vector_store %arg25[%c17_136, %c0_137], %130 {strides = array<i32>} : memref<32x64xf32, #tpu.memory_space<vmem>>, vector<4x64xf32>,
    %c48_138 = arith.constant 48 : index
    %c0_139 = arith.constant 0 : index
    %132 = tpu.strided_load %arg29[%c48_138, %c0_139] {strides = array<i32: 2, 1>} : memref<64x64xf32, #tpu.memory_space<vmem>>, vector<4x64xf32>
    %c49_140 = arith.constant 49 : index
    %c0_141 = arith.constant 0 : index
    %133 = tpu.strided_load %arg29[%c49_140, %c0_141] {strides = array<i32: 2, 1>} : memref<64x64xf32, #tpu.memory_space<vmem>>, vector<4x64xf32>
    %134 = arith.maximumf %132, %133 : vector<4x64xf32>
    %c25_142 = arith.constant 25 : index
    %c0_143 = arith.constant 0 : index
    %135 = vector.load %arg25[%c25_142, %c0_143] : memref<32x64xf32, #tpu.memory_space<vmem>>, vector<4x64xf32>
    tpu.vector_store %arg25[%c25_142, %c0_143], %134 {strides = array<i32>} : memref<32x64xf32, #tpu.memory_space<vmem>>, vector<4x64xf32>,
    %c0_144 = arith.constant 0 : index
    %c0_145 = arith.constant 0 : index
    %136 = vector.load %arg25[%c0_144, %c0_145] : memref<32x64xf32, #tpu.memory_space<vmem>>, vector<30x64xf32>
    %c0_146 = arith.constant 0 : index
    %c0_147 = arith.constant 0 : index
    %c0_148 = arith.constant 0 : index
    %137 = vector.load %arg7[%c0_146, %c0_147, %c0_148] : memref<3x64x64xf32, #tpu.memory_space<vmem>>, vector<1x64x64xf32>
    %138 = vector.shape_cast %137 : vector<1x64x64xf32> to vector<64x64xf32>
    %cst_149 = arith.constant dense<0.000000e+00> : vector<30x64xf32>
    %139 = tpu.matmul %136, %138, %cst_149 {dimension_numbers = #tpu.dot_dimension_numbers<[1], [0], [0], [1], [0, 0, 1, 1], [], []>} : vector<30x64xf32>, vector<64x64xf32>, vector<30x64xf32> -> vector<30x64xf32>
    %c0_150 = arith.constant 0 : index
    %c0_151 = arith.constant 0 : index
    %c0_152 = arith.constant 0 : index
    %140 = vector.load %arg8[%c0_150, %c0_151, %c0_152] : memref<3x64x64xf32, #tpu.memory_space<vmem>>, vector<1x64x64xf32>
    %141 = vector.shape_cast %140 : vector<1x64x64xf32> to vector<64x64xf32>
    %cst_153 = arith.constant dense<0.000000e+00> : vector<30x64xf32>
    %142 = tpu.matmul %136, %141, %cst_153 {dimension_numbers = #tpu.dot_dimension_numbers<[1], [0], [0], [1], [0, 0, 1, 1], [], []>} : vector<30x64xf32>, vector<64x64xf32>, vector<30x64xf32> -> vector<30x64xf32>
    %c1_154 = arith.constant 1 : index
    %c0_155 = arith.constant 0 : index
    %143 = vector.load %arg25[%c1_154, %c0_155] : memref<32x64xf32, #tpu.memory_space<vmem>>, vector<30x64xf32>
    %c1_156 = arith.constant 1 : index
    %c0_157 = arith.constant 0 : index
    %c0_158 = arith.constant 0 : index
    %144 = vector.load %arg7[%c1_156, %c0_157, %c0_158] : memref<3x64x64xf32, #tpu.memory_space<vmem>>, vector<1x64x64xf32>
    %145 = vector.shape_cast %144 : vector<1x64x64xf32> to vector<64x64xf32>
    %cst_159 = arith.constant dense<0.000000e+00> : vector<30x64xf32>
    %146 = tpu.matmul %143, %145, %cst_159 {dimension_numbers = #tpu.dot_dimension_numbers<[1], [0], [0], [1], [0, 0, 1, 1], [], []>} : vector<30x64xf32>, vector<64x64xf32>, vector<30x64xf32> -> vector<30x64xf32>
    %c1_160 = arith.constant 1 : index
    %c0_161 = arith.constant 0 : index
    %c0_162 = arith.constant 0 : index
    %147 = vector.load %arg8[%c1_160, %c0_161, %c0_162] : memref<3x64x64xf32, #tpu.memory_space<vmem>>, vector<1x64x64xf32>
    %148 = vector.shape_cast %147 : vector<1x64x64xf32> to vector<64x64xf32>
    %cst_163 = arith.constant dense<0.000000e+00> : vector<30x64xf32>
    %149 = tpu.matmul %143, %148, %cst_163 {dimension_numbers = #tpu.dot_dimension_numbers<[1], [0], [0], [1], [0, 0, 1, 1], [], []>} : vector<30x64xf32>, vector<64x64xf32>, vector<30x64xf32> -> vector<30x64xf32>
    %150 = arith.addf %139, %146 : vector<30x64xf32>
    %151 = arith.addf %142, %149 : vector<30x64xf32>
    %c2_164 = arith.constant 2 : index
    %c0_165 = arith.constant 0 : index
    %152 = vector.load %arg25[%c2_164, %c0_165] : memref<32x64xf32, #tpu.memory_space<vmem>>, vector<30x64xf32>
    %c2_166 = arith.constant 2 : index
    %c0_167 = arith.constant 0 : index
    %c0_168 = arith.constant 0 : index
    %153 = vector.load %arg7[%c2_166, %c0_167, %c0_168] : memref<3x64x64xf32, #tpu.memory_space<vmem>>, vector<1x64x64xf32>
    %154 = vector.shape_cast %153 : vector<1x64x64xf32> to vector<64x64xf32>
    %cst_169 = arith.constant dense<0.000000e+00> : vector<30x64xf32>
    %155 = tpu.matmul %152, %154, %cst_169 {dimension_numbers = #tpu.dot_dimension_numbers<[1], [0], [0], [1], [0, 0, 1, 1], [], []>} : vector<30x64xf32>, vector<64x64xf32>, vector<30x64xf32> -> vector<30x64xf32>
    %c2_170 = arith.constant 2 : index
    %c0_171 = arith.constant 0 : index
    %c0_172 = arith.constant 0 : index
    %156 = vector.load %arg8[%c2_170, %c0_171, %c0_172] : memref<3x64x64xf32, #tpu.memory_space<vmem>>, vector<1x64x64xf32>
    %157 = vector.shape_cast %156 : vector<1x64x64xf32> to vector<64x64xf32>
    %cst_173 = arith.constant dense<0.000000e+00> : vector<30x64xf32>
    %158 = tpu.matmul %152, %157, %cst_173 {dimension_numbers = #tpu.dot_dimension_numbers<[1], [0], [0], [1], [0, 0, 1, 1], [], []>} : vector<30x64xf32>, vector<64x64xf32>, vector<30x64xf32> -> vector<30x64xf32>
    %159 = arith.addf %150, %155 : vector<30x64xf32>
    %160 = arith.addf %151, %158 : vector<30x64xf32>
    %c0_174 = arith.constant 0 : index
    %c0_175 = arith.constant 0 : index
    %161 = vector.load %arg9[%c0_174, %c0_175] : memref<1x64xf32, #tpu.memory_space<vmem>>, vector<1x64xf32>
    %162 = vector.broadcast %161 : vector<1x64xf32> to vector<30x64xf32>
    %163 = arith.addf %159, %162 : vector<30x64xf32>
    %cst_176 = arith.constant 0.000000e+00 : f32
    %164 = vector.broadcast %cst_176 : f32 to vector<30x64xf32>
    %165 = arith.cmpf oge, %163, %164 : vector<30x64xf32>
    %cst_177 = arith.constant 1.500000e-01 : f32
    %166 = vector.broadcast %cst_177 : f32 to vector<30x64xf32>
    %167 = arith.mulf %166, %163 : vector<30x64xf32>
    %168 = arith.select %165, %163, %167 : vector<30x64xi1>, vector<30x64xf32>
    %c0_178 = arith.constant 0 : index
    %c0_179 = arith.constant 0 : index
    %169 = vector.load %arg9[%c0_178, %c0_179] : memref<1x64xf32, #tpu.memory_space<vmem>>, vector<1x64xf32>
    %170 = vector.broadcast %169 : vector<1x64xf32> to vector<30x64xf32>
    %171 = arith.addf %160, %170 : vector<30x64xf32>
    %cst_180 = arith.constant 0.000000e+00 : f32
    %172 = vector.broadcast %cst_180 : f32 to vector<30x64xf32>
    %173 = arith.cmpf oge, %171, %172 : vector<30x64xf32>
    %cst_181 = arith.constant 1.500000e-01 : f32
    %174 = vector.broadcast %cst_181 : f32 to vector<30x64xf32>
    %175 = arith.mulf %174, %171 : vector<30x64xf32>
    %176 = arith.select %173, %171, %175 : vector<30x64xi1>, vector<30x64xf32>
    %177 = arith.maximumf %168, %176 : vector<30x64xf32>
    %c0_182 = arith.constant 0 : index
    %c0_183 = arith.constant 0 : index
    %178 = vector.load %arg30[%c0_182, %c0_183] : memref<32x64xf32, #tpu.memory_space<vmem>>, vector<30x64xf32>
    tpu.vector_store %arg30[%c0_182, %c0_183], %177 {strides = array<i32>} : memref<32x64xf32, #tpu.memory_space<vmem>>, vector<30x64xf32>,
    %c0_184 = arith.constant 0 : index
    %c0_185 = arith.constant 0 : index
    %179 = tpu.strided_load %arg30[%c0_184, %c0_185] {strides = array<i32: 2, 1>} : memref<32x64xf32, #tpu.memory_space<vmem>>, vector<2x64xf32>
    %c1_186 = arith.constant 1 : index
    %c0_187 = arith.constant 0 : index
    %180 = tpu.strided_load %arg30[%c1_186, %c0_187] {strides = array<i32: 2, 1>} : memref<32x64xf32, #tpu.memory_space<vmem>>, vector<2x64xf32>
    %181 = arith.maximumf %179, %180 : vector<2x64xf32>
    %c1_188 = arith.constant 1 : index
    %c0_189 = arith.constant 0 : index
    %182 = vector.load %arg26[%c1_188, %c0_189] : memref<32x64xf32, #tpu.memory_space<vmem>>, vector<2x64xf32>
    tpu.vector_store %arg26[%c1_188, %c0_189], %181 {strides = array<i32>} : memref<32x64xf32, #tpu.memory_space<vmem>>, vector<2x64xf32>,
    %c8 = arith.constant 8 : index
    %c0_190 = arith.constant 0 : index
    %183 = tpu.strided_load %arg30[%c8, %c0_190] {strides = array<i32: 2, 1>} : memref<32x64xf32, #tpu.memory_space<vmem>>, vector<2x64xf32>
    %c9_191 = arith.constant 9 : index
    %c0_192 = arith.constant 0 : index
    %184 = tpu.strided_load %arg30[%c9_191, %c0_192] {strides = array<i32: 2, 1>} : memref<32x64xf32, #tpu.memory_space<vmem>>, vector<2x64xf32>
    %185 = arith.maximumf %183, %184 : vector<2x64xf32>
    %c9_193 = arith.constant 9 : index
    %c0_194 = arith.constant 0 : index
    %186 = vector.load %arg26[%c9_193, %c0_194] : memref<32x64xf32, #tpu.memory_space<vmem>>, vector<2x64xf32>
    tpu.vector_store %arg26[%c9_193, %c0_194], %185 {strides = array<i32>} : memref<32x64xf32, #tpu.memory_space<vmem>>, vector<2x64xf32>,
    %c16_195 = arith.constant 16 : index
    %c0_196 = arith.constant 0 : index
    %187 = tpu.strided_load %arg30[%c16_195, %c0_196] {strides = array<i32: 2, 1>} : memref<32x64xf32, #tpu.memory_space<vmem>>, vector<2x64xf32>
    %c17_197 = arith.constant 17 : index
    %c0_198 = arith.constant 0 : index
    %188 = tpu.strided_load %arg30[%c17_197, %c0_198] {strides = array<i32: 2, 1>} : memref<32x64xf32, #tpu.memory_space<vmem>>, vector<2x64xf32>
    %189 = arith.maximumf %187, %188 : vector<2x64xf32>
    %c17_199 = arith.constant 17 : index
    %c0_200 = arith.constant 0 : index
    %190 = vector.load %arg26[%c17_199, %c0_200] : memref<32x64xf32, #tpu.memory_space<vmem>>, vector<2x64xf32>
    tpu.vector_store %arg26[%c17_199, %c0_200], %189 {strides = array<i32>} : memref<32x64xf32, #tpu.memory_space<vmem>>, vector<2x64xf32>,
    %c24_201 = arith.constant 24 : index
    %c0_202 = arith.constant 0 : index
    %191 = tpu.strided_load %arg30[%c24_201, %c0_202] {strides = array<i32: 2, 1>} : memref<32x64xf32, #tpu.memory_space<vmem>>, vector<2x64xf32>
    %c25_203 = arith.constant 25 : index
    %c0_204 = arith.constant 0 : index
    %192 = tpu.strided_load %arg30[%c25_203, %c0_204] {strides = array<i32: 2, 1>} : memref<32x64xf32, #tpu.memory_space<vmem>>, vector<2x64xf32>
    %193 = arith.maximumf %191, %192 : vector<2x64xf32>
    %c25_205 = arith.constant 25 : index
    %c0_206 = arith.constant 0 : index
    %194 = vector.load %arg26[%c25_205, %c0_206] : memref<32x64xf32, #tpu.memory_space<vmem>>, vector<2x64xf32>
    tpu.vector_store %arg26[%c25_205, %c0_206], %193 {strides = array<i32>} : memref<32x64xf32, #tpu.memory_space<vmem>>, vector<2x64xf32>,
    %c0_207 = arith.constant 0 : index
    %c0_208 = arith.constant 0 : index
    %195 = vector.load %arg26[%c0_207, %c0_208] : memref<32x64xf32, #tpu.memory_space<vmem>>, vector<30x64xf32>
    %c0_209 = arith.constant 0 : index
    %c0_210 = arith.constant 0 : index
    %c0_211 = arith.constant 0 : index
    %196 = vector.load %arg10[%c0_209, %c0_210, %c0_211] : memref<3x64x64xf32, #tpu.memory_space<vmem>>, vector<1x64x64xf32>
    %197 = vector.shape_cast %196 : vector<1x64x64xf32> to vector<64x64xf32>
    %cst_212 = arith.constant dense<0.000000e+00> : vector<30x64xf32>
    %198 = tpu.matmul %195, %197, %cst_212 {dimension_numbers = #tpu.dot_dimension_numbers<[1], [0], [0], [1], [0, 0, 1, 1], [], []>} : vector<30x64xf32>, vector<64x64xf32>, vector<30x64xf32> -> vector<30x64xf32>
    %c0_213 = arith.constant 0 : index
    %c0_214 = arith.constant 0 : index
    %c0_215 = arith.constant 0 : index
    %199 = vector.load %arg11[%c0_213, %c0_214, %c0_215] : memref<3x64x64xf32, #tpu.memory_space<vmem>>, vector<1x64x64xf32>
    %200 = vector.shape_cast %199 : vector<1x64x64xf32> to vector<64x64xf32>
    %cst_216 = arith.constant dense<0.000000e+00> : vector<30x64xf32>
    %201 = tpu.matmul %195, %200, %cst_216 {dimension_numbers = #tpu.dot_dimension_numbers<[1], [0], [0], [1], [0, 0, 1, 1], [], []>} : vector<30x64xf32>, vector<64x64xf32>, vector<30x64xf32> -> vector<30x64xf32>
    %c1_217 = arith.constant 1 : index
    %c0_218 = arith.constant 0 : index
    %202 = vector.load %arg26[%c1_217, %c0_218] : memref<32x64xf32, #tpu.memory_space<vmem>>, vector<30x64xf32>
    %c1_219 = arith.constant 1 : index
    %c0_220 = arith.constant 0 : index
    %c0_221 = arith.constant 0 : index
    %203 = vector.load %arg10[%c1_219, %c0_220, %c0_221] : memref<3x64x64xf32, #tpu.memory_space<vmem>>, vector<1x64x64xf32>
    %204 = vector.shape_cast %203 : vector<1x64x64xf32> to vector<64x64xf32>
    %cst_222 = arith.constant dense<0.000000e+00> : vector<30x64xf32>
    %205 = tpu.matmul %202, %204, %cst_222 {dimension_numbers = #tpu.dot_dimension_numbers<[1], [0], [0], [1], [0, 0, 1, 1], [], []>} : vector<30x64xf32>, vector<64x64xf32>, vector<30x64xf32> -> vector<30x64xf32>
    %c1_223 = arith.constant 1 : index
    %c0_224 = arith.constant 0 : index
    %c0_225 = arith.constant 0 : index
    %206 = vector.load %arg11[%c1_223, %c0_224, %c0_225] : memref<3x64x64xf32, #tpu.memory_space<vmem>>, vector<1x64x64xf32>
    %207 = vector.shape_cast %206 : vector<1x64x64xf32> to vector<64x64xf32>
    %cst_226 = arith.constant dense<0.000000e+00> : vector<30x64xf32>
    %208 = tpu.matmul %202, %207, %cst_226 {dimension_numbers = #tpu.dot_dimension_numbers<[1], [0], [0], [1], [0, 0, 1, 1], [], []>} : vector<30x64xf32>, vector<64x64xf32>, vector<30x64xf32> -> vector<30x64xf32>
    %209 = arith.addf %198, %205 : vector<30x64xf32>
    %210 = arith.addf %201, %208 : vector<30x64xf32>
    %c2_227 = arith.constant 2 : index
    %c0_228 = arith.constant 0 : index
    %211 = vector.load %arg26[%c2_227, %c0_228] : memref<32x64xf32, #tpu.memory_space<vmem>>, vector<30x64xf32>
    %c2_229 = arith.constant 2 : index
    %c0_230 = arith.constant 0 : index
    %c0_231 = arith.constant 0 : index
    %212 = vector.load %arg10[%c2_229, %c0_230, %c0_231] : memref<3x64x64xf32, #tpu.memory_space<vmem>>, vector<1x64x64xf32>
    %213 = vector.shape_cast %212 : vector<1x64x64xf32> to vector<64x64xf32>
    %cst_232 = arith.constant dense<0.000000e+00> : vector<30x64xf32>
    %214 = tpu.matmul %211, %213, %cst_232 {dimension_numbers = #tpu.dot_dimension_numbers<[1], [0], [0], [1], [0, 0, 1, 1], [], []>} : vector<30x64xf32>, vector<64x64xf32>, vector<30x64xf32> -> vector<30x64xf32>
    %c2_233 = arith.constant 2 : index
    %c0_234 = arith.constant 0 : index
    %c0_235 = arith.constant 0 : index
    %215 = vector.load %arg11[%c2_233, %c0_234, %c0_235] : memref<3x64x64xf32, #tpu.memory_space<vmem>>, vector<1x64x64xf32>
    %216 = vector.shape_cast %215 : vector<1x64x64xf32> to vector<64x64xf32>
    %cst_236 = arith.constant dense<0.000000e+00> : vector<30x64xf32>
    %217 = tpu.matmul %211, %216, %cst_236 {dimension_numbers = #tpu.dot_dimension_numbers<[1], [0], [0], [1], [0, 0, 1, 1], [], []>} : vector<30x64xf32>, vector<64x64xf32>, vector<30x64xf32> -> vector<30x64xf32>
    %218 = arith.addf %209, %214 : vector<30x64xf32>
    %219 = arith.addf %210, %217 : vector<30x64xf32>
    %c0_237 = arith.constant 0 : index
    %c0_238 = arith.constant 0 : index
    %220 = vector.load %arg12[%c0_237, %c0_238] : memref<1x64xf32, #tpu.memory_space<vmem>>, vector<1x64xf32>
    %221 = vector.broadcast %220 : vector<1x64xf32> to vector<30x64xf32>
    %222 = arith.addf %218, %221 : vector<30x64xf32>
    %cst_239 = arith.constant 0.000000e+00 : f32
    %223 = vector.broadcast %cst_239 : f32 to vector<30x64xf32>
    %224 = arith.cmpf oge, %222, %223 : vector<30x64xf32>
    %cst_240 = arith.constant 1.500000e-01 : f32
    %225 = vector.broadcast %cst_240 : f32 to vector<30x64xf32>
    %226 = arith.mulf %225, %222 : vector<30x64xf32>
    %227 = arith.select %224, %222, %226 : vector<30x64xi1>, vector<30x64xf32>
    %c0_241 = arith.constant 0 : index
    %c0_242 = arith.constant 0 : index
    %228 = vector.load %arg12[%c0_241, %c0_242] : memref<1x64xf32, #tpu.memory_space<vmem>>, vector<1x64xf32>
    %229 = vector.broadcast %228 : vector<1x64xf32> to vector<30x64xf32>
    %230 = arith.addf %219, %229 : vector<30x64xf32>
    %cst_243 = arith.constant 0.000000e+00 : f32
    %231 = vector.broadcast %cst_243 : f32 to vector<30x64xf32>
    %232 = arith.cmpf oge, %230, %231 : vector<30x64xf32>
    %cst_244 = arith.constant 1.500000e-01 : f32
    %233 = vector.broadcast %cst_244 : f32 to vector<30x64xf32>
    %234 = arith.mulf %233, %230 : vector<30x64xf32>
    %235 = arith.select %232, %230, %234 : vector<30x64xi1>, vector<30x64xf32>
    %236 = arith.maximumf %227, %235 : vector<30x64xf32>
    %c0_245 = arith.constant 0 : index
    %c0_246 = arith.constant 0 : index
    %237 = vector.load %arg31[%c0_245, %c0_246] : memref<32x64xf32, #tpu.memory_space<vmem>>, vector<30x64xf32>
    tpu.vector_store %arg31[%c0_245, %c0_246], %236 {strides = array<i32>} : memref<32x64xf32, #tpu.memory_space<vmem>>, vector<30x64xf32>,
    %c0_247 = arith.constant 0 : index
    %c0_248 = arith.constant 0 : index
    %238 = vector.load %arg31[%c0_247, %c0_248] : memref<32x64xf32, #tpu.memory_space<vmem>>, vector<1x64xf32>
    %c1_249 = arith.constant 1 : index
    %c0_250 = arith.constant 0 : index
    %239 = vector.load %arg31[%c1_249, %c0_250] : memref<32x64xf32, #tpu.memory_space<vmem>>, vector<1x64xf32>
    %240 = arith.maximumf %238, %239 : vector<1x64xf32>
    %c1_251 = arith.constant 1 : index
    %c0_252 = arith.constant 0 : index
    %241 = vector.load %arg27[%c1_251, %c0_252] : memref<32x64xf32, #tpu.memory_space<vmem>>, vector<1x64xf32>
    tpu.vector_store %arg27[%c1_251, %c0_252], %240 {strides = array<i32>} : memref<32x64xf32, #tpu.memory_space<vmem>>, vector<1x64xf32>,
    %c8_253 = arith.constant 8 : index
    %c0_254 = arith.constant 0 : index
    %242 = vector.load %arg31[%c8_253, %c0_254] : memref<32x64xf32, #tpu.memory_space<vmem>>, vector<1x64xf32>
    %c9_255 = arith.constant 9 : index
    %c0_256 = arith.constant 0 : index
    %243 = vector.load %arg31[%c9_255, %c0_256] : memref<32x64xf32, #tpu.memory_space<vmem>>, vector<1x64xf32>
    %244 = arith.maximumf %242, %243 : vector<1x64xf32>
    %c9_257 = arith.constant 9 : index
    %c0_258 = arith.constant 0 : index
    %245 = vector.load %arg27[%c9_257, %c0_258] : memref<32x64xf32, #tpu.memory_space<vmem>>, vector<1x64xf32>
    tpu.vector_store %arg27[%c9_257, %c0_258], %244 {strides = array<i32>} : memref<32x64xf32, #tpu.memory_space<vmem>>, vector<1x64xf32>,
    %c16_259 = arith.constant 16 : index
    %c0_260 = arith.constant 0 : index
    %246 = vector.load %arg31[%c16_259, %c0_260] : memref<32x64xf32, #tpu.memory_space<vmem>>, vector<1x64xf32>
    %c17_261 = arith.constant 17 : index
    %c0_262 = arith.constant 0 : index
    %247 = vector.load %arg31[%c17_261, %c0_262] : memref<32x64xf32, #tpu.memory_space<vmem>>, vector<1x64xf32>
    %248 = arith.maximumf %246, %247 : vector<1x64xf32>
    %c17_263 = arith.constant 17 : index
    %c0_264 = arith.constant 0 : index
    %249 = vector.load %arg27[%c17_263, %c0_264] : memref<32x64xf32, #tpu.memory_space<vmem>>, vector<1x64xf32>
    tpu.vector_store %arg27[%c17_263, %c0_264], %248 {strides = array<i32>} : memref<32x64xf32, #tpu.memory_space<vmem>>, vector<1x64xf32>,
    %c24_265 = arith.constant 24 : index
    %c0_266 = arith.constant 0 : index
    %250 = vector.load %arg31[%c24_265, %c0_266] : memref<32x64xf32, #tpu.memory_space<vmem>>, vector<1x64xf32>
    %c25_267 = arith.constant 25 : index
    %c0_268 = arith.constant 0 : index
    %251 = vector.load %arg31[%c25_267, %c0_268] : memref<32x64xf32, #tpu.memory_space<vmem>>, vector<1x64xf32>
    %252 = arith.maximumf %250, %251 : vector<1x64xf32>
    %c25_269 = arith.constant 25 : index
    %c0_270 = arith.constant 0 : index
    %253 = vector.load %arg27[%c25_269, %c0_270] : memref<32x64xf32, #tpu.memory_space<vmem>>, vector<1x64xf32>
    tpu.vector_store %arg27[%c25_269, %c0_270], %252 {strides = array<i32>} : memref<32x64xf32, #tpu.memory_space<vmem>>, vector<1x64xf32>,
    %c0_271 = arith.constant 0 : index
    %c0_272 = arith.constant 0 : index
    %254 = vector.load %arg27[%c0_271, %c0_272] : memref<32x64xf32, #tpu.memory_space<vmem>>, vector<30x64xf32>
    %c0_273 = arith.constant 0 : index
    %c0_274 = arith.constant 0 : index
    %c0_275 = arith.constant 0 : index
    %255 = vector.load %arg13[%c0_273, %c0_274, %c0_275] : memref<3x64x32xf32, #tpu.memory_space<vmem>>, vector<1x64x32xf32>
    %256 = vector.shape_cast %255 : vector<1x64x32xf32> to vector<64x32xf32>
    %cst_276 = arith.constant dense<0.000000e+00> : vector<30x32xf32>
    %257 = tpu.matmul %254, %256, %cst_276 {dimension_numbers = #tpu.dot_dimension_numbers<[1], [0], [0], [1], [0, 0, 1, 1], [], []>} : vector<30x64xf32>, vector<64x32xf32>, vector<30x32xf32> -> vector<30x32xf32>
    %c1_277 = arith.constant 1 : index
    %c0_278 = arith.constant 0 : index
    %258 = vector.load %arg27[%c1_277, %c0_278] : memref<32x64xf32, #tpu.memory_space<vmem>>, vector<30x64xf32>
    %c1_279 = arith.constant 1 : index
    %c0_280 = arith.constant 0 : index
    %c0_281 = arith.constant 0 : index
    %259 = vector.load %arg13[%c1_279, %c0_280, %c0_281] : memref<3x64x32xf32, #tpu.memory_space<vmem>>, vector<1x64x32xf32>
    %260 = vector.shape_cast %259 : vector<1x64x32xf32> to vector<64x32xf32>
    %cst_282 = arith.constant dense<0.000000e+00> : vector<30x32xf32>
    %261 = tpu.matmul %258, %260, %cst_282 {dimension_numbers = #tpu.dot_dimension_numbers<[1], [0], [0], [1], [0, 0, 1, 1], [], []>} : vector<30x64xf32>, vector<64x32xf32>, vector<30x32xf32> -> vector<30x32xf32>
    %262 = arith.addf %257, %261 : vector<30x32xf32>
    %c2_283 = arith.constant 2 : index
    %c0_284 = arith.constant 0 : index
    %263 = vector.load %arg27[%c2_283, %c0_284] : memref<32x64xf32, #tpu.memory_space<vmem>>, vector<30x64xf32>
    %c2_285 = arith.constant 2 : index
    %c0_286 = arith.constant 0 : index
    %c0_287 = arith.constant 0 : index
    %264 = vector.load %arg13[%c2_285, %c0_286, %c0_287] : memref<3x64x32xf32, #tpu.memory_space<vmem>>, vector<1x64x32xf32>
    %265 = vector.shape_cast %264 : vector<1x64x32xf32> to vector<64x32xf32>
    %cst_288 = arith.constant dense<0.000000e+00> : vector<30x32xf32>
    %266 = tpu.matmul %263, %265, %cst_288 {dimension_numbers = #tpu.dot_dimension_numbers<[1], [0], [0], [1], [0, 0, 1, 1], [], []>} : vector<30x64xf32>, vector<64x32xf32>, vector<30x32xf32> -> vector<30x32xf32>
    %267 = arith.addf %262, %266 : vector<30x32xf32>
    %c0_289 = arith.constant 0 : index
    %c0_290 = arith.constant 0 : index
    %268 = vector.load %arg14[%c0_289, %c0_290] : memref<1x32xf32, #tpu.memory_space<vmem>>, vector<1x32xf32>
    %269 = vector.broadcast %268 : vector<1x32xf32> to vector<30x32xf32>
    %270 = arith.addf %267, %269 : vector<30x32xf32>
    %cst_291 = arith.constant 0.000000e+00 : f32
    %271 = vector.broadcast %cst_291 : f32 to vector<30x32xf32>
    %272 = arith.cmpf oge, %270, %271 : vector<30x32xf32>
    %cst_292 = arith.constant 1.500000e-01 : f32
    %273 = vector.broadcast %cst_292 : f32 to vector<30x32xf32>
    %274 = arith.mulf %273, %270 : vector<30x32xf32>
    %275 = arith.select %272, %270, %274 : vector<30x32xi1>, vector<30x32xf32>
    %c0_293 = arith.constant 0 : index
    %c0_294 = arith.constant 0 : index
    %276 = vector.load %arg15[%c0_293, %c0_294] : memref<4x30xf32, #tpu.memory_space<vmem>>, vector<4x30xf32>
    %cst_295 = arith.constant dense<0.000000e+00> : vector<4x32xf32>
    %277 = tpu.matmul %276, %275, %cst_295 {dimension_numbers = #tpu.dot_dimension_numbers<[1], [0], [0], [1], [0, 0, 1, 1], [], []>} : vector<4x30xf32>, vector<30x32xf32>, vector<4x32xf32> -> vector<4x32xf32>
    %c0_296 = arith.constant 0 : index
    %c0_297 = arith.constant 0 : index
    %278 = vector.load %arg16[%c0_296, %c0_297] : memref<32x32xf32, #tpu.memory_space<vmem>>, vector<32x32xf32>
    %cst_298 = arith.constant dense<0.000000e+00> : vector<4x32xf32>
    %279 = tpu.matmul %277, %278, %cst_298 {dimension_numbers = #tpu.dot_dimension_numbers<[1], [0], [0], [1], [0, 0, 1, 1], [], []>} : vector<4x32xf32>, vector<32x32xf32>, vector<4x32xf32> -> vector<4x32xf32>
    %280 = arith.mulf %279, %279 : vector<4x32xf32>
    %cst_299 = arith.constant dense<0.000000e+00> : vector<4xf32>
    %281 = vector.multi_reduction <add>, %280, %cst_299 [1] : vector<4x32xf32> to vector<4xf32>
    %282 = vector.shape_cast %281 : vector<4xf32> to vector<4x1xf32>
    %cst_300 = arith.constant 1.000000e-24 : f32
    %283 = vector.broadcast %cst_300 : f32 to vector<4x1xf32>
    %284 = arith.maximumf %282, %283 : vector<4x1xf32>
    %285 = math.rsqrt %284 : vector<4x1xf32>
    %286 = vector.broadcast %285 : vector<4x1xf32> to vector<4x32xf32>
    %287 = arith.mulf %279, %286 : vector<4x32xf32>
    %c0_301 = arith.constant 0 : index
    %c0_302 = arith.constant 0 : index
    %288 = vector.load %arg17[%c0_301, %c0_302] : memref<2x4xf32, #tpu.memory_space<vmem>>, vector<2x4xf32>
    %cst_303 = arith.constant dense<0.000000e+00> : vector<2x32xf32>
    %289 = tpu.matmul %288, %287, %cst_303 {dimension_numbers = #tpu.dot_dimension_numbers<[1], [0], [0], [1], [0, 0, 1, 1], [], []>} : vector<2x4xf32>, vector<4x32xf32>, vector<2x32xf32> -> vector<2x32xf32>
    %290 = arith.mulf %289, %289 : vector<2x32xf32>
    %c0_304 = arith.constant 0 : index
    %c0_305 = arith.constant 0 : index
    %291 = vector.load %arg18[%c0_304, %c0_305] : memref<32x16xf32, #tpu.memory_space<vmem>>, vector<32x16xf32>
    %cst_306 = arith.constant dense<0.000000e+00> : vector<2x16xf32>
    %292 = tpu.matmul %290, %291, %cst_306 {dimension_numbers = #tpu.dot_dimension_numbers<[1], [0], [0], [1], [0, 0, 1, 1], [], []>} : vector<2x32xf32>, vector<32x16xf32>, vector<2x16xf32> -> vector<2x16xf32>
    %c0_307 = arith.constant 0 : index
    %c0_308 = arith.constant 0 : index
    %293 = vector.load %arg19[%c0_307, %c0_308] : memref<1x16xf32, #tpu.memory_space<vmem>>, vector<1x16xf32>
    %294 = vector.broadcast %293 : vector<1x16xf32> to vector<2x16xf32>
    %295 = arith.addf %292, %294 : vector<2x16xf32>
    %cst_309 = arith.constant 0.000000e+00 : f32
    %296 = vector.broadcast %cst_309 : f32 to vector<2x16xf32>
    %297 = arith.cmpf oge, %295, %296 : vector<2x16xf32>
    %cst_310 = arith.constant 1.500000e-01 : f32
    %298 = vector.broadcast %cst_310 : f32 to vector<2x16xf32>
    %299 = arith.mulf %298, %295 : vector<2x16xf32>
    %300 = arith.select %297, %295, %299 : vector<2x16xi1>, vector<2x16xf32>
    %c0_311 = arith.constant 0 : index
    %c0_312 = arith.constant 0 : index
    %301 = vector.load %arg20[%c0_311, %c0_312] : memref<16x1xf32, #tpu.memory_space<vmem>>, vector<16x1xf32>
    %cst_313 = arith.constant dense<0.000000e+00> : vector<2x1xf32>
    %302 = tpu.matmul %300, %301, %cst_313 {dimension_numbers = #tpu.dot_dimension_numbers<[1], [0], [0], [1], [0, 0, 1, 1], [], []>} : vector<2x16xf32>, vector<16x1xf32>, vector<2x1xf32> -> vector<2x1xf32>
    %c0_314 = arith.constant 0 : index
    %c0_315 = arith.constant 0 : index
    %303 = vector.load %arg21[%c0_314, %c0_315] : memref<1x1xf32, #tpu.memory_space<vmem>>, vector<1x1xf32>
    %304 = vector.broadcast %303 : vector<1x1xf32> to vector<2x1xf32>
    %305 = arith.addf %302, %304 : vector<2x1xf32>
    %306 = arith.negf %305 : vector<2x1xf32>
    %307 = math.exp %306 : vector<2x1xf32>
    %cst_316 = arith.constant 1.000000e+00 : f32
    %308 = vector.broadcast %cst_316 : f32 to vector<2x1xf32>
    %309 = arith.addf %308, %307 : vector<2x1xf32>
    %310 = arith.divf %308, %309 : vector<2x1xf32>
    %c0_317 = arith.constant 0 : index
    %c0_318 = arith.constant 0 : index
    %311 = vector.load %arg22[%c0_317, %c0_318] : memref<2x1xf32, #tpu.memory_space<vmem>>, vector<2x1xf32>
    tpu.vector_store %arg22[%c0_317, %c0_318], %310 {strides = array<i32>} : memref<2x1xf32, #tpu.memory_space<vmem>>, vector<2x1xf32>,
    return
  }
}

</mosaic_0001>

<llo_original>
// kernel: tile.21
$region0: #{tile.21}
  %s0 = inlined_call_operand.vmem [shape: f32[8,8], index: 0, kind: input, shape index: {}]
  %s1 = inlined_call_operand.vmem [shape: f32[1,64], index: 1, kind: output, shape index: {}]
  $region1: #{tile.21} parent=0
    #allocation0 [shape = 'u8[4096]{0}', space=vmem, size = 0x1000, scoped, tag = 'scoped mem for output reshape']
    %v2 = vld [vmem:[%s0] sm:$0x1]
    %vm3 = vcmask 64512
    %4 = vst.msk [vmem:[#allocation0] sm:$0x1] %vm3, %v2
    %s5 = scalar_lea.vmem %s0, 7
    %v6 = vld [vmem:[%s5] sm:$0x1]
    %7 = vrot.lane.b32.xlu0 %v6, 56
    %v8 = vpop.permute.xlu0 %7
    %vm9 = vcmask 523712
    %10 = vst.msk [vmem:[#allocation0] sm:$0x1] %vm9, %v8
    %s11 = scalar_lea.vmem %s0, 6
    %v12 = vld [vmem:[%s11] sm:$0x1]
    %13 = vrot.lane.b32.xlu0 %v12, 48
    %v14 = vpop.permute.xlu0 %13
    %vm15 = vcmask 458112
    %16 = vst.msk [vmem:[#allocation0] sm:$0x1] %vm15, %v14
    %s17 = scalar_lea.vmem %s0, 5
    %v18 = vld [vmem:[%s17] sm:$0x1]
    %19 = vrot.lane.b32.xlu0 %v18, 40
    %v20 = vpop.permute.xlu0 %19
    %vm21 = vcmask 392512
    %22 = vst.msk [vmem:[#allocation0] sm:$0x1] %vm21, %v20
    %s23 = scalar_lea.vmem %s0, 4
    %v24 = vld [vmem:[%s23] sm:$0x1]
    %25 = vrot.lane.b32.xlu0 %v24, 32
    %v26 = vpop.permute.xlu0 %25
    %vm27 = vcmask 326912
    %28 = vst.msk [vmem:[#allocation0] sm:$0x1] %vm27, %v26
    %s29 = scalar_lea.vmem %s0, 3
    %v30 = vld [vmem:[%s29] sm:$0x1]
    %31 = vrot.lane.b32.xlu0 %v30, 24
    %v32 = vpop.permute.xlu0 %31
    %vm33 = vcmask 261312
    %34 = vst.msk [vmem:[#allocation0] sm:$0x1] %vm33, %v32
    %s35 = scalar_lea.vmem %s0, 2
    %v36 = vld [vmem:[%s35] sm:$0x1]
    %37 = vrot.lane.b32.xlu0 %v36, 16
    %v38 = vpop.permute.xlu0 %37
    %vm39 = vcmask 195712
    %40 = vst.msk [vmem:[#allocation0] sm:$0x1] %vm39, %v38
    %s41 = scalar_lea.vmem %s0, 1
    %v42 = vld [vmem:[%s41] sm:$0x1]
    %43 = vrot.lane.b32.xlu0 %v42, 8
    %v44 = vpop.permute.xlu0 %43
    %vm45 = vcmask 130112
    %46 = vst.msk [vmem:[#allocation0] sm:$0x1] %vm45, %v44
    %s48 = sshll.u32 1, 1
    %s49 = ssub.s32 %s48, 1
    %v51 = vld [vmem:[#allocation0] sm:%s49]
    %s52 = sshll.u32 1, 1
    %s53 = ssub.s32 %s52, 1
    %54 = vst [vmem:[%s1] sm:%s53] %v51

// kernel: tile.25
$region0: #{tile.25}
  #allocation0 [shape = 's32[1]{0}', space=sflag, size = 0x4, scoped, tag = 'scoped memory for tile.25']
  %s0 = inlined_call_operand.vmem [shape: f32[16], index: 0, kind: input, shape index: {}]
  %s1 = inlined_call_operand.vmem [shape: f32[4,16], index: 1, kind: output, shape index: {}]
  // Predicated region
  $region2: #{tile.25} parent=0 // pred_check
    _
  $region3: #{tile.25} parent=0 // pred_check_branch
    %3 = sbr.rel (0) target = $region5
  $region4: #{tile.25} parent=0 // pred_region
    _
  $region5: #{tile.25} parent=0 // pred_fallthru
    _
  %v4 = vld [vmem:[%s0] ss:$0 sm:$0xff]
  %5 = vst [vmem:[%s1] sm:$0xf] %v4

// kernel: tile.26
$region0: #{tile.26}
  %s0 = inlined_call_operand.vmem [shape: f32[4,16], index: 0, kind: input, shape index: {}]
  %s1 = inlined_call_operand.vmem [shape: f32[1,64], index: 1, kind: output, shape index: {}]
  $region1: #{tile.26} parent=0
    #allocation0 [shape = 'u8[4096]{0}', space=vmem, size = 0x1000, scoped, tag = 'scoped mem for output reshape']
    #allocation1 [shape = 'u8[4096]{0}', space=vmem, size = 0x1000, scoped, tag = 'scoped mem for input reshape']
    %s3 = sshll.u32 1, 4
    %s4 = ssub.s32 %s3, 1
    %v5 = vld [vmem:[%s0] sm:%s4]
    %6 = vst [vmem:[#allocation1] sm:%s4] %v5
    %v7 = vld [vmem:[#allocation1] sm:$0x1]
    %vm8 = vcmask 130048
    %9 = vst.msk [vmem:[#allocation0] sm:$0x1] %vm8, %v7
    %s10 = scalar_lea.vmem [#allocation1], 3
    %v11 = vld [vmem:[%s10] sm:$0x1]
    %12 = vrot.lane.b32.xlu0 %v11, 48
    %v13 = vpop.permute.xlu0 %12
    %vm14 = vcmask 523648
    %15 = vst.msk [vmem:[#allocation0] sm:$0x1] %vm14, %v13
    %s16 = scalar_lea.vmem [#allocation1], 2
    %v17 = vld [vmem:[%s16] sm:$0x1]
    %18 = vrot.lane.b32.xlu0 %v17, 32
    %v19 = vpop.permute.xlu0 %18
    %vm20 = vcmask 392448
    %21 = vst.msk [vmem:[#allocation0] sm:$0x1] %vm20, %v19
    %s22 = scalar_lea.vmem [#allocation1], 1
    %v23 = vld [vmem:[%s22] sm:$0x1]
    %24 = vrot.lane.b32.xlu0 %v23, 16
    %v25 = vpop.permute.xlu0 %24
    %vm26 = vcmask 261248
    %27 = vst.msk [vmem:[#allocation0] sm:$0x1] %vm26, %v25
    %s29 = sshll.u32 1, 1
    %s30 = ssub.s32 %s29, 1
    %v32 = vld [vmem:[#allocation0] sm:%s30]
    %s33 = sshll.u32 1, 1
    %s34 = ssub.s32 %s33, 1
    %35 = vst [vmem:[%s1] sm:%s34] %v32

// kernel: tile.30
$region0: #{tile.30}
  #allocation0 [shape = 's32[1]{0}', space=sflag, size = 0x4, scoped, tag = 'scoped memory for tile.30']
  %s0 = inlined_call_operand.vmem [shape: f32[32], index: 0, kind: input, shape index: {}]
  %s1 = inlined_call_operand.vmem [shape: f32[2,32], index: 1, kind: output, shape index: {}]
  // Predicated region
  $region2: #{tile.30} parent=0 // pred_check
    _
  $region3: #{tile.30} parent=0 // pred_check_branch
    %3 = sbr.rel (0) target = $region5
  $region4: #{tile.30} parent=0 // pred_region
    _
  $region5: #{tile.30} parent=0 // pred_fallthru
    _
  %v4 = vld [vmem:[%s0] ss:$0 sm:$0xff]
  %5 = vst [vmem:[%s1] sm:$0x3] %v4

// kernel: tile.31
$region0: #{tile.31}
  %s0 = inlined_call_operand.vmem [shape: f32[2,32], index: 0, kind: input, shape index: {}]
  %s1 = inlined_call_operand.vmem [shape: f32[1,64], index: 1, kind: output, shape index: {}]
  $region1: #{tile.31} parent=0
    #allocation0 [shape = 'u8[4096]{0}', space=vmem, size = 0x1000, scoped, tag = 'scoped mem for output reshape']
    #allocation1 [shape = 'u8[4096]{0}', space=vmem, size = 0x1000, scoped, tag = 'scoped mem for input reshape']
    %s3 = sshll.u32 1, 2
    %s4 = ssub.s32 %s3, 1
    %v5 = vld [vmem:[%s0] sm:%s4]
    %6 = vst [vmem:[#allocation1] sm:%s4] %v5
    %v7 = vld [vmem:[#allocation1] sm:$0x1]
    %vm8 = vcmask 261120
    %9 = vst.msk [vmem:[#allocation0] sm:$0x1] %vm8, %v7
    %s10 = scalar_lea.vmem [#allocation1], 1
    %v11 = vld [vmem:[%s10] sm:$0x1]
    %12 = vrot.lane.b32.xlu0 %v11, 32
    %v13 = vpop.permute.xlu0 %12
    %vm14 = vcmask 523520
    %15 = vst.msk [vmem:[#allocation0] sm:$0x1] %vm14, %v13
    %s17 = sshll.u32 1, 1
    %s18 = ssub.s32 %s17, 1
    %v20 = vld [vmem:[#allocation0] sm:%s18]
    %s21 = sshll.u32 1, 1
    %s22 = ssub.s32 %s21, 1
    %23 = vst [vmem:[%s1] sm:%s22] %v20

// kernel: siamese_forward.1
$region0: #{siamese_forward.1}
  #allocation0 [shape = 'u32[]', space=smem, size = 0x4, offset = 0x4, fixed_abs, tag = 'smem constant byte address 0x4 - core index']
  #allocation1 [shape = 'u32[144,128]{1,0:T(1,128)}', space=vmem, size = 0x12000, scoped, tag = 'internal scratch']
  #allocation2 [shape = 'f32[96,16]{1,0:T(8,128)}', space=vmem, size = 0xc000, scoped, tag = 'scratch operand']
  #allocation3 [shape = 'f32[64,64]{1,0:T(8,128)}', space=vmem, size = 0x8000, scoped, tag = 'scratch operand']
  #allocation4 [shape = 'f32[32,64]{1,0:T(8,128)}', space=vmem, size = 0x4000, scoped, tag = 'scratch operand']
  #allocation5 [shape = 'f32[32,64]{1,0:T(8,128)}', space=vmem, size = 0x4000, scoped, tag = 'scratch operand']
  #allocation6 [shape = 'f32[32,64]{1,0:T(8,128)}', space=vmem, size = 0x4000, scoped, tag = 'scratch operand']
  #allocation7 [shape = 'f32[96,64]{1,0:T(8,128)}', space=vmem, size = 0xc000, scoped, tag = 'scratch operand']
  #allocation8 [shape = 'f32[64,64]{1,0:T(8,128)}', space=vmem, size = 0x8000, scoped, tag = 'scratch operand']
  #allocation9 [shape = 'f32[32,64]{1,0:T(8,128)}', space=vmem, size = 0x4000, scoped, tag = 'scratch operand']
  #allocation10 [shape = 'f32[32,64]{1,0:T(8,128)}', space=vmem, size = 0x4000, scoped, tag = 'scratch operand']
  #allocation11 [shape = 'f32[1,1]{1,0:T(1,128)S(1)}', space=vmem, size = 0x200, scoped, tag = 'scoped memory for siamese_forward.1']
  %s0 = inlined_call_operand.vmem [shape: f32[64,16], index: 0, kind: input, shape index: {}]
  %s1 = inlined_call_operand.vmem [shape: f32[3,16,64], index: 1, kind: input, shape index: {}]
  %s2 = inlined_call_operand.vmem [shape: f32[3,16,64], index: 2, kind: input, shape index: {}]
  %s3 = inlined_call_operand.vmem [shape: f32[1,64], index: 3, kind: input, shape index: {}]
  %s4 = inlined_call_operand.vmem [shape: f32[3,64,64], index: 4, kind: input, shape index: {}]
  %s5 = inlined_call_operand.vmem [shape: f32[3,64,64], index: 5, kind: input, shape index: {}]
  %s6 = inlined_call_operand.vmem [shape: f32[1,64], index: 6, kind: input, shape index: {}]
  %s7 = inlined_call_operand.vmem [shape: f32[3,64,64], index: 7, kind: input, shape index: {}]
  %s8 = inlined_call_operand.vmem [shape: f32[3,64,64], index: 8, kind: input, shape index: {}]
  %s9 = inlined_call_operand.vmem [shape: f32[1,64], index: 9, kind: input, shape index: {}]
  %s10 = inlined_call_operand.vmem [shape: f32[3,64,64], index: 10, kind: input, shape index: {}]
  %s11 = inlined_call_operand.vmem [shape: f32[3,64,64], index: 11, kind: input, shape index: {}]
  %s12 = inlined_call_operand.vmem [shape: f32[1,64], index: 12, kind: input, shape index: {}]
  %s13 = inlined_call_operand.vmem [shape: f32[3,64,32], index: 13, kind: input, shape index: {}]
  %s14 = inlined_call_operand.vmem [shape: f32[1,32], index: 14, kind: input, shape index: {}]
  %s15 = inlined_call_operand.vmem [shape: f32[4,30], index: 15, kind: input, shape index: {}]
  %s16 = inlined_call_operand.vmem [shape: f32[32,32], index: 16, kind: input, shape index: {}]
  %s17 = inlined_call_operand.vmem [shape: f32[2,4], index: 17, kind: input, shape index: {}]
  %s18 = inlined_call_operand.vmem [shape: f32[32,16], index: 18, kind: input, shape index: {}]
  %s19 = inlined_call_operand.vmem [shape: f32[1,16], index: 19, kind: input, shape index: {}]
  %s20 = inlined_call_operand.vmem [shape: f32[16,1], index: 20, kind: input, shape index: {}]
  %s21 = inlined_call_operand.<no memory space> [shape: f32[1,1], index: 21, kind: input, shape index: {}]
  %s22 = inlined_call_operand.vmem [shape: f32[2,1], index: 22, kind: output, shape index: {}]
  %s23 = sld [smem:[#allocation0]]
  $region98: #{siamese_forward.1} parent=0
    _
  %s25 = ssub.s32 1, %s23
  %s26 = scalar_select 0, %s25, %s23
  %v27 = vstv %s21
  %28 = vst [vmem:[#allocation11] sm:$0x1] %v27
  // Predicated region
  $region2: #{siamese_forward.1} parent=0 // pred_check
    _
  $region3: #{siamese_forward.1} parent=0 // pred_check_branch
    %30 = sbr.rel (0) target = $region5
  $region4: #{siamese_forward.1} parent=0 // pred_region
    _
  $region5: #{siamese_forward.1} parent=0 // pred_fallthru
    _
  // Predicated region
  $region6: #{siamese_forward.1} parent=0 // pred_check
    _
  $region7: #{siamese_forward.1} parent=0 // pred_check_branch
    %32 = sbr.rel (0) target = $region9
  $region8: #{siamese_forward.1} parent=0 // pred_region
    _
  $region9: #{siamese_forward.1} parent=0 // pred_fallthru
    _
  // Predicated region
  $region10: #{siamese_forward.1} parent=0 // pred_check
    _
  $region11: #{siamese_forward.1} parent=0 // pred_check_branch
    %34 = sbr.rel (0) target = $region13
  $region12: #{siamese_forward.1} parent=0 // pred_region
    _
  $region13: #{siamese_forward.1} parent=0 // pred_fallthru
    _
  // Predicated region
  $region14: #{siamese_forward.1} parent=0 // pred_check
    _
  $region15: #{siamese_forward.1} parent=0 // pred_check_branch
    %36 = sbr.rel (0) target = $region17
  $region16: #{siamese_forward.1} parent=0 // pred_region
    _
  $region17: #{siamese_forward.1} parent=0 // pred_fallthru
    _
  // Predicated region
  $region18: #{siamese_forward.1} parent=0 // pred_check
    _
  $region19: #{siamese_forward.1} parent=0 // pred_check_branch
    %38 = sbr.rel (0) target = $region21
  $region20: #{siamese_forward.1} parent=0 // pred_region
    _
  $region21: #{siamese_forward.1} parent=0 // pred_fallthru
    _
  // Predicated region
  $region22: #{siamese_forward.1} parent=0 // pred_check
    _
  $region23: #{siamese_forward.1} parent=0 // pred_check_branch
    %40 = sbr.rel (0) target = $region25
  $region24: #{siamese_forward.1} parent=0 // pred_region
    _
  $region25: #{siamese_forward.1} parent=0 // pred_fallthru
    _
  // Predicated region
  $region26: #{siamese_forward.1} parent=0 // pred_check
    _
  $region27: #{siamese_forward.1} parent=0 // pred_check_branch
    %42 = sbr.rel (0) target = $region29
  $region28: #{siamese_forward.1} parent=0 // pred_region
    _
  $region29: #{siamese_forward.1} parent=0 // pred_fallthru
    _
  // Predicated region
  $region30: #{siamese_forward.1} parent=0 // pred_check
    _
  $region31: #{siamese_forward.1} parent=0 // pred_check_branch
    %44 = sbr.rel (0) target = $region33
  $region32: #{siamese_forward.1} parent=0 // pred_region
    _
  $region33: #{siamese_forward.1} parent=0 // pred_fallthru
    _
  // Predicated region
  $region34: #{siamese_forward.1} parent=0 // pred_check
    _
  $region35: #{siamese_forward.1} parent=0 // pred_check_branch
    %46 = sbr.rel (0) target = $region37
  $region36: #{siamese_forward.1} parent=0 // pred_region
    _
  $region37: #{siamese_forward.1} parent=0 // pred_fallthru
    _
  // Predicated region
  $region38: #{siamese_forward.1} parent=0 // pred_check
    _
  $region39: #{siamese_forward.1} parent=0 // pred_check_branch
    %48 = sbr.rel (0) target = $region41
  $region40: #{siamese_forward.1} parent=0 // pred_region
    _
  $region41: #{siamese_forward.1} parent=0 // pred_fallthru
    _
  // Predicated region
  $region42: #{siamese_forward.1} parent=0 // pred_check
    _
  $region43: #{siamese_forward.1} parent=0 // pred_check_branch
    %50 = sbr.rel (0) target = $region45
  $region44: #{siamese_forward.1} parent=0 // pred_region
    _
  $region45: #{siamese_forward.1} parent=0 // pred_fallthru
    _
  // Predicated region
  $region46: #{siamese_forward.1} parent=0 // pred_check
    _
  $region47: #{siamese_forward.1} parent=0 // pred_check_branch
    %52 = sbr.rel (0) target = $region49
  $region48: #{siamese_forward.1} parent=0 // pred_region
    _
  $region49: #{siamese_forward.1} parent=0 // pred_fallthru
    _
  // Predicated region
  $region50: #{siamese_forward.1} parent=0 // pred_check
    _
  $region51: #{siamese_forward.1} parent=0 // pred_check_branch
    %54 = sbr.rel (0) target = $region53
  $region52: #{siamese_forward.1} parent=0 // pred_region
    _
  $region53: #{siamese_forward.1} parent=0 // pred_fallthru
    _
  // Predicated region
  $region54: #{siamese_forward.1} parent=0 // pred_check
    _
  $region55: #{siamese_forward.1} parent=0 // pred_check_branch
    %56 = sbr.rel (0) target = $region57
  $region56: #{siamese_forward.1} parent=0 // pred_region
    _
  $region57: #{siamese_forward.1} parent=0 // pred_fallthru
    _
  // Predicated region
  $region58: #{siamese_forward.1} parent=0 // pred_check
    _
  $region59: #{siamese_forward.1} parent=0 // pred_check_branch
    %58 = sbr.rel (0) target = $region61
  $region60: #{siamese_forward.1} parent=0 // pred_region
    _
  $region61: #{siamese_forward.1} parent=0 // pred_fallthru
    _
  // Predicated region
  $region62: #{siamese_forward.1} parent=0 // pred_check
    _
  $region63: #{siamese_forward.1} parent=0 // pred_check_branch
    %60 = sbr.rel (0) target = $region65
  $region64: #{siamese_forward.1} parent=0 // pred_region
    _
  $region65: #{siamese_forward.1} parent=0 // pred_fallthru
    _
  // Predicated region
  $region66: #{siamese_forward.1} parent=0 // pred_check
    _
  $region67: #{siamese_forward.1} parent=0 // pred_check_branch
    %62 = sbr.rel (0) target = $region69
  $region68: #{siamese_forward.1} parent=0 // pred_region
    _
  $region69: #{siamese_forward.1} parent=0 // pred_fallthru
    _
  // Predicated region
  $region70: #{siamese_forward.1} parent=0 // pred_check
    _
  $region71: #{siamese_forward.1} parent=0 // pred_check_branch
    %64 = sbr.rel (0) target = $region73
  $region72: #{siamese_forward.1} parent=0 // pred_region
    _
  $region73: #{siamese_forward.1} parent=0 // pred_fallthru
    _
  // Predicated region
  $region74: #{siamese_forward.1} parent=0 // pred_check
    _
  $region75: #{siamese_forward.1} parent=0 // pred_check_branch
    %66 = sbr.rel (0) target = $region77
  $region76: #{siamese_forward.1} parent=0 // pred_region
    _
  $region77: #{siamese_forward.1} parent=0 // pred_fallthru
    _
  // Predicated region
  $region78: #{siamese_forward.1} parent=0 // pred_check
    _
  $region79: #{siamese_forward.1} parent=0 // pred_check_branch
    %68 = sbr.rel (0) target = $region81
  $region80: #{siamese_forward.1} parent=0 // pred_region
    _
  $region81: #{siamese_forward.1} parent=0 // pred_fallthru
    _
  // Predicated region
  $region82: #{siamese_forward.1} parent=0 // pred_check
    _
  $region83: #{siamese_forward.1} parent=0 // pred_check_branch
    %70 = sbr.rel (0) target = $region85
  $region84: #{siamese_forward.1} parent=0 // pred_region
    _
  $region85: #{siamese_forward.1} parent=0 // pred_fallthru
    _
  // Predicated region
  $region86: #{siamese_forward.1} parent=0 // pred_check
    _
  $region87: #{siamese_forward.1} parent=0 // pred_check_branch
    %72 = sbr.rel (0) target = $region89
  $region88: #{siamese_forward.1} parent=0 // pred_region
    _
  $region89: #{siamese_forward.1} parent=0 // pred_fallthru
    _
  %vm73 = vcmask 130048
  %74 = vst.msk [vmem:[#allocation2] sm:$0xff] %vm73, 0.0
  %75 = vst.msk [vmem:[#allocation2 + $0x8] sm:$0xff] %vm73, 0.0
  %76 = vst.msk [vmem:[#allocation2 + $0x10] sm:$0xff] %vm73, 0.0
  %77 = vst.msk [vmem:[#allocation2 + $0x18] sm:$0xff] %vm73, 0.0
  %78 = vst.msk [vmem:[#allocation2 + $0x20] sm:$0xff] %vm73, 0.0
  %79 = vst.msk [vmem:[#allocation2 + $0x28] sm:$0xff] %vm73, 0.0
  %80 = vst.msk [vmem:[#allocation2 + $0x30] sm:$0xff] %vm73, 0.0
  %81 = vst.msk [vmem:[#allocation2 + $0x38] sm:$0xff] %vm73, 0.0
  %82 = vst.msk [vmem:[#allocation2 + $0x40] sm:$0xff] %vm73, 0.0
  %83 = vst.msk [vmem:[#allocation2 + $0x48] sm:$0xff] %vm73, 0.0
  %84 = vst.msk [vmem:[#allocation2 + $0x50] sm:$0xff] %vm73, 0.0
  %85 = vst.msk [vmem:[#allocation2 + $0x58] sm:$0xff] %vm73, 0.0
  %vm86 = vcmask 523264
  %87 = vst.msk [vmem:[#allocation3] sm:$0xff] %vm86, 0.0
  %88 = vst.msk [vmem:[#allocation3 + $0x8] sm:$0xff] %vm86, 0.0
  %89 = vst.msk [vmem:[#allocation3 + $0x10] sm:$0xff] %vm86, 0.0
  %90 = vst.msk [vmem:[#allocation3 + $0x18] sm:$0xff] %vm86, 0.0
  %91 = vst.msk [vmem:[#allocation3 + $0x20] sm:$0xff] %vm86, 0.0
  %92 = vst.msk [vmem:[#allocation3 + $0x28] sm:$0xff] %vm86, 0.0
  %93 = vst.msk [vmem:[#allocation3 + $0x30] sm:$0xff] %vm86, 0.0
  %94 = vst.msk [vmem:[#allocation3 + $0x38] sm:$0xff] %vm86, 0.0
  %95 = vst.msk [vmem:[#allocation4] sm:$0xff] %vm86, 0.0
  %96 = vst.msk [vmem:[#allocation4 + $0x8] sm:$0xff] %vm86, 0.0
  %97 = vst.msk [vmem:[#allocation4 + $0x10] sm:$0xff] %vm86, 0.0
  %98 = vst.msk [vmem:[#allocation4 + $0x18] sm:$0xff] %vm86, 0.0
  %99 = vst.msk [vmem:[#allocation5] sm:$0xff] %vm86, 0.0
  %100 = vst.msk [vmem:[#allocation5 + $0x8] sm:$0xff] %vm86, 0.0
  %101 = vst.msk [vmem:[#allocation5 + $0x10] sm:$0xff] %vm86, 0.0
  %102 = vst.msk [vmem:[#allocation5 + $0x18] sm:$0xff] %vm86, 0.0
  %103 = vst.msk [vmem:[#allocation6] sm:$0xff] %vm86, 0.0
  %104 = vst.msk [vmem:[#allocation6 + $0x8] sm:$0xff] %vm86, 0.0
  %105 = vst.msk [vmem:[#allocation6 + $0x10] sm:$0xff] %vm86, 0.0
  %106 = vst.msk [vmem:[#allocation6 + $0x18] sm:$0xff] %vm86, 0.0
  %v107 = vld [vmem:[%s0] sm:$0xff]
  %v108 = vld [vmem:[%s0 + $0x8] sm:$0xff]
  %109 = vst.msk [vmem:[#allocation2 + $0x1] sm:$0xff] %vm73, %v107
  %110 = vst.msk [vmem:[#allocation2 + $0x9] sm:$0xff] %vm73, %v108
  %v111 = vld [vmem:[%s0 + $0x10] sm:$0xff]
  %v112 = vld [vmem:[%s0 + $0x18] sm:$0xff]
  %113 = vst.msk [vmem:[#allocation2 + $0x19] sm:$0xff] %vm73, %v111
  %114 = vst.msk [vmem:[#allocation2 + $0x21] sm:$0xff] %vm73, %v112
  %v115 = vld [vmem:[%s0 + $0x20] sm:$0xff]
  %v116 = vld [vmem:[%s0 + $0x28] sm:$0xff]
  %117 = vst.msk [vmem:[#allocation2 + $0x31] sm:$0xff] %vm73, %v115
  %118 = vst.msk [vmem:[#allocation2 + $0x39] sm:$0xff] %vm73, %v116
  %v119 = vld [vmem:[%s0 + $0x30] sm:$0xff]
  %v120 = vld [vmem:[%s0 + $0x38] sm:$0xff]
  %121 = vst.msk [vmem:[#allocation2 + $0x49] sm:$0xff] %vm73, %v119
  %122 = vst.msk [vmem:[#allocation2 + $0x51] sm:$0xff] %vm73, %v120
  %v123 = vld [vmem:[#allocation2] sm:$0xff]
  %v124 = vld [vmem:[#allocation2 + $0x8] sm:$0xff]
  %v125 = vld [vmem:[#allocation2 + $0x10] sm:$0xff]
  %v126 = vld [vmem:[#allocation2 + $0x18] sm:$0xff]
  %v127 = vld [vmem:[#allocation2 + $0x20] sm:$0xff]
  %v128 = vld [vmem:[#allocation2 + $0x28] sm:$0xff]
  %v129 = vld [vmem:[#allocation2 + $0x30] sm:$0xff]
  %v130 = vld [vmem:[#allocation2 + $0x38] sm:$0xff]
  %v131 = vld [vmem:[#allocation2 + $0x40] sm:$0xff]
  %v132 = vld [vmem:[#allocation2 + $0x48] sm:$0xff]
  %v133 = vld [vmem:[#allocation2 + $0x50] sm:$0xff]
  %v134 = vld [vmem:[#allocation2 + $0x58] sm:$0x3f]
  %v135 = vld [vmem:[%s1] sm:$0xff]
  %v136 = vld [vmem:[%s1 + $0x8] sm:$0xff]
  %v137 = vld [vmem:[%s2] sm:$0xff]
  %v138 = vld [vmem:[%s2 + $0x8] sm:$0xff]
  %v139 = vld [vmem:[#allocation2 + $0x1] sm:$0xff]
  %v140 = vld [vmem:[#allocation2 + $0x9] sm:$0xff]
  %v141 = vld [vmem:[#allocation2 + $0x11] sm:$0xff]
  %v142 = vld [vmem:[#allocation2 + $0x19] sm:$0xff]
  %v143 = vld [vmem:[#allocation2 + $0x21] sm:$0xff]
  %v144 = vld [vmem:[#allocation2 + $0x29] sm:$0xff]
  %v145 = vld [vmem:[#allocation2 + $0x31] sm:$0xff]
  %v146 = vld [vmem:[#allocation2 + $0x39] sm:$0xff]
  %v147 = vld [vmem:[#allocation2 + $0x41] sm:$0xff]
  %v148 = vld [vmem:[#allocation2 + $0x49] sm:$0xff]
  %v149 = vld [vmem:[#allocation2 + $0x51] sm:$0xff]
  %v150 = vld [vmem:[#allocation2 + $0x59] sm:$0x3f]
  %s151 = scalar_lea.vmem %s1, 16
  %v152 = vld [vmem:[%s151] sm:$0xff]
  %v153 = vld [vmem:[%s151 + $0x8] sm:$0xff]
  %v155 = vsel %vm73, %v139, 0
  %v158 = vsel %vm73, %v140, 0
  %v161 = vsel %vm73, %v141, 0
  %v164 = vsel %vm73, %v142, 0
  %v167 = vsel %vm73, %v143, 0
  %v170 = vsel %vm73, %v144, 0
  %v173 = vsel %vm73, %v145, 0
  %v176 = vsel %vm73, %v146, 0
  %v179 = vsel %vm73, %v147, 0
  %v182 = vsel %vm73, %v148, 0
  %v185 = vsel %vm73, %v149, 0
  %v188 = vsel %vm73, %v150, 0
  %190 = vmatprep.subr.mxu0 0.0
  %191 = vmatpush1.msra.mxu0 0.0
  %192 = vmatprep.subr.mxu0 0.0
  %193 = vmatpush1.msra.mxu0 0.0
  %194 = vmatprep.subr.mxu0 0.0
  %195 = vmatpush1.msra.mxu0 0.0
  %196 = vmatprep.subr.mxu0 0.0
  %197 = vmatpush1.msra.mxu0 0.0
  %198 = vmatprep.subr.mxu0 0.0
  %199 = vmatpush1.msra.mxu0 0.0
  %200 = vmatprep.subr.mxu0 0.0
  %201 = vmatpush1.msra.mxu0 0.0
  %202 = vmatprep.subr.mxu0 0.0
  %203 = vmatpush1.msra.mxu0 0.0
  %204 = vmatprep.subr.mxu0 0.0
  %205 = vmatpush1.msra.mxu0 0.0
  %206 = vmatprep.subr.mxu0 0.0
  %207 = vmatpush1.msra.mxu0 0.0
  %208 = vmatprep.subr.mxu0 0.0
  %209 = vmatpush1.msra.mxu0 0.0
  %210 = vmatprep.subr.mxu0 0.0
  %211 = vmatpush1.msra.mxu0 0.0
  %212 = vmatprep.subr.mxu0 0.0
  %213 = vmatpush1.msra.mxu0 0.0
  %214 = vmatprep.subr.mxu0 0.0
  %215 = vmatpush1.msra.mxu0 0.0
  %216 = vmatprep.subr.mxu0 0.0
  %217 = vmatpush1.msra.mxu0 0.0
  %218 = vmatprep.subr.mxu0 0.0
  %219 = vmatpush1.msra.mxu0 %v153
  %220 = vmatprep.subr.mxu0 0.0
  %221 = vmatpush1.msra.mxu0 %v152
  %222 = vmatprep.subr.mxu0 0.0
  %223 = vmatpush2.msra.mxu0 0.0
  %224 = vmatprep.subr.mxu0 0.0
  %225 = vmatpush2.msra.mxu0 0.0
  %226 = vmatprep.subr.mxu0 0.0
  %227 = vmatpush2.msra.mxu0 0.0
  %228 = vmatprep.subr.mxu0 0.0
  %229 = vmatpush2.msra.mxu0 0.0
  %230 = vmatprep.subr.mxu0 0.0
  %231 = vmatpush2.msra.mxu0 0.0
  %232 = vmatprep.subr.mxu0 0.0
  %233 = vmatpush2.msra.mxu0 0.0
  %234 = vmatprep.subr.mxu0 0.0
  %235 = vmatpush2.msra.mxu0 0.0
  %236 = vmatprep.subr.mxu0 0.0
  %237 = vmatpush2.msra.mxu0 0.0
  %238 = vmatprep.subr.mxu0 0.0
  %239 = vmatpush2.msra.mxu0 0.0
  %240 = vmatprep.subr.mxu0 0.0
  %241 = vmatpush2.msra.mxu0 0.0
  %242 = vmatprep.subr.mxu0 0.0
  %243 = vmatpush2.msra.mxu0 0.0
  %244 = vmatprep.subr.mxu0 0.0
  %245 = vmatpush2.msra.mxu0 0.0
  %246 = vmatprep.subr.mxu0 0.0
  %247 = vmatpush2.msra.mxu0 0.0
  %248 = vmatprep.subr.mxu0 0.0
  %249 = vmatpush2.msra.mxu0 0.0
  %250 = vmatprep.subr.mxu0 0.0
  %251 = vmatpush2.msra.mxu0 0.0
  %252 = vmatprep.subr.mxu0 0.0
  %253 = vmatpush2.msra.mxu0 0.0
  %254 = vmatprep.mubr.f32.mxu0 0.0
  %255 = vmatmul.mubr.f32.gmra.mxu0 %v155
  %v256 = vpop.f32.mrf.mxu0
  %v257 = vadd.f32 0.0, %v256
  %v258 = vpop.f32.mrf.mxu0
  %259 = vmatprep.mubr.f32.mxu0 0.0
  %260 = vmatmul.mubr.f32.gmra.mxu0 %v158
  %v261 = vpop.f32.mrf.mxu0
  %v262 = vadd.f32 0.0, %v261
  %v263 = vpop.f32.mrf.mxu0
  %264 = vmatprep.mubr.f32.mxu0 0.0
  %265 = vmatmul.mubr.f32.gmra.mxu0 %v161
  %v266 = vpop.f32.mrf.mxu0
  %v267 = vadd.f32 0.0, %v266
  %v268 = vpop.f32.mrf.mxu0
  %269 = vmatprep.mubr.f32.mxu0 0.0
  %270 = vmatmul.mubr.f32.gmra.mxu0 %v164
  %v271 = vpop.f32.mrf.mxu0
  %v272 = vadd.f32 0.0, %v271
  %v273 = vpop.f32.mrf.mxu0
  %274 = vmatprep.mubr.f32.mxu0 0.0
  %275 = vmatmul.mubr.f32.gmra.mxu0 %v167
  %v276 = vpop.f32.mrf.mxu0
  %v277 = vadd.f32 0.0, %v276
  %v278 = vpop.f32.mrf.mxu0
  %279 = vmatprep.mubr.f32.mxu0 0.0
  %280 = vmatmul.mubr.f32.gmra.mxu0 %v170
  %v281 = vpop.f32.mrf.mxu0
  %v282 = vadd.f32 0.0, %v281
  %v283 = vpop.f32.mrf.mxu0
  %284 = vmatprep.mubr.f32.mxu0 0.0
  %285 = vmatmul.mubr.f32.gmra.mxu0 %v173
  %v286 = vpop.f32.mrf.mxu0
  %v287 = vadd.f32 0.0, %v286
  %v288 = vpop.f32.mrf.mxu0
  %289 = vmatprep.mubr.f32.mxu0 0.0
  %290 = vmatmul.mubr.f32.gmra.mxu0 %v176
  %v291 = vpop.f32.mrf.mxu0
  %v292 = vadd.f32 0.0, %v291
  %v293 = vpop.f32.mrf.mxu0
  %294 = vmatprep.mubr.f32.mxu0 0.0
  %295 = vmatmul.mubr.f32.gmra.mxu0 %v179
  %v296 = vpop.f32.mrf.mxu0
  %v297 = vadd.f32 0.0, %v296
  %v298 = vpop.f32.mrf.mxu0
  %299 = vmatprep.mubr.f32.mxu0 0.0
  %300 = vmatmul.mubr.f32.gmra.mxu0 %v182
  %v301 = vpop.f32.mrf.mxu0
  %v302 = vadd.f32 0.0, %v301
  %v303 = vpop.f32.mrf.mxu0
  %304 = vmatprep.mubr.f32.mxu0 0.0
  %305 = vmatmul.mubr.f32.gmra.mxu0 %v185
  %v306 = vpop.f32.mrf.mxu0
  %v307 = vadd.f32 0.0, %v306
  %v308 = vpop.f32.mrf.mxu0
  %309 = vmatprep.mubr.f32.mxu0 0.0
  %310 = vmatmul.mubr.f32.gmra.mxu0 %v188
  %v311 = vpop.f32.mrf.mxu0
  %v312 = vadd.f32 0.0, %v311
  %v313 = vpop.f32.mrf.mxu0
  %314 = vdwg.mxu0
  %s315 = scalar_lea.vmem %s2, 16
  %v316 = vld [vmem:[%s315] sm:$0xff]
  %v317 = vld [vmem:[%s315 + $0x8] sm:$0xff]
  %318 = vmatprep.subr.mxu0 0.0
  %319 = vmatpush1.msra.mxu0 0.0
  %320 = vmatprep.subr.mxu0 0.0
  %321 = vmatpush1.msra.mxu0 0.0
  %322 = vmatprep.subr.mxu0 0.0
  %323 = vmatpush1.msra.mxu0 0.0
  %324 = vmatprep.subr.mxu0 0.0
  %325 = vmatpush1.msra.mxu0 0.0
  %326 = vmatprep.subr.mxu0 0.0
  %327 = vmatpush1.msra.mxu0 0.0
  %328 = vmatprep.subr.mxu0 0.0
  %329 = vmatpush1.msra.mxu0 0.0
  %330 = vmatprep.subr.mxu0 0.0
  %331 = vmatpush1.msra.mxu0 0.0
  %332 = vmatprep.subr.mxu0 0.0
  %333 = vmatpush1.msra.mxu0 0.0
  %334 = vmatprep.subr.mxu0 0.0
  %335 = vmatpush1.msra.mxu0 0.0
  %336 = vmatprep.subr.mxu0 0.0
  %337 = vmatpush1.msra.mxu0 0.0
  %338 = vmatprep.subr.mxu0 0.0
  %339 = vmatpush1.msra.mxu0 0.0
  %340 = vmatprep.subr.mxu0 0.0
  %341 = vmatpush1.msra.mxu0 0.0
  %342 = vmatprep.subr.mxu0 0.0
  %343 = vmatpush1.msra.mxu0 0.0
  %344 = vmatprep.subr.mxu0 0.0
  %345 = vmatpush1.msra.mxu0 0.0
  %346 = vmatprep.subr.mxu0 0.0
  %347 = vmatpush1.msra.mxu0 %v317
  %348 = vmatprep.subr.mxu0 0.0
  %349 = vmatpush1.msra.mxu0 %v316
  %350 = vmatprep.subr.mxu0 0.0
  %351 = vmatpush2.msra.mxu0 0.0
  %352 = vmatprep.subr.mxu0 0.0
  %353 = vmatpush2.msra.mxu0 0.0
  %354 = vmatprep.subr.mxu0 0.0
  %355 = vmatpush2.msra.mxu0 0.0
  %356 = vmatprep.subr.mxu0 0.0
  %357 = vmatpush2.msra.mxu0 0.0
  %358 = vmatprep.subr.mxu0 0.0
  %359 = vmatpush2.msra.mxu0 0.0
  %360 = vmatprep.subr.mxu0 0.0
  %361 = vmatpush2.msra.mxu0 0.0
  %362 = vmatprep.subr.mxu0 0.0
  %363 = vmatpush2.msra.mxu0 0.0
  %364 = vmatprep.subr.mxu0 0.0
  %365 = vmatpush2.msra.mxu0 0.0
  %366 = vmatprep.subr.mxu0 0.0
  %367 = vmatpush2.msra.mxu0 0.0
  %368 = vmatprep.subr.mxu0 0.0
  %369 = vmatpush2.msra.mxu0 0.0
  %370 = vmatprep.subr.mxu0 0.0
  %371 = vmatpush2.msra.mxu0 0.0
  %372 = vmatprep.subr.mxu0 0.0
  %373 = vmatpush2.msra.mxu0 0.0
  %374 = vmatprep.subr.mxu0 0.0
  %375 = vmatpush2.msra.mxu0 0.0
  %376 = vmatprep.subr.mxu0 0.0
  %377 = vmatpush2.msra.mxu0 0.0
  %378 = vmatprep.subr.mxu0 0.0
  %379 = vmatpush2.msra.mxu0 0.0
  %380 = vmatprep.subr.mxu0 0.0
  %381 = vmatpush2.msra.mxu0 0.0
  %382 = vmatprep.mubr.f32.mxu0 0.0
  %383 = vmatmul.mubr.f32.gmra.mxu0 %v155
  %v384 = vpop.f32.mrf.mxu0
  %v385 = vadd.f32 0.0, %v384
  %v386 = vpop.f32.mrf.mxu0
  %387 = vmatprep.mubr.f32.mxu0 0.0
  %388 = vmatmul.mubr.f32.gmra.mxu0 %v158
  %v389 = vpop.f32.mrf.mxu0
  %v390 = vadd.f32 0.0, %v389
  %v391 = vpop.f32.mrf.mxu0
  %392 = vmatprep.mubr.f32.mxu0 0.0
  %393 = vmatmul.mubr.f32.gmra.mxu0 %v161
  %v394 = vpop.f32.mrf.mxu0
  %v395 = vadd.f32 0.0, %v394
  %v396 = vpop.f32.mrf.mxu0
  %397 = vmatprep.mubr.f32.mxu0 0.0
  %398 = vmatmul.mubr.f32.gmra.mxu0 %v164
  %v399 = vpop.f32.mrf.mxu0
  %v400 = vadd.f32 0.0, %v399
  %v401 = vpop.f32.mrf.mxu0
  %402 = vmatprep.mubr.f32.mxu0 0.0
  %403 = vmatmul.mubr.f32.gmra.mxu0 %v167
  %v404 = vpop.f32.mrf.mxu0
  %v405 = vadd.f32 0.0, %v404
  %v406 = vpop.f32.mrf.mxu0
  %407 = vmatprep.mubr.f32.mxu0 0.0
  %408 = vmatmul.mubr.f32.gmra.mxu0 %v170
  %v409 = vpop.f32.mrf.mxu0
  %v410 = vadd.f32 0.0, %v409
  %v411 = vpop.f32.mrf.mxu0
  %412 = vmatprep.mubr.f32.mxu0 0.0
  %413 = vmatmul.mubr.f32.gmra.mxu0 %v173
  %v414 = vpop.f32.mrf.mxu0
  %v415 = vadd.f32 0.0, %v414
  %v416 = vpop.f32.mrf.mxu0
  %417 = vmatprep.mubr.f32.mxu0 0.0
  %418 = vmatmul.mubr.f32.gmra.mxu0 %v176
  %v419 = vpop.f32.mrf.mxu0
  %v420 = vadd.f32 0.0, %v419
  %v421 = vpop.f32.mrf.mxu0
  %422 = vmatprep.mubr.f32.mxu0 0.0
  %423 = vmatmul.mubr.f32.gmra.mxu0 %v179
  %v424 = vpop.f32.mrf.mxu0
  %v425 = vadd.f32 0.0, %v424
  %v426 = vpop.f32.mrf.mxu0
  %427 = vmatprep.mubr.f32.mxu0 0.0
  %428 = vmatmul.mubr.f32.gmra.mxu0 %v182
  %v429 = vpop.f32.mrf.mxu0
  %v430 = vadd.f32 0.0, %v429
  %v431 = vpop.f32.mrf.mxu0
  %432 = vmatprep.mubr.f32.mxu0 0.0
  %433 = vmatmul.mubr.f32.gmra.mxu0 %v185
  %v434 = vpop.f32.mrf.mxu0
  %v435 = vadd.f32 0.0, %v434
  %v436 = vpop.f32.mrf.mxu0
  %437 = vmatprep.mubr.f32.mxu0 0.0
  %438 = vmatmul.mubr.f32.gmra.mxu0 %v188
  %v439 = vpop.f32.mrf.mxu0
  %v440 = vadd.f32 0.0, %v439
  %v441 = vpop.f32.mrf.mxu0
  %442 = vdwg.mxu0
  %v444 = vsel %vm73, %v123, 0
  %v447 = vsel %vm73, %v124, 0
  %v450 = vsel %vm73, %v125, 0
  %v453 = vsel %vm73, %v126, 0
  %v456 = vsel %vm73, %v127, 0
  %v459 = vsel %vm73, %v128, 0
  %v462 = vsel %vm73, %v129, 0
  %v465 = vsel %vm73, %v130, 0
  %v468 = vsel %vm73, %v131, 0
  %v471 = vsel %vm73, %v132, 0
  %v474 = vsel %vm73, %v133, 0
  %v477 = vsel %vm73, %v134, 0
  %479 = vmatprep.subr.mxu0 0.0
  %480 = vmatpush1.msra.mxu0 0.0
  %481 = vmatprep.subr.mxu0 0.0
  %482 = vmatpush1.msra.mxu0 0.0
  %483 = vmatprep.subr.mxu0 0.0
  %484 = vmatpush1.msra.mxu0 0.0
  %485 = vmatprep.subr.mxu0 0.0
  %486 = vmatpush1.msra.mxu0 0.0
  %487 = vmatprep.subr.mxu0 0.0
  %488 = vmatpush1.msra.mxu0 0.0
  %489 = vmatprep.subr.mxu0 0.0
  %490 = vmatpush1.msra.mxu0 0.0
  %491 = vmatprep.subr.mxu0 0.0
  %492 = vmatpush1.msra.mxu0 0.0
  %493 = vmatprep.subr.mxu0 0.0
  %494 = vmatpush1.msra.mxu0 0.0
  %495 = vmatprep.subr.mxu0 0.0
  %496 = vmatpush1.msra.mxu0 0.0
  %497 = vmatprep.subr.mxu0 0.0
  %498 = vmatpush1.msra.mxu0 0.0
  %499 = vmatprep.subr.mxu0 0.0
  %500 = vmatpush1.msra.mxu0 0.0
  %501 = vmatprep.subr.mxu0 0.0
  %502 = vmatpush1.msra.mxu0 0.0
  %503 = vmatprep.subr.mxu0 0.0
  %504 = vmatpush1.msra.mxu0 0.0
  %505 = vmatprep.subr.mxu0 0.0
  %506 = vmatpush1.msra.mxu0 0.0
  %507 = vmatprep.subr.mxu0 0.0
  %508 = vmatpush1.msra.mxu0 %v136
  %509 = vmatprep.subr.mxu0 0.0
  %510 = vmatpush1.msra.mxu0 %v135
  %511 = vmatprep.subr.mxu0 0.0
  %512 = vmatpush2.msra.mxu0 0.0
  %513 = vmatprep.subr.mxu0 0.0
  %514 = vmatpush2.msra.mxu0 0.0
  %515 = vmatprep.subr.mxu0 0.0
  %516 = vmatpush2.msra.mxu0 0.0
  %517 = vmatprep.subr.mxu0 0.0
  %518 = vmatpush2.msra.mxu0 0.0
  %519 = vmatprep.subr.mxu0 0.0
  %520 = vmatpush2.msra.mxu0 0.0
  %521 = vmatprep.subr.mxu0 0.0
  %522 = vmatpush2.msra.mxu0 0.0
  %523 = vmatprep.subr.mxu0 0.0
  %524 = vmatpush2.msra.mxu0 0.0
  %525 = vmatprep.subr.mxu0 0.0
  %526 = vmatpush2.msra.mxu0 0.0
  %527 = vmatprep.subr.mxu0 0.0
  %528 = vmatpush2.msra.mxu0 0.0
  %529 = vmatprep.subr.mxu0 0.0
  %530 = vmatpush2.msra.mxu0 0.0
  %531 = vmatprep.subr.mxu0 0.0
  %532 = vmatpush2.msra.mxu0 0.0
  %533 = vmatprep.subr.mxu0 0.0
  %534 = vmatpush2.msra.mxu0 0.0
  %535 = vmatprep.subr.mxu0 0.0
  %536 = vmatpush2.msra.mxu0 0.0
  %537 = vmatprep.subr.mxu0 0.0
  %538 = vmatpush2.msra.mxu0 0.0
  %539 = vmatprep.subr.mxu0 0.0
  %540 = vmatpush2.msra.mxu0 0.0
  %541 = vmatprep.subr.mxu0 0.0
  %542 = vmatpush2.msra.mxu0 0.0
  %543 = vmatprep.mubr.f32.mxu0 0.0
  %544 = vmatmul.mubr.f32.gmra.mxu0 %v444
  %v545 = vpop.f32.mrf.mxu0
  %v546 = vadd.f32 %v257, %v545
  %v547 = vpop.f32.mrf.mxu0
  %548 = vmatprep.mubr.f32.mxu0 0.0
  %549 = vmatmul.mubr.f32.gmra.mxu0 %v447
  %v550 = vpop.f32.mrf.mxu0
  %v551 = vadd.f32 %v262, %v550
  %v552 = vpop.f32.mrf.mxu0
  %553 = vmatprep.mubr.f32.mxu0 0.0
  %554 = vmatmul.mubr.f32.gmra.mxu0 %v450
  %v555 = vpop.f32.mrf.mxu0
  %v556 = vadd.f32 %v267, %v555
  %v557 = vpop.f32.mrf.mxu0
  %558 = vmatprep.mubr.f32.mxu0 0.0
  %559 = vmatmul.mubr.f32.gmra.mxu0 %v453
  %v560 = vpop.f32.mrf.mxu0
  %v561 = vadd.f32 %v272, %v560
  %v562 = vpop.f32.mrf.mxu0
  %563 = vmatprep.mubr.f32.mxu0 0.0
  %564 = vmatmul.mubr.f32.gmra.mxu0 %v456
  %v565 = vpop.f32.mrf.mxu0
  %v566 = vadd.f32 %v277, %v565
  %v567 = vpop.f32.mrf.mxu0
  %568 = vmatprep.mubr.f32.mxu0 0.0
  %569 = vmatmul.mubr.f32.gmra.mxu0 %v459
  %v570 = vpop.f32.mrf.mxu0
  %v571 = vadd.f32 %v282, %v570
  %v572 = vpop.f32.mrf.mxu0
  %573 = vmatprep.mubr.f32.mxu0 0.0
  %574 = vmatmul.mubr.f32.gmra.mxu0 %v462
  %v575 = vpop.f32.mrf.mxu0
  %v576 = vadd.f32 %v287, %v575
  %v577 = vpop.f32.mrf.mxu0
  %578 = vmatprep.mubr.f32.mxu0 0.0
  %579 = vmatmul.mubr.f32.gmra.mxu0 %v465
  %v580 = vpop.f32.mrf.mxu0
  %v581 = vadd.f32 %v292, %v580
  %v582 = vpop.f32.mrf.mxu0
  %583 = vmatprep.mubr.f32.mxu0 0.0
  %584 = vmatmul.mubr.f32.gmra.mxu0 %v468
  %v585 = vpop.f32.mrf.mxu0
  %v586 = vadd.f32 %v297, %v585
  %v587 = vpop.f32.mrf.mxu0
  %588 = vmatprep.mubr.f32.mxu0 0.0
  %589 = vmatmul.mubr.f32.gmra.mxu0 %v471
  %v590 = vpop.f32.mrf.mxu0
  %v591 = vadd.f32 %v302, %v590
  %v592 = vpop.f32.mrf.mxu0
  %593 = vmatprep.mubr.f32.mxu0 0.0
  %594 = vmatmul.mubr.f32.gmra.mxu0 %v474
  %v595 = vpop.f32.mrf.mxu0
  %v596 = vadd.f32 %v307, %v595
  %v597 = vpop.f32.mrf.mxu0
  %598 = vmatprep.mubr.f32.mxu0 0.0
  %599 = vmatmul.mubr.f32.gmra.mxu0 %v477
  %v600 = vpop.f32.mrf.mxu0
  %v601 = vadd.f32 %v312, %v600
  %v602 = vpop.f32.mrf.mxu0
  %603 = vdwg.mxu0
  %604 = vmatprep.subr.mxu0 0.0
  %605 = vmatpush1.msra.mxu0 0.0
  %606 = vmatprep.subr.mxu0 0.0
  %607 = vmatpush1.msra.mxu0 0.0
  %608 = vmatprep.subr.mxu0 0.0
  %609 = vmatpush1.msra.mxu0 0.0
  %610 = vmatprep.subr.mxu0 0.0
  %611 = vmatpush1.msra.mxu0 0.0
  %612 = vmatprep.subr.mxu0 0.0
  %613 = vmatpush1.msra.mxu0 0.0
  %614 = vmatprep.subr.mxu0 0.0
  %615 = vmatpush1.msra.mxu0 0.0
  %616 = vmatprep.subr.mxu0 0.0
  %617 = vmatpush1.msra.mxu0 0.0
  %618 = vmatprep.subr.mxu0 0.0
  %619 = vmatpush1.msra.mxu0 0.0
  %620 = vmatprep.subr.mxu0 0.0
  %621 = vmatpush1.msra.mxu0 0.0
  %622 = vmatprep.subr.mxu0 0.0
  %623 = vmatpush1.msra.mxu0 0.0
  %624 = vmatprep.subr.mxu0 0.0
  %625 = vmatpush1.msra.mxu0 0.0
  %626 = vmatprep.subr.mxu0 0.0
  %627 = vmatpush1.msra.mxu0 0.0
  %628 = vmatprep.subr.mxu0 0.0
  %629 = vmatpush1.msra.mxu0 0.0
  %630 = vmatprep.subr.mxu0 0.0
  %631 = vmatpush1.msra.mxu0 0.0
  %632 = vmatprep.subr.mxu0 0.0
  %633 = vmatpush1.msra.mxu0 %v138
  %634 = vmatprep.subr.mxu0 0.0
  %635 = vmatpush1.msra.mxu0 %v137
  %636 = vmatprep.subr.mxu0 0.0
  %637 = vmatpush2.msra.mxu0 0.0
  %638 = vmatprep.subr.mxu0 0.0
  %639 = vmatpush2.msra.mxu0 0.0
  %640 = vmatprep.subr.mxu0 0.0
  %641 = vmatpush2.msra.mxu0 0.0
  %642 = vmatprep.subr.mxu0 0.0
  %643 = vmatpush2.msra.mxu0 0.0
  %644 = vmatprep.subr.mxu0 0.0
  %645 = vmatpush2.msra.mxu0 0.0
  %646 = vmatprep.subr.mxu0 0.0
  %647 = vmatpush2.msra.mxu0 0.0
  %648 = vmatprep.subr.mxu0 0.0
  %649 = vmatpush2.msra.mxu0 0.0
  %650 = vmatprep.subr.mxu0 0.0
  %651 = vmatpush2.msra.mxu0 0.0
  %652 = vmatprep.subr.mxu0 0.0
  %653 = vmatpush2.msra.mxu0 0.0
  %654 = vmatprep.subr.mxu0 0.0
  %655 = vmatpush2.msra.mxu0 0.0
  %656 = vmatprep.subr.mxu0 0.0
  %657 = vmatpush2.msra.mxu0 0.0
  %658 = vmatprep.subr.mxu0 0.0
  %659 = vmatpush2.msra.mxu0 0.0
  %660 = vmatprep.subr.mxu0 0.0
  %661 = vmatpush2.msra.mxu0 0.0
  %662 = vmatprep.subr.mxu0 0.0
  %663 = vmatpush2.msra.mxu0 0.0
  %664 = vmatprep.subr.mxu0 0.0
  %665 = vmatpush2.msra.mxu0 0.0
  %666 = vmatprep.subr.mxu0 0.0
  %667 = vmatpush2.msra.mxu0 0.0
  %668 = vmatprep.mubr.f32.mxu0 0.0
  %669 = vmatmul.mubr.f32.gmra.mxu0 %v444
  %v670 = vpop.f32.mrf.mxu0
  %v671 = vadd.f32 %v385, %v670
  %v672 = vpop.f32.mrf.mxu0
  %673 = vmatprep.mubr.f32.mxu0 0.0
  %674 = vmatmul.mubr.f32.gmra.mxu0 %v447
  %v675 = vpop.f32.mrf.mxu0
  %v676 = vadd.f32 %v390, %v675
  %v677 = vpop.f32.mrf.mxu0
  %678 = vmatprep.mubr.f32.mxu0 0.0
  %679 = vmatmul.mubr.f32.gmra.mxu0 %v450
  %v680 = vpop.f32.mrf.mxu0
  %v681 = vadd.f32 %v395, %v680
  %v682 = vpop.f32.mrf.mxu0
  %683 = vmatprep.mubr.f32.mxu0 0.0
  %684 = vmatmul.mubr.f32.gmra.mxu0 %v453
  %v685 = vpop.f32.mrf.mxu0
  %v686 = vadd.f32 %v400, %v685
  %v687 = vpop.f32.mrf.mxu0
  %688 = vmatprep.mubr.f32.mxu0 0.0
  %689 = vmatmul.mubr.f32.gmra.mxu0 %v456
  %v690 = vpop.f32.mrf.mxu0
  %v691 = vadd.f32 %v405, %v690
  %v692 = vpop.f32.mrf.mxu0
  %693 = vmatprep.mubr.f32.mxu0 0.0
  %694 = vmatmul.mubr.f32.gmra.mxu0 %v459
  %v695 = vpop.f32.mrf.mxu0
  %v696 = vadd.f32 %v410, %v695
  %v697 = vpop.f32.mrf.mxu0
  %698 = vmatprep.mubr.f32.mxu0 0.0
  %699 = vmatmul.mubr.f32.gmra.mxu0 %v462
  %v700 = vpop.f32.mrf.mxu0
  %v701 = vadd.f32 %v415, %v700
  %v702 = vpop.f32.mrf.mxu0
  %703 = vmatprep.mubr.f32.mxu0 0.0
  %704 = vmatmul.mubr.f32.gmra.mxu0 %v465
  %v705 = vpop.f32.mrf.mxu0
  %v706 = vadd.f32 %v420, %v705
  %v707 = vpop.f32.mrf.mxu0
  %708 = vmatprep.mubr.f32.mxu0 0.0
  %709 = vmatmul.mubr.f32.gmra.mxu0 %v468
  %v710 = vpop.f32.mrf.mxu0
  %v711 = vadd.f32 %v425, %v710
  %v712 = vpop.f32.mrf.mxu0
  %713 = vmatprep.mubr.f32.mxu0 0.0
  %714 = vmatmul.mubr.f32.gmra.mxu0 %v471
  %v715 = vpop.f32.mrf.mxu0
  %v716 = vadd.f32 %v430, %v715
  %v717 = vpop.f32.mrf.mxu0
  %718 = vmatprep.mubr.f32.mxu0 0.0
  %719 = vmatmul.mubr.f32.gmra.mxu0 %v474
  %v720 = vpop.f32.mrf.mxu0
  %v721 = vadd.f32 %v435, %v720
  %v722 = vpop.f32.mrf.mxu0
  %723 = vmatprep.mubr.f32.mxu0 0.0
  %724 = vmatmul.mubr.f32.gmra.mxu0 %v477
  %v725 = vpop.f32.mrf.mxu0
  %v726 = vadd.f32 %v440, %v725
  %v727 = vpop.f32.mrf.mxu0
  %728 = vdwg.mxu0
  %v729 = vld [vmem:[#allocation2 + $0x2] sm:$0xff]
  %v730 = vld [vmem:[#allocation2 + $0xa] sm:$0xff]
  %v731 = vld [vmem:[#allocation2 + $0x12] sm:$0xff]
  %v732 = vld [vmem:[#allocation2 + $0x1a] sm:$0xff]
  %v733 = vld [vmem:[#allocation2 + $0x22] sm:$0xff]
  %v734 = vld [vmem:[#allocation2 + $0x2a] sm:$0xff]
  %v735 = vld [vmem:[#allocation2 + $0x32] sm:$0xff]
  %v736 = vld [vmem:[#allocation2 + $0x3a] sm:$0xff]
  %v737 = vld [vmem:[#allocation2 + $0x42] sm:$0xff]
  %v738 = vld [vmem:[#allocation2 + $0x4a] sm:$0xff]
  %v739 = vld [vmem:[#allocation2 + $0x52] sm:$0xff]
  %v740 = vld [vmem:[#allocation2 + $0x5a] sm:$0x3f]
  %s741 = scalar_lea.vmem %s1, 32
  %v742 = vld [vmem:[%s741] sm:$0xff]
  %v743 = vld [vmem:[%s741 + $0x8] sm:$0xff]
  %v745 = vsel %vm73, %v729, 0
  %v748 = vsel %vm73, %v730, 0
  %v751 = vsel %vm73, %v731, 0
  %v754 = vsel %vm73, %v732, 0
  %v757 = vsel %vm73, %v733, 0
  %v760 = vsel %vm73, %v734, 0
  %v763 = vsel %vm73, %v735, 0
  %v766 = vsel %vm73, %v736, 0
  %v769 = vsel %vm73, %v737, 0
  %v772 = vsel %vm73, %v738, 0
  %v775 = vsel %vm73, %v739, 0
  %v778 = vsel %vm73, %v740, 0
  %780 = vmatprep.subr.mxu0 0.0
  %781 = vmatpush1.msra.mxu0 0.0
  %782 = vmatprep.subr.mxu0 0.0
  %783 = vmatpush1.msra.mxu0 0.0
  %784 = vmatprep.subr.mxu0 0.0
  %785 = vmatpush1.msra.mxu0 0.0
  %786 = vmatprep.subr.mxu0 0.0
  %787 = vmatpush1.msra.mxu0 0.0
  %788 = vmatprep.subr.mxu0 0.0
  %789 = vmatpush1.msra.mxu0 0.0
  %790 = vmatprep.subr.mxu0 0.0
  %791 = vmatpush1.msra.mxu0 0.0
  %792 = vmatprep.subr.mxu0 0.0
  %793 = vmatpush1.msra.mxu0 0.0
  %794 = vmatprep.subr.mxu0 0.0
  %795 = vmatpush1.msra.mxu0 0.0
  %796 = vmatprep.subr.mxu0 0.0
  %797 = vmatpush1.msra.mxu0 0.0
  %798 = vmatprep.subr.mxu0 0.0
  %799 = vmatpush1.msra.mxu0 0.0
  %800 = vmatprep.subr.mxu0 0.0
  %801 = vmatpush1.msra.mxu0 0.0
  %802 = vmatprep.subr.mxu0 0.0
  %803 = vmatpush1.msra.mxu0 0.0
  %804 = vmatprep.subr.mxu0 0.0
  %805 = vmatpush1.msra.mxu0 0.0
  %806 = vmatprep.subr.mxu0 0.0
  %807 = vmatpush1.msra.mxu0 0.0
  %808 = vmatprep.subr.mxu0 0.0
  %809 = vmatpush1.msra.mxu0 %v743
  %810 = vmatprep.subr.mxu0 0.0
  %811 = vmatpush1.msra.mxu0 %v742
  %812 = vmatprep.subr.mxu0 0.0
  %813 = vmatpush2.msra.mxu0 0.0
  %814 = vmatprep.subr.mxu0 0.0
  %815 = vmatpush2.msra.mxu0 0.0
  %816 = vmatprep.subr.mxu0 0.0
  %817 = vmatpush2.msra.mxu0 0.0
  %818 = vmatprep.subr.mxu0 0.0
  %819 = vmatpush2.msra.mxu0 0.0
  %820 = vmatprep.subr.mxu0 0.0
  %821 = vmatpush2.msra.mxu0 0.0
  %822 = vmatprep.subr.mxu0 0.0
  %823 = vmatpush2.msra.mxu0 0.0
  %824 = vmatprep.subr.mxu0 0.0
  %825 = vmatpush2.msra.mxu0 0.0
  %826 = vmatprep.subr.mxu0 0.0
  %827 = vmatpush2.msra.mxu0 0.0
  %828 = vmatprep.subr.mxu0 0.0
  %829 = vmatpush2.msra.mxu0 0.0
  %830 = vmatprep.subr.mxu0 0.0
  %831 = vmatpush2.msra.mxu0 0.0
  %832 = vmatprep.subr.mxu0 0.0
  %833 = vmatpush2.msra.mxu0 0.0
  %834 = vmatprep.subr.mxu0 0.0
  %835 = vmatpush2.msra.mxu0 0.0
  %836 = vmatprep.subr.mxu0 0.0
  %837 = vmatpush2.msra.mxu0 0.0
  %838 = vmatprep.subr.mxu0 0.0
  %839 = vmatpush2.msra.mxu0 0.0
  %840 = vmatprep.subr.mxu0 0.0
  %841 = vmatpush2.msra.mxu0 0.0
  %842 = vmatprep.subr.mxu0 0.0
  %843 = vmatpush2.msra.mxu0 0.0
  %844 = vmatprep.mubr.f32.mxu0 0.0
  %845 = vmatmul.mubr.f32.gmra.mxu0 %v745
  %v846 = vpop.f32.mrf.mxu0
  %v847 = vadd.f32 0.0, %v846
  %v848 = vpop.f32.mrf.mxu0
  %849 = vmatprep.mubr.f32.mxu0 0.0
  %850 = vmatmul.mubr.f32.gmra.mxu0 %v748
  %v851 = vpop.f32.mrf.mxu0
  %v852 = vadd.f32 0.0, %v851
  %v853 = vpop.f32.mrf.mxu0
  %854 = vmatprep.mubr.f32.mxu0 0.0
  %855 = vmatmul.mubr.f32.gmra.mxu0 %v751
  %v856 = vpop.f32.mrf.mxu0
  %v857 = vadd.f32 0.0, %v856
  %v858 = vpop.f32.mrf.mxu0
  %859 = vmatprep.mubr.f32.mxu0 0.0
  %860 = vmatmul.mubr.f32.gmra.mxu0 %v754
  %v861 = vpop.f32.mrf.mxu0
  %v862 = vadd.f32 0.0, %v861
  %v863 = vpop.f32.mrf.mxu0
  %864 = vmatprep.mubr.f32.mxu0 0.0
  %865 = vmatmul.mubr.f32.gmra.mxu0 %v757
  %v866 = vpop.f32.mrf.mxu0
  %v867 = vadd.f32 0.0, %v866
  %v868 = vpop.f32.mrf.mxu0
  %869 = vmatprep.mubr.f32.mxu0 0.0
  %870 = vmatmul.mubr.f32.gmra.mxu0 %v760
  %v871 = vpop.f32.mrf.mxu0
  %v872 = vadd.f32 0.0, %v871
  %v873 = vpop.f32.mrf.mxu0
  %874 = vmatprep.mubr.f32.mxu0 0.0
  %875 = vmatmul.mubr.f32.gmra.mxu0 %v763
  %v876 = vpop.f32.mrf.mxu0
  %v877 = vadd.f32 0.0, %v876
  %v878 = vpop.f32.mrf.mxu0
  %879 = vmatprep.mubr.f32.mxu0 0.0
  %880 = vmatmul.mubr.f32.gmra.mxu0 %v766
  %v881 = vpop.f32.mrf.mxu0
  %v882 = vadd.f32 0.0, %v881
  %v883 = vpop.f32.mrf.mxu0
  %884 = vmatprep.mubr.f32.mxu0 0.0
  %885 = vmatmul.mubr.f32.gmra.mxu0 %v769
  %v886 = vpop.f32.mrf.mxu0
  %v887 = vadd.f32 0.0, %v886
  %v888 = vpop.f32.mrf.mxu0
  %889 = vmatprep.mubr.f32.mxu0 0.0
  %890 = vmatmul.mubr.f32.gmra.mxu0 %v772
  %v891 = vpop.f32.mrf.mxu0
  %v892 = vadd.f32 0.0, %v891
  %v893 = vpop.f32.mrf.mxu0
  %894 = vmatprep.mubr.f32.mxu0 0.0
  %895 = vmatmul.mubr.f32.gmra.mxu0 %v775
  %v896 = vpop.f32.mrf.mxu0
  %v897 = vadd.f32 0.0, %v896
  %v898 = vpop.f32.mrf.mxu0
  %899 = vmatprep.mubr.f32.mxu0 0.0
  %900 = vmatmul.mubr.f32.gmra.mxu0 %v778
  %v901 = vpop.f32.mrf.mxu0
  %v902 = vadd.f32 0.0, %v901
  %v903 = vpop.f32.mrf.mxu0
  %904 = vdwg.mxu0
  %s905 = scalar_lea.vmem %s2, 32
  %v906 = vld [vmem:[%s905] sm:$0xff]
  %v907 = vld [vmem:[%s905 + $0x8] sm:$0xff]
  %908 = vmatprep.subr.mxu0 0.0
  %909 = vmatpush1.msra.mxu0 0.0
  %910 = vmatprep.subr.mxu0 0.0
  %911 = vmatpush1.msra.mxu0 0.0
  %912 = vmatprep.subr.mxu0 0.0
  %913 = vmatpush1.msra.mxu0 0.0
  %914 = vmatprep.subr.mxu0 0.0
  %915 = vmatpush1.msra.mxu0 0.0
  %916 = vmatprep.subr.mxu0 0.0
  %917 = vmatpush1.msra.mxu0 0.0
  %918 = vmatprep.subr.mxu0 0.0
  %919 = vmatpush1.msra.mxu0 0.0
  %920 = vmatprep.subr.mxu0 0.0
  %921 = vmatpush1.msra.mxu0 0.0
  %922 = vmatprep.subr.mxu0 0.0
  %923 = vmatpush1.msra.mxu0 0.0
  %924 = vmatprep.subr.mxu0 0.0
  %925 = vmatpush1.msra.mxu0 0.0
  %926 = vmatprep.subr.mxu0 0.0
  %927 = vmatpush1.msra.mxu0 0.0
  %928 = vmatprep.subr.mxu0 0.0
  %929 = vmatpush1.msra.mxu0 0.0
  %930 = vmatprep.subr.mxu0 0.0
  %931 = vmatpush1.msra.mxu0 0.0
  %932 = vmatprep.subr.mxu0 0.0
  %933 = vmatpush1.msra.mxu0 0.0
  %934 = vmatprep.subr.mxu0 0.0
  %935 = vmatpush1.msra.mxu0 0.0
  %936 = vmatprep.subr.mxu0 0.0
  %937 = vmatpush1.msra.mxu0 %v907
  %938 = vmatprep.subr.mxu0 0.0
  %939 = vmatpush1.msra.mxu0 %v906
  %940 = vmatprep.subr.mxu0 0.0
  %941 = vmatpush2.msra.mxu0 0.0
  %942 = vmatprep.subr.mxu0 0.0
  %943 = vmatpush2.msra.mxu0 0.0
  %944 = vmatprep.subr.mxu0 0.0
  %945 = vmatpush2.msra.mxu0 0.0
  %946 = vmatprep.subr.mxu0 0.0
  %947 = vmatpush2.msra.mxu0 0.0
  %948 = vmatprep.subr.mxu0 0.0
  %949 = vmatpush2.msra.mxu0 0.0
  %950 = vmatprep.subr.mxu0 0.0
  %951 = vmatpush2.msra.mxu0 0.0
  %952 = vmatprep.subr.mxu0 0.0
  %953 = vmatpush2.msra.mxu0 0.0
  %954 = vmatprep.subr.mxu0 0.0
  %955 = vmatpush2.msra.mxu0 0.0
  %956 = vmatprep.subr.mxu0 0.0
  %957 = vmatpush2.msra.mxu0 0.0
  %958 = vmatprep.subr.mxu0 0.0
  %959 = vmatpush2.msra.mxu0 0.0
  %960 = vmatprep.subr.mxu0 0.0
  %961 = vmatpush2.msra.mxu0 0.0
  %962 = vmatprep.subr.mxu0 0.0
  %963 = vmatpush2.msra.mxu0 0.0
  %964 = vmatprep.subr.mxu0 0.0
  %965 = vmatpush2.msra.mxu0 0.0
  %966 = vmatprep.subr.mxu0 0.0
  %967 = vmatpush2.msra.mxu0 0.0
  %968 = vmatprep.subr.mxu0 0.0
  %969 = vmatpush2.msra.mxu0 0.0
  %970 = vmatprep.subr.mxu0 0.0
  %971 = vmatpush2.msra.mxu0 0.0
  %972 = vmatprep.mubr.f32.mxu0 0.0
  %973 = vmatmul.mubr.f32.gmra.mxu0 %v745
  %v974 = vpop.f32.mrf.mxu0
  %v975 = vadd.f32 0.0, %v974
  %v976 = vpop.f32.mrf.mxu0
  %977 = vmatprep.mubr.f32.mxu0 0.0
  %978 = vmatmul.mubr.f32.gmra.mxu0 %v748
  %v979 = vpop.f32.mrf.mxu0
  %v980 = vadd.f32 0.0, %v979
  %v981 = vpop.f32.mrf.mxu0
  %982 = vmatprep.mubr.f32.mxu0 0.0
  %983 = vmatmul.mubr.f32.gmra.mxu0 %v751
  %v984 = vpop.f32.mrf.mxu0
  %v985 = vadd.f32 0.0, %v984
  %v986 = vpop.f32.mrf.mxu0
  %987 = vmatprep.mubr.f32.mxu0 0.0
  %988 = vmatmul.mubr.f32.gmra.mxu0 %v754
  %v989 = vpop.f32.mrf.mxu0
  %v990 = vadd.f32 0.0, %v989
  %v991 = vpop.f32.mrf.mxu0
  %992 = vmatprep.mubr.f32.mxu0 0.0
  %993 = vmatmul.mubr.f32.gmra.mxu0 %v757
  %v994 = vpop.f32.mrf.mxu0
  %v995 = vadd.f32 0.0, %v994
  %v996 = vpop.f32.mrf.mxu0
  %997 = vmatprep.mubr.f32.mxu0 0.0
  %998 = vmatmul.mubr.f32.gmra.mxu0 %v760
  %v999 = vpop.f32.mrf.mxu0
  %v1000 = vadd.f32 0.0, %v999
  %v1001 = vpop.f32.mrf.mxu0
  %1002 = vmatprep.mubr.f32.mxu0 0.0
  %1003 = vmatmul.mubr.f32.gmra.mxu0 %v763
  %v1004 = vpop.f32.mrf.mxu0
  %v1005 = vadd.f32 0.0, %v1004
  %v1006 = vpop.f32.mrf.mxu0
  %1007 = vmatprep.mubr.f32.mxu0 0.0
  %1008 = vmatmul.mubr.f32.gmra.mxu0 %v766
  %v1009 = vpop.f32.mrf.mxu0
  %v1010 = vadd.f32 0.0, %v1009
  %v1011 = vpop.f32.mrf.mxu0
  %1012 = vmatprep.mubr.f32.mxu0 0.0
  %1013 = vmatmul.mubr.f32.gmra.mxu0 %v769
  %v1014 = vpop.f32.mrf.mxu0
  %v1015 = vadd.f32 0.0, %v1014
  %v1016 = vpop.f32.mrf.mxu0
  %1017 = vmatprep.mubr.f32.mxu0 0.0
  %1018 = vmatmul.mubr.f32.gmra.mxu0 %v772
  %v1019 = vpop.f32.mrf.mxu0
  %v1020 = vadd.f32 0.0, %v1019
  %v1021 = vpop.f32.mrf.mxu0
  %1022 = vmatprep.mubr.f32.mxu0 0.0
  %1023 = vmatmul.mubr.f32.gmra.mxu0 %v775
  %v1024 = vpop.f32.mrf.mxu0
  %v1025 = vadd.f32 0.0, %v1024
  %v1026 = vpop.f32.mrf.mxu0
  %1027 = vmatprep.mubr.f32.mxu0 0.0
  %1028 = vmatmul.mubr.f32.gmra.mxu0 %v778
  %v1029 = vpop.f32.mrf.mxu0
  %v1030 = vadd.f32 0.0, %v1029
  %v1031 = vpop.f32.mrf.mxu0
  %1032 = vdwg.mxu0
  %v1033 = vadd.f32 %v546, %v847
  %v1034 = vadd.f32 %v551, %v852
  %v1035 = vadd.f32 %v556, %v857
  %v1036 = vadd.f32 %v561, %v862
  %v1037 = vadd.f32 %v566, %v867
  %v1038 = vadd.f32 %v571, %v872
  %v1039 = vadd.f32 %v576, %v877
  %v1040 = vadd.f32 %v581, %v882
  %v1041 = vadd.f32 %v586, %v887
  %v1042 = vadd.f32 %v591, %v892
  %v1043 = vadd.f32 %v596, %v897
  %v1044 = vadd.f32 %v601, %v902
  %v1045 = vadd.f32 %v671, %v975
  %v1046 = vadd.f32 %v676, %v980
  %v1047 = vadd.f32 %v681, %v985
  %v1048 = vadd.f32 %v686, %v990
  %v1049 = vadd.f32 %v691, %v995
  %v1050 = vadd.f32 %v696, %v1000
  %v1051 = vadd.f32 %v701, %v1005
  %v1052 = vadd.f32 %v706, %v1010
  %v1053 = vadd.f32 %v711, %v1015
  %v1054 = vadd.f32 %v716, %v1020
  %v1055 = vadd.f32 %v721, %v1025
  %v1056 = vadd.f32 %v726, %v1030
  %v1057 = vld [vmem:[%s3] sm:$0x1]
  %v1059 = vlaneseq
  %v1060 = vshrl.u32 %v1059, 7
  %v1061 = vsub.s32 0, %v1060
  %v1062 = vrot.slane %v1057, %v1061
  %v1064 = vadd.f32 %v1033, %v1062
  %v1065 = vadd.f32 %v1034, %v1062
  %v1066 = vadd.f32 %v1035, %v1062
  %v1067 = vadd.f32 %v1036, %v1062
  %v1068 = vadd.f32 %v1037, %v1062
  %v1069 = vadd.f32 %v1038, %v1062
  %v1070 = vadd.f32 %v1039, %v1062
  %v1071 = vadd.f32 %v1040, %v1062
  %v1072 = vadd.f32 %v1041, %v1062
  %v1073 = vadd.f32 %v1042, %v1062
  %v1074 = vadd.f32 %v1043, %v1062
  %v1075 = vadd.f32 %v1044, %v1062
  %vm1076 = vcmp.ge.f32.partialorder %v1064, 0.0
  %vm1077 = vcmp.ge.f32.partialorder %v1065, 0.0
  %vm1078 = vcmp.ge.f32.partialorder %v1066, 0.0
  %vm1079 = vcmp.ge.f32.partialorder %v1067, 0.0
  %vm1080 = vcmp.ge.f32.partialorder %v1068, 0.0
  %vm1081 = vcmp.ge.f32.partialorder %v1069, 0.0
  %vm1082 = vcmp.ge.f32.partialorder %v1070, 0.0
  %vm1083 = vcmp.ge.f32.partialorder %v1071, 0.0
  %vm1084 = vcmp.ge.f32.partialorder %v1072, 0.0
  %vm1085 = vcmp.ge.f32.partialorder %v1073, 0.0
  %vm1086 = vcmp.ge.f32.partialorder %v1074, 0.0
  %vm1087 = vcmp.ge.f32.partialorder %v1075, 0.0
  %v1088 = vmul.f32 %v1064, 0.15
  %v1089 = vmul.f32 %v1065, 0.15
  %v1090 = vmul.f32 %v1066, 0.15
  %v1091 = vmul.f32 %v1067, 0.15
  %v1092 = vmul.f32 %v1068, 0.15
  %v1093 = vmul.f32 %v1069, 0.15
  %v1094 = vmul.f32 %v1070, 0.15
  %v1095 = vmul.f32 %v1071, 0.15
  %v1096 = vmul.f32 %v1072, 0.15
  %v1097 = vmul.f32 %v1073, 0.15
  %v1098 = vmul.f32 %v1074, 0.15
  %v1099 = vmul.f32 %v1075, 0.15
  %v1100 = vsel %vm1076, %v1064, %v1088
  %v1101 = vsel %vm1077, %v1065, %v1089
  %v1102 = vsel %vm1078, %v1066, %v1090
  %v1103 = vsel %vm1079, %v1067, %v1091
  %v1104 = vsel %vm1080, %v1068, %v1092
  %v1105 = vsel %vm1081, %v1069, %v1093
  %v1106 = vsel %vm1082, %v1070, %v1094
  %v1107 = vsel %vm1083, %v1071, %v1095
  %v1108 = vsel %vm1084, %v1072, %v1096
  %v1109 = vsel %vm1085, %v1073, %v1097
  %v1110 = vsel %vm1086, %v1074, %v1098
  %v1111 = vsel %vm1087, %v1075, %v1099
  %v1112 = vadd.f32 %v1045, %v1062
  %v1113 = vadd.f32 %v1046, %v1062
  %v1114 = vadd.f32 %v1047, %v1062
  %v1115 = vadd.f32 %v1048, %v1062
  %v1116 = vadd.f32 %v1049, %v1062
  %v1117 = vadd.f32 %v1050, %v1062
  %v1118 = vadd.f32 %v1051, %v1062
  %v1119 = vadd.f32 %v1052, %v1062
  %v1120 = vadd.f32 %v1053, %v1062
  %v1121 = vadd.f32 %v1054, %v1062
  %v1122 = vadd.f32 %v1055, %v1062
  %v1123 = vadd.f32 %v1056, %v1062
  %vm1124 = vcmp.ge.f32.partialorder %v1112, 0.0
  %vm1125 = vcmp.ge.f32.partialorder %v1113, 0.0
  %vm1126 = vcmp.ge.f32.partialorder %v1114, 0.0
  %vm1127 = vcmp.ge.f32.partialorder %v1115, 0.0
  %vm1128 = vcmp.ge.f32.partialorder %v1116, 0.0
  %vm1129 = vcmp.ge.f32.partialorder %v1117, 0.0
  %vm1130 = vcmp.ge.f32.partialorder %v1118, 0.0
  %vm1131 = vcmp.ge.f32.partialorder %v1119, 0.0
  %vm1132 = vcmp.ge.f32.partialorder %v1120, 0.0
  %vm1133 = vcmp.ge.f32.partialorder %v1121, 0.0
  %vm1134 = vcmp.ge.f32.partialorder %v1122, 0.0
  %vm1135 = vcmp.ge.f32.partialorder %v1123, 0.0
  %v1136 = vmul.f32 %v1112, 0.15
  %v1137 = vmul.f32 %v1113, 0.15
  %v1138 = vmul.f32 %v1114, 0.15
  %v1139 = vmul.f32 %v1115, 0.15
  %v1140 = vmul.f32 %v1116, 0.15
  %v1141 = vmul.f32 %v1117, 0.15
  %v1142 = vmul.f32 %v1118, 0.15
  %v1143 = vmul.f32 %v1119, 0.15
  %v1144 = vmul.f32 %v1120, 0.15
  %v1145 = vmul.f32 %v1121, 0.15
  %v1146 = vmul.f32 %v1122, 0.15
  %v1147 = vmul.f32 %v1123, 0.15
  %v1148 = vsel %vm1124, %v1112, %v1136
  %v1149 = vsel %vm1125, %v1113, %v1137
  %v1150 = vsel %vm1126, %v1114, %v1138
  %v1151 = vsel %vm1127, %v1115, %v1139
  %v1152 = vsel %vm1128, %v1116, %v1140
  %v1153 = vsel %vm1129, %v1117, %v1141
  %v1154 = vsel %vm1130, %v1118, %v1142
  %v1155 = vsel %vm1131, %v1119, %v1143
  %v1156 = vsel %vm1132, %v1120, %v1144
  %v1157 = vsel %vm1133, %v1121, %v1145
  %v1158 = vsel %vm1134, %v1122, %v1146
  %v1159 = vsel %vm1135, %v1123, %v1147
  %v1160 = vmax.f32 %v1100, %v1148
  %v1161 = vmax.f32 %v1101, %v1149
  %v1162 = vmax.f32 %v1102, %v1150
  %v1163 = vmax.f32 %v1103, %v1151
  %v1164 = vmax.f32 %v1104, %v1152
  %v1165 = vmax.f32 %v1105, %v1153
  %v1166 = vmax.f32 %v1106, %v1154
  %v1167 = vmax.f32 %v1107, %v1155
  %v1168 = vmax.f32 %v1108, %v1156
  %v1169 = vmax.f32 %v1109, %v1157
  %v1170 = vmax.f32 %v1110, %v1158
  %v1171 = vmax.f32 %v1111, %v1159
  %1172 = vst.msk [vmem:[#allocation7] sm:$0xff] %vm86, %v1160
  %1173 = vst.msk [vmem:[#allocation7 + $0x8] sm:$0xff] %vm86, %v1161
  %1174 = vst.msk [vmem:[#allocation7 + $0x10] sm:$0xff] %vm86, %v1162
  %1175 = vst.msk [vmem:[#allocation7 + $0x18] sm:$0xff] %vm86, %v1163
  %1176 = vst.msk [vmem:[#allocation7 + $0x20] sm:$0xff] %vm86, %v1164
  %1177 = vst.msk [vmem:[#allocation7 + $0x28] sm:$0xff] %vm86, %v1165
  %1178 = vst.msk [vmem:[#allocation7 + $0x30] sm:$0xff] %vm86, %v1166
  %1179 = vst.msk [vmem:[#allocation7 + $0x38] sm:$0xff] %vm86, %v1167
  %1180 = vst.msk [vmem:[#allocation7 + $0x40] sm:$0xff] %vm86, %v1168
  %1181 = vst.msk [vmem:[#allocation7 + $0x48] sm:$0xff] %vm86, %v1169
  %1182 = vst.msk [vmem:[#allocation7 + $0x50] sm:$0xff] %vm86, %v1170
  %vm1183 = vcmask 521216
  %1184 = vst.msk [vmem:[#allocation7 + $0x58] sm:$0x3f] %vm1183, %v1171
  %v1185 = vld [vmem:[#allocation7] ss:$2 sm:$0xff]
  %s1186 = scalar_lea.vmem [#allocation7], 1
  %v1187 = vld [vmem:[%s1186] ss:$2 sm:$0xff]
  %v1188 = vmax.f32 %v1185, %v1187
  %1189 = vst.msk [vmem:[#allocation3 + $0x1] sm:$0xff] %vm86, %v1188
  %s1190 = scalar_lea.vmem [#allocation7], 24
  %v1191 = vld [vmem:[%s1190] ss:$2 sm:$0xff]
  %s1192 = scalar_lea.vmem [#allocation7], 25
  %v1193 = vld [vmem:[%s1192] ss:$2 sm:$0xff]
  %v1194 = vmax.f32 %v1191, %v1193
  %1195 = vst.msk [vmem:[#allocation3 + $0x11] sm:$0xff] %vm86, %v1194
  %s1196 = scalar_lea.vmem [#allocation7], 48
  %v1197 = vld [vmem:[%s1196] ss:$2 sm:$0xff]
  %s1198 = scalar_lea.vmem [#allocation7], 49
  %v1199 = vld [vmem:[%s1198] ss:$2 sm:$0xff]
  %v1200 = vmax.f32 %v1197, %v1199
  %1201 = vst.msk [vmem:[#allocation3 + $0x21] sm:$0xff] %vm86, %v1200
  %s1202 = scalar_lea.vmem [#allocation7], 72
  %v1203 = vld [vmem:[%s1202] ss:$2 sm:$0xff]
  %s1204 = scalar_lea.vmem [#allocation7], 73
  %v1205 = vld [vmem:[%s1204] ss:$2 sm:$0xff]
  %v1206 = vmax.f32 %v1203, %v1205
  %1207 = vst.msk [vmem:[#allocation3 + $0x31] sm:$0xff] %vm86, %v1206
  %v1208 = vld [vmem:[#allocation3] sm:$0xff]
  %v1209 = vld [vmem:[#allocation3 + $0x8] sm:$0xff]
  %v1210 = vld [vmem:[#allocation3 + $0x10] sm:$0xff]
  %v1211 = vld [vmem:[#allocation3 + $0x18] sm:$0xff]
  %v1212 = vld [vmem:[#allocation3 + $0x20] sm:$0xff]
  %v1213 = vld [vmem:[#allocation3 + $0x28] sm:$0xff]
  %v1214 = vld [vmem:[#allocation3 + $0x30] sm:$0xff]
  %v1215 = vld [vmem:[#allocation3 + $0x38] sm:$0x3f]
  %v1216 = vld [vmem:[%s4] sm:$0xff]
  %v1217 = vld [vmem:[%s4 + $0x8] sm:$0xff]
  %v1218 = vld [vmem:[%s4 + $0x10] sm:$0xff]
  %v1219 = vld [vmem:[%s4 + $0x18] sm:$0xff]
  %v1220 = vld [vmem:[%s4 + $0x20] sm:$0xff]
  %v1221 = vld [vmem:[%s4 + $0x28] sm:$0xff]
  %v1222 = vld [vmem:[%s4 + $0x30] sm:$0xff]
  %v1223 = vld [vmem:[%s4 + $0x38] sm:$0xff]
  %v1224 = vld [vmem:[%s5] sm:$0xff]
  %v1225 = vld [vmem:[%s5 + $0x8] sm:$0xff]
  %v1226 = vld [vmem:[%s5 + $0x10] sm:$0xff]
  %v1227 = vld [vmem:[%s5 + $0x18] sm:$0xff]
  %v1228 = vld [vmem:[%s5 + $0x20] sm:$0xff]
  %v1229 = vld [vmem:[%s5 + $0x28] sm:$0xff]
  %v1230 = vld [vmem:[%s5 + $0x30] sm:$0xff]
  %v1231 = vld [vmem:[%s5 + $0x38] sm:$0xff]
  %v1232 = vld [vmem:[#allocation3 + $0x1] sm:$0xff]
  %v1233 = vld [vmem:[#allocation3 + $0x9] sm:$0xff]
  %v1234 = vld [vmem:[#allocation3 + $0x11] sm:$0xff]
  %v1235 = vld [vmem:[#allocation3 + $0x19] sm:$0xff]
  %v1236 = vld [vmem:[#allocation3 + $0x21] sm:$0xff]
  %v1237 = vld [vmem:[#allocation3 + $0x29] sm:$0xff]
  %v1238 = vld [vmem:[#allocation3 + $0x31] sm:$0xff]
  %v1239 = vld [vmem:[#allocation3 + $0x39] sm:$0x3f]
  %s1240 = scalar_lea.vmem %s4, 64
  %v1241 = vld [vmem:[%s1240] sm:$0xff]
  %v1242 = vld [vmem:[%s1240 + $0x8] sm:$0xff]
  %v1243 = vld [vmem:[%s1240 + $0x10] sm:$0xff]
  %v1244 = vld [vmem:[%s1240 + $0x18] sm:$0xff]
  %v1245 = vld [vmem:[%s1240 + $0x20] sm:$0xff]
  %v1246 = vld [vmem:[%s1240 + $0x28] sm:$0xff]
  %v1247 = vld [vmem:[%s1240 + $0x30] sm:$0xff]
  %v1248 = vld [vmem:[%s1240 + $0x38] sm:$0xff]
  %v1250 = vsel %vm86, %v1232, 0
  %v1253 = vsel %vm86, %v1233, 0
  %v1256 = vsel %vm86, %v1234, 0
  %v1259 = vsel %vm86, %v1235, 0
  %v1262 = vsel %vm86, %v1236, 0
  %v1265 = vsel %vm86, %v1237, 0
  %v1268 = vsel %vm86, %v1238, 0
  %v1271 = vsel %vm86, %v1239, 0
  %1273 = vmatprep.subr.mxu0 0.0
  %1274 = vmatpush1.msra.mxu0 0.0
  %1275 = vmatprep.subr.mxu0 0.0
  %1276 = vmatpush1.msra.mxu0 0.0
  %1277 = vmatprep.subr.mxu0 0.0
  %1278 = vmatpush1.msra.mxu0 0.0
  %1279 = vmatprep.subr.mxu0 0.0
  %1280 = vmatpush1.msra.mxu0 0.0
  %1281 = vmatprep.subr.mxu0 0.0
  %1282 = vmatpush1.msra.mxu0 0.0
  %1283 = vmatprep.subr.mxu0 0.0
  %1284 = vmatpush1.msra.mxu0 0.0
  %1285 = vmatprep.subr.mxu0 0.0
  %1286 = vmatpush1.msra.mxu0 0.0
  %1287 = vmatprep.subr.mxu0 0.0
  %1288 = vmatpush1.msra.mxu0 0.0
  %1289 = vmatprep.subr.mxu0 0.0
  %1290 = vmatpush1.msra.mxu0 %v1248
  %1291 = vmatprep.subr.mxu0 0.0
  %1292 = vmatpush1.msra.mxu0 %v1247
  %1293 = vmatprep.subr.mxu0 0.0
  %1294 = vmatpush1.msra.mxu0 %v1246
  %1295 = vmatprep.subr.mxu0 0.0
  %1296 = vmatpush1.msra.mxu0 %v1245
  %1297 = vmatprep.subr.mxu0 0.0
  %1298 = vmatpush1.msra.mxu0 %v1244
  %1299 = vmatprep.subr.mxu0 0.0
  %1300 = vmatpush1.msra.mxu0 %v1243
  %1301 = vmatprep.subr.mxu0 0.0
  %1302 = vmatpush1.msra.mxu0 %v1242
  %1303 = vmatprep.subr.mxu0 0.0
  %1304 = vmatpush1.msra.mxu0 %v1241
  %1305 = vmatprep.subr.mxu0 0.0
  %1306 = vmatpush2.msra.mxu0 0.0
  %1307 = vmatprep.subr.mxu0 0.0
  %1308 = vmatpush2.msra.mxu0 0.0
  %1309 = vmatprep.subr.mxu0 0.0
  %1310 = vmatpush2.msra.mxu0 0.0
  %1311 = vmatprep.subr.mxu0 0.0
  %1312 = vmatpush2.msra.mxu0 0.0
  %1313 = vmatprep.subr.mxu0 0.0
  %1314 = vmatpush2.msra.mxu0 0.0
  %1315 = vmatprep.subr.mxu0 0.0
  %1316 = vmatpush2.msra.mxu0 0.0
  %1317 = vmatprep.subr.mxu0 0.0
  %1318 = vmatpush2.msra.mxu0 0.0
  %1319 = vmatprep.subr.mxu0 0.0
  %1320 = vmatpush2.msra.mxu0 0.0
  %1321 = vmatprep.subr.mxu0 0.0
  %1322 = vmatpush2.msra.mxu0 0.0
  %1323 = vmatprep.subr.mxu0 0.0
  %1324 = vmatpush2.msra.mxu0 0.0
  %1325 = vmatprep.subr.mxu0 0.0
  %1326 = vmatpush2.msra.mxu0 0.0
  %1327 = vmatprep.subr.mxu0 0.0
  %1328 = vmatpush2.msra.mxu0 0.0
  %1329 = vmatprep.subr.mxu0 0.0
  %1330 = vmatpush2.msra.mxu0 0.0
  %1331 = vmatprep.subr.mxu0 0.0
  %1332 = vmatpush2.msra.mxu0 0.0
  %1333 = vmatprep.subr.mxu0 0.0
  %1334 = vmatpush2.msra.mxu0 0.0
  %1335 = vmatprep.subr.mxu0 0.0
  %1336 = vmatpush2.msra.mxu0 0.0
  %1337 = vmatprep.mubr.f32.mxu0 0.0
  %1338 = vmatmul.mubr.f32.gmra.mxu0 %v1250
  %v1339 = vpop.f32.mrf.mxu0
  %v1340 = vadd.f32 0.0, %v1339
  %v1341 = vpop.f32.mrf.mxu0
  %1342 = vmatprep.mubr.f32.mxu0 0.0
  %1343 = vmatmul.mubr.f32.gmra.mxu0 %v1253
  %v1344 = vpop.f32.mrf.mxu0
  %v1345 = vadd.f32 0.0, %v1344
  %v1346 = vpop.f32.mrf.mxu0
  %1347 = vmatprep.mubr.f32.mxu0 0.0
  %1348 = vmatmul.mubr.f32.gmra.mxu0 %v1256
  %v1349 = vpop.f32.mrf.mxu0
  %v1350 = vadd.f32 0.0, %v1349
  %v1351 = vpop.f32.mrf.mxu0
  %1352 = vmatprep.mubr.f32.mxu0 0.0
  %1353 = vmatmul.mubr.f32.gmra.mxu0 %v1259
  %v1354 = vpop.f32.mrf.mxu0
  %v1355 = vadd.f32 0.0, %v1354
  %v1356 = vpop.f32.mrf.mxu0
  %1357 = vmatprep.mubr.f32.mxu0 0.0
  %1358 = vmatmul.mubr.f32.gmra.mxu0 %v1262
  %v1359 = vpop.f32.mrf.mxu0
  %v1360 = vadd.f32 0.0, %v1359
  %v1361 = vpop.f32.mrf.mxu0
  %1362 = vmatprep.mubr.f32.mxu0 0.0
  %1363 = vmatmul.mubr.f32.gmra.mxu0 %v1265
  %v1364 = vpop.f32.mrf.mxu0
  %v1365 = vadd.f32 0.0, %v1364
  %v1366 = vpop.f32.mrf.mxu0
  %1367 = vmatprep.mubr.f32.mxu0 0.0
  %1368 = vmatmul.mubr.f32.gmra.mxu0 %v1268
  %v1369 = vpop.f32.mrf.mxu0
  %v1370 = vadd.f32 0.0, %v1369
  %v1371 = vpop.f32.mrf.mxu0
  %1372 = vmatprep.mubr.f32.mxu0 0.0
  %1373 = vmatmul.mubr.f32.gmra.mxu0 %v1271
  %v1374 = vpop.f32.mrf.mxu0
  %v1375 = vadd.f32 0.0, %v1374
  %v1376 = vpop.f32.mrf.mxu0
  %1377 = vdwg.mxu0
  %s1378 = scalar_lea.vmem %s5, 64
  %v1379 = vld [vmem:[%s1378] sm:$0xff]
  %v1380 = vld [vmem:[%s1378 + $0x8] sm:$0xff]
  %v1381 = vld [vmem:[%s1378 + $0x10] sm:$0xff]
  %v1382 = vld [vmem:[%s1378 + $0x18] sm:$0xff]
  %v1383 = vld [vmem:[%s1378 + $0x20] sm:$0xff]
  %v1384 = vld [vmem:[%s1378 + $0x28] sm:$0xff]
  %v1385 = vld [vmem:[%s1378 + $0x30] sm:$0xff]
  %v1386 = vld [vmem:[%s1378 + $0x38] sm:$0xff]
  %1387 = vmatprep.subr.mxu0 0.0
  %1388 = vmatpush1.msra.mxu0 0.0
  %1389 = vmatprep.subr.mxu0 0.0
  %1390 = vmatpush1.msra.mxu0 0.0
  %1391 = vmatprep.subr.mxu0 0.0
  %1392 = vmatpush1.msra.mxu0 0.0
  %1393 = vmatprep.subr.mxu0 0.0
  %1394 = vmatpush1.msra.mxu0 0.0
  %1395 = vmatprep.subr.mxu0 0.0
  %1396 = vmatpush1.msra.mxu0 0.0
  %1397 = vmatprep.subr.mxu0 0.0
  %1398 = vmatpush1.msra.mxu0 0.0
  %1399 = vmatprep.subr.mxu0 0.0
  %1400 = vmatpush1.msra.mxu0 0.0
  %1401 = vmatprep.subr.mxu0 0.0
  %1402 = vmatpush1.msra.mxu0 0.0
  %1403 = vmatprep.subr.mxu0 0.0
  %1404 = vmatpush1.msra.mxu0 %v1386
  %1405 = vmatprep.subr.mxu0 0.0
  %1406 = vmatpush1.msra.mxu0 %v1385
  %1407 = vmatprep.subr.mxu0 0.0
  %1408 = vmatpush1.msra.mxu0 %v1384
  %1409 = vmatprep.subr.mxu0 0.0
  %1410 = vmatpush1.msra.mxu0 %v1383
  %1411 = vmatprep.subr.mxu0 0.0
  %1412 = vmatpush1.msra.mxu0 %v1382
  %1413 = vmatprep.subr.mxu0 0.0
  %1414 = vmatpush1.msra.mxu0 %v1381
  %1415 = vmatprep.subr.mxu0 0.0
  %1416 = vmatpush1.msra.mxu0 %v1380
  %1417 = vmatprep.subr.mxu0 0.0
  %1418 = vmatpush1.msra.mxu0 %v1379
  %1419 = vmatprep.subr.mxu0 0.0
  %1420 = vmatpush2.msra.mxu0 0.0
  %1421 = vmatprep.subr.mxu0 0.0
  %1422 = vmatpush2.msra.mxu0 0.0
  %1423 = vmatprep.subr.mxu0 0.0
  %1424 = vmatpush2.msra.mxu0 0.0
  %1425 = vmatprep.subr.mxu0 0.0
  %1426 = vmatpush2.msra.mxu0 0.0
  %1427 = vmatprep.subr.mxu0 0.0
  %1428 = vmatpush2.msra.mxu0 0.0
  %1429 = vmatprep.subr.mxu0 0.0
  %1430 = vmatpush2.msra.mxu0 0.0
  %1431 = vmatprep.subr.mxu0 0.0
  %1432 = vmatpush2.msra.mxu0 0.0
  %1433 = vmatprep.subr.mxu0 0.0
  %1434 = vmatpush2.msra.mxu0 0.0
  %1435 = vmatprep.subr.mxu0 0.0
  %1436 = vmatpush2.msra.mxu0 0.0
  %1437 = vmatprep.subr.mxu0 0.0
  %1438 = vmatpush2.msra.mxu0 0.0
  %1439 = vmatprep.subr.mxu0 0.0
  %1440 = vmatpush2.msra.mxu0 0.0
  %1441 = vmatprep.subr.mxu0 0.0
  %1442 = vmatpush2.msra.mxu0 0.0
  %1443 = vmatprep.subr.mxu0 0.0
  %1444 = vmatpush2.msra.mxu0 0.0
  %1445 = vmatprep.subr.mxu0 0.0
  %1446 = vmatpush2.msra.mxu0 0.0
  %1447 = vmatprep.subr.mxu0 0.0
  %1448 = vmatpush2.msra.mxu0 0.0
  %1449 = vmatprep.subr.mxu0 0.0
  %1450 = vmatpush2.msra.mxu0 0.0
  %1451 = vmatprep.mubr.f32.mxu0 0.0
  %1452 = vmatmul.mubr.f32.gmra.mxu0 %v1250
  %v1453 = vpop.f32.mrf.mxu0
  %v1454 = vadd.f32 0.0, %v1453
  %v1455 = vpop.f32.mrf.mxu0
  %1456 = vmatprep.mubr.f32.mxu0 0.0
  %1457 = vmatmul.mubr.f32.gmra.mxu0 %v1253
  %v1458 = vpop.f32.mrf.mxu0
  %v1459 = vadd.f32 0.0, %v1458
  %v1460 = vpop.f32.mrf.mxu0
  %1461 = vmatprep.mubr.f32.mxu0 0.0
  %1462 = vmatmul.mubr.f32.gmra.mxu0 %v1256
  %v1463 = vpop.f32.mrf.mxu0
  %v1464 = vadd.f32 0.0, %v1463
  %v1465 = vpop.f32.mrf.mxu0
  %1466 = vmatprep.mubr.f32.mxu0 0.0
  %1467 = vmatmul.mubr.f32.gmra.mxu0 %v1259
  %v1468 = vpop.f32.mrf.mxu0
  %v1469 = vadd.f32 0.0, %v1468
  %v1470 = vpop.f32.mrf.mxu0
  %1471 = vmatprep.mubr.f32.mxu0 0.0
  %1472 = vmatmul.mubr.f32.gmra.mxu0 %v1262
  %v1473 = vpop.f32.mrf.mxu0
  %v1474 = vadd.f32 0.0, %v1473
  %v1475 = vpop.f32.mrf.mxu0
  %1476 = vmatprep.mubr.f32.mxu0 0.0
  %1477 = vmatmul.mubr.f32.gmra.mxu0 %v1265
  %v1478 = vpop.f32.mrf.mxu0
  %v1479 = vadd.f32 0.0, %v1478
  %v1480 = vpop.f32.mrf.mxu0
  %1481 = vmatprep.mubr.f32.mxu0 0.0
  %1482 = vmatmul.mubr.f32.gmra.mxu0 %v1268
  %v1483 = vpop.f32.mrf.mxu0
  %v1484 = vadd.f32 0.0, %v1483
  %v1485 = vpop.f32.mrf.mxu0
  %1486 = vmatprep.mubr.f32.mxu0 0.0
  %1487 = vmatmul.mubr.f32.gmra.mxu0 %v1271
  %v1488 = vpop.f32.mrf.mxu0
  %v1489 = vadd.f32 0.0, %v1488
  %v1490 = vpop.f32.mrf.mxu0
  %1491 = vdwg.mxu0
  %v1493 = vsel %vm86, %v1208, 0
  %v1496 = vsel %vm86, %v1209, 0
  %v1499 = vsel %vm86, %v1210, 0
  %v1502 = vsel %vm86, %v1211, 0
  %v1505 = vsel %vm86, %v1212, 0
  %v1508 = vsel %vm86, %v1213, 0
  %v1511 = vsel %vm86, %v1214, 0
  %v1514 = vsel %vm86, %v1215, 0
  %1516 = vmatprep.subr.mxu0 0.0
  %1517 = vmatpush1.msra.mxu0 0.0
  %1518 = vmatprep.subr.mxu0 0.0
  %1519 = vmatpush1.msra.mxu0 0.0
  %1520 = vmatprep.subr.mxu0 0.0
  %1521 = vmatpush1.msra.mxu0 0.0
  %1522 = vmatprep.subr.mxu0 0.0
  %1523 = vmatpush1.msra.mxu0 0.0
  %1524 = vmatprep.subr.mxu0 0.0
  %1525 = vmatpush1.msra.mxu0 0.0
  %1526 = vmatprep.subr.mxu0 0.0
  %1527 = vmatpush1.msra.mxu0 0.0
  %1528 = vmatprep.subr.mxu0 0.0
  %1529 = vmatpush1.msra.mxu0 0.0
  %1530 = vmatprep.subr.mxu0 0.0
  %1531 = vmatpush1.msra.mxu0 0.0
  %1532 = vmatprep.subr.mxu0 0.0
  %1533 = vmatpush1.msra.mxu0 %v1223
  %1534 = vmatprep.subr.mxu0 0.0
  %1535 = vmatpush1.msra.mxu0 %v1222
  %1536 = vmatprep.subr.mxu0 0.0
  %1537 = vmatpush1.msra.mxu0 %v1221
  %1538 = vmatprep.subr.mxu0 0.0
  %1539 = vmatpush1.msra.mxu0 %v1220
  %1540 = vmatprep.subr.mxu0 0.0
  %1541 = vmatpush1.msra.mxu0 %v1219
  %1542 = vmatprep.subr.mxu0 0.0
  %1543 = vmatpush1.msra.mxu0 %v1218
  %1544 = vmatprep.subr.mxu0 0.0
  %1545 = vmatpush1.msra.mxu0 %v1217
  %1546 = vmatprep.subr.mxu0 0.0
  %1547 = vmatpush1.msra.mxu0 %v1216
  %1548 = vmatprep.subr.mxu0 0.0
  %1549 = vmatpush2.msra.mxu0 0.0
  %1550 = vmatprep.subr.mxu0 0.0
  %1551 = vmatpush2.msra.mxu0 0.0
  %1552 = vmatprep.subr.mxu0 0.0
  %1553 = vmatpush2.msra.mxu0 0.0
  %1554 = vmatprep.subr.mxu0 0.0
  %1555 = vmatpush2.msra.mxu0 0.0
  %1556 = vmatprep.subr.mxu0 0.0
  %1557 = vmatpush2.msra.mxu0 0.0
  %1558 = vmatprep.subr.mxu0 0.0
  %1559 = vmatpush2.msra.mxu0 0.0
  %1560 = vmatprep.subr.mxu0 0.0
  %1561 = vmatpush2.msra.mxu0 0.0
  %1562 = vmatprep.subr.mxu0 0.0
  %1563 = vmatpush2.msra.mxu0 0.0
  %1564 = vmatprep.subr.mxu0 0.0
  %1565 = vmatpush2.msra.mxu0 0.0
  %1566 = vmatprep.subr.mxu0 0.0
  %1567 = vmatpush2.msra.mxu0 0.0
  %1568 = vmatprep.subr.mxu0 0.0
  %1569 = vmatpush2.msra.mxu0 0.0
  %1570 = vmatprep.subr.mxu0 0.0
  %1571 = vmatpush2.msra.mxu0 0.0
  %1572 = vmatprep.subr.mxu0 0.0
  %1573 = vmatpush2.msra.mxu0 0.0
  %1574 = vmatprep.subr.mxu0 0.0
  %1575 = vmatpush2.msra.mxu0 0.0
  %1576 = vmatprep.subr.mxu0 0.0
  %1577 = vmatpush2.msra.mxu0 0.0
  %1578 = vmatprep.subr.mxu0 0.0
  %1579 = vmatpush2.msra.mxu0 0.0
  %1580 = vmatprep.mubr.f32.mxu0 0.0
  %1581 = vmatmul.mubr.f32.gmra.mxu0 %v1493
  %v1582 = vpop.f32.mrf.mxu0
  %v1583 = vadd.f32 %v1340, %v1582
  %v1584 = vpop.f32.mrf.mxu0
  %1585 = vmatprep.mubr.f32.mxu0 0.0
  %1586 = vmatmul.mubr.f32.gmra.mxu0 %v1496
  %v1587 = vpop.f32.mrf.mxu0
  %v1588 = vadd.f32 %v1345, %v1587
  %v1589 = vpop.f32.mrf.mxu0
  %1590 = vmatprep.mubr.f32.mxu0 0.0
  %1591 = vmatmul.mubr.f32.gmra.mxu0 %v1499
  %v1592 = vpop.f32.mrf.mxu0
  %v1593 = vadd.f32 %v1350, %v1592
  %v1594 = vpop.f32.mrf.mxu0
  %1595 = vmatprep.mubr.f32.mxu0 0.0
  %1596 = vmatmul.mubr.f32.gmra.mxu0 %v1502
  %v1597 = vpop.f32.mrf.mxu0
  %v1598 = vadd.f32 %v1355, %v1597
  %v1599 = vpop.f32.mrf.mxu0
  %1600 = vmatprep.mubr.f32.mxu0 0.0
  %1601 = vmatmul.mubr.f32.gmra.mxu0 %v1505
  %v1602 = vpop.f32.mrf.mxu0
  %v1603 = vadd.f32 %v1360, %v1602
  %v1604 = vpop.f32.mrf.mxu0
  %1605 = vmatprep.mubr.f32.mxu0 0.0
  %1606 = vmatmul.mubr.f32.gmra.mxu0 %v1508
  %v1607 = vpop.f32.mrf.mxu0
  %v1608 = vadd.f32 %v1365, %v1607
  %v1609 = vpop.f32.mrf.mxu0
  %1610 = vmatprep.mubr.f32.mxu0 0.0
  %1611 = vmatmul.mubr.f32.gmra.mxu0 %v1511
  %v1612 = vpop.f32.mrf.mxu0
  %v1613 = vadd.f32 %v1370, %v1612
  %v1614 = vpop.f32.mrf.mxu0
  %1615 = vmatprep.mubr.f32.mxu0 0.0
  %1616 = vmatmul.mubr.f32.gmra.mxu0 %v1514
  %v1617 = vpop.f32.mrf.mxu0
  %v1618 = vadd.f32 %v1375, %v1617
  %v1619 = vpop.f32.mrf.mxu0
  %1620 = vdwg.mxu0
  %1621 = vmatprep.subr.mxu0 0.0
  %1622 = vmatpush1.msra.mxu0 0.0
  %1623 = vmatprep.subr.mxu0 0.0
  %1624 = vmatpush1.msra.mxu0 0.0
  %1625 = vmatprep.subr.mxu0 0.0
  %1626 = vmatpush1.msra.mxu0 0.0
  %1627 = vmatprep.subr.mxu0 0.0
  %1628 = vmatpush1.msra.mxu0 0.0
  %1629 = vmatprep.subr.mxu0 0.0
  %1630 = vmatpush1.msra.mxu0 0.0
  %1631 = vmatprep.subr.mxu0 0.0
  %1632 = vmatpush1.msra.mxu0 0.0
  %1633 = vmatprep.subr.mxu0 0.0
  %1634 = vmatpush1.msra.mxu0 0.0
  %1635 = vmatprep.subr.mxu0 0.0
  %1636 = vmatpush1.msra.mxu0 0.0
  %1637 = vmatprep.subr.mxu0 0.0
  %1638 = vmatpush1.msra.mxu0 %v1231
  %1639 = vmatprep.subr.mxu0 0.0
  %1640 = vmatpush1.msra.mxu0 %v1230
  %1641 = vmatprep.subr.mxu0 0.0
  %1642 = vmatpush1.msra.mxu0 %v1229
  %1643 = vmatprep.subr.mxu0 0.0
  %1644 = vmatpush1.msra.mxu0 %v1228
  %1645 = vmatprep.subr.mxu0 0.0
  %1646 = vmatpush1.msra.mxu0 %v1227
  %1647 = vmatprep.subr.mxu0 0.0
  %1648 = vmatpush1.msra.mxu0 %v1226
  %1649 = vmatprep.subr.mxu0 0.0
  %1650 = vmatpush1.msra.mxu0 %v1225
  %1651 = vmatprep.subr.mxu0 0.0
  %1652 = vmatpush1.msra.mxu0 %v1224
  %1653 = vmatprep.subr.mxu0 0.0
  %1654 = vmatpush2.msra.mxu0 0.0
  %1655 = vmatprep.subr.mxu0 0.0
  %1656 = vmatpush2.msra.mxu0 0.0
  %1657 = vmatprep.subr.mxu0 0.0
  %1658 = vmatpush2.msra.mxu0 0.0
  %1659 = vmatprep.subr.mxu0 0.0
  %1660 = vmatpush2.msra.mxu0 0.0
  %1661 = vmatprep.subr.mxu0 0.0
  %1662 = vmatpush2.msra.mxu0 0.0
  %1663 = vmatprep.subr.mxu0 0.0
  %1664 = vmatpush2.msra.mxu0 0.0
  %1665 = vmatprep.subr.mxu0 0.0
  %1666 = vmatpush2.msra.mxu0 0.0
  %1667 = vmatprep.subr.mxu0 0.0
  %1668 = vmatpush2.msra.mxu0 0.0
  %1669 = vmatprep.subr.mxu0 0.0
  %1670 = vmatpush2.msra.mxu0 0.0
  %1671 = vmatprep.subr.mxu0 0.0
  %1672 = vmatpush2.msra.mxu0 0.0
  %1673 = vmatprep.subr.mxu0 0.0
  %1674 = vmatpush2.msra.mxu0 0.0
  %1675 = vmatprep.subr.mxu0 0.0
  %1676 = vmatpush2.msra.mxu0 0.0
  %1677 = vmatprep.subr.mxu0 0.0
  %1678 = vmatpush2.msra.mxu0 0.0
  %1679 = vmatprep.subr.mxu0 0.0
  %1680 = vmatpush2.msra.mxu0 0.0
  %1681 = vmatprep.subr.mxu0 0.0
  %1682 = vmatpush2.msra.mxu0 0.0
  %1683 = vmatprep.subr.mxu0 0.0
  %1684 = vmatpush2.msra.mxu0 0.0
  %1685 = vmatprep.mubr.f32.mxu0 0.0
  %1686 = vmatmul.mubr.f32.gmra.mxu0 %v1493
  %v1687 = vpop.f32.mrf.mxu0
  %v1688 = vadd.f32 %v1454, %v1687
  %v1689 = vpop.f32.mrf.mxu0
  %1690 = vmatprep.mubr.f32.mxu0 0.0
  %1691 = vmatmul.mubr.f32.gmra.mxu0 %v1496
  %v1692 = vpop.f32.mrf.mxu0
  %v1693 = vadd.f32 %v1459, %v1692
  %v1694 = vpop.f32.mrf.mxu0
  %1695 = vmatprep.mubr.f32.mxu0 0.0
  %1696 = vmatmul.mubr.f32.gmra.mxu0 %v1499
  %v1697 = vpop.f32.mrf.mxu0
  %v1698 = vadd.f32 %v1464, %v1697
  %v1699 = vpop.f32.mrf.mxu0
  %1700 = vmatprep.mubr.f32.mxu0 0.0
  %1701 = vmatmul.mubr.f32.gmra.mxu0 %v1502
  %v1702 = vpop.f32.mrf.mxu0
  %v1703 = vadd.f32 %v1469, %v1702
  %v1704 = vpop.f32.mrf.mxu0
  %1705 = vmatprep.mubr.f32.mxu0 0.0
  %1706 = vmatmul.mubr.f32.gmra.mxu0 %v1505
  %v1707 = vpop.f32.mrf.mxu0
  %v1708 = vadd.f32 %v1474, %v1707
  %v1709 = vpop.f32.mrf.mxu0
  %1710 = vmatprep.mubr.f32.mxu0 0.0
  %1711 = vmatmul.mubr.f32.gmra.mxu0 %v1508
  %v1712 = vpop.f32.mrf.mxu0
  %v1713 = vadd.f32 %v1479, %v1712
  %v1714 = vpop.f32.mrf.mxu0
  %1715 = vmatprep.mubr.f32.mxu0 0.0
  %1716 = vmatmul.mubr.f32.gmra.mxu0 %v1511
  %v1717 = vpop.f32.mrf.mxu0
  %v1718 = vadd.f32 %v1484, %v1717
  %v1719 = vpop.f32.mrf.mxu0
  %1720 = vmatprep.mubr.f32.mxu0 0.0
  %1721 = vmatmul.mubr.f32.gmra.mxu0 %v1514
  %v1722 = vpop.f32.mrf.mxu0
  %v1723 = vadd.f32 %v1489, %v1722
  %v1724 = vpop.f32.mrf.mxu0
  %1725 = vdwg.mxu0
  %v1726 = vld [vmem:[#allocation3 + $0x2] sm:$0xff]
  %v1727 = vld [vmem:[#allocation3 + $0xa] sm:$0xff]
  %v1728 = vld [vmem:[#allocation3 + $0x12] sm:$0xff]
  %v1729 = vld [vmem:[#allocation3 + $0x1a] sm:$0xff]
  %v1730 = vld [vmem:[#allocation3 + $0x22] sm:$0xff]
  %v1731 = vld [vmem:[#allocation3 + $0x2a] sm:$0xff]
  %v1732 = vld [vmem:[#allocation3 + $0x32] sm:$0xff]
  %v1733 = vld [vmem:[#allocation3 + $0x3a] sm:$0x3f]
  %s1734 = scalar_lea.vmem %s4, 128
  %v1735 = vld [vmem:[%s1734] sm:$0xff]
  %v1736 = vld [vmem:[%s1734 + $0x8] sm:$0xff]
  %v1737 = vld [vmem:[%s1734 + $0x10] sm:$0xff]
  %v1738 = vld [vmem:[%s1734 + $0x18] sm:$0xff]
  %v1739 = vld [vmem:[%s1734 + $0x20] sm:$0xff]
  %v1740 = vld [vmem:[%s1734 + $0x28] sm:$0xff]
  %v1741 = vld [vmem:[%s1734 + $0x30] sm:$0xff]
  %v1742 = vld [vmem:[%s1734 + $0x38] sm:$0xff]
  %v1744 = vsel %vm86, %v1726, 0
  %v1747 = vsel %vm86, %v1727, 0
  %v1750 = vsel %vm86, %v1728, 0
  %v1753 = vsel %vm86, %v1729, 0
  %v1756 = vsel %vm86, %v1730, 0
  %v1759 = vsel %vm86, %v1731, 0
  %v1762 = vsel %vm86, %v1732, 0
  %v1765 = vsel %vm86, %v1733, 0
  %1767 = vmatprep.subr.mxu0 0.0
  %1768 = vmatpush1.msra.mxu0 0.0
  %1769 = vmatprep.subr.mxu0 0.0
  %1770 = vmatpush1.msra.mxu0 0.0
  %1771 = vmatprep.subr.mxu0 0.0
  %1772 = vmatpush1.msra.mxu0 0.0
  %1773 = vmatprep.subr.mxu0 0.0
  %1774 = vmatpush1.msra.mxu0 0.0
  %1775 = vmatprep.subr.mxu0 0.0
  %1776 = vmatpush1.msra.mxu0 0.0
  %1777 = vmatprep.subr.mxu0 0.0
  %1778 = vmatpush1.msra.mxu0 0.0
  %1779 = vmatprep.subr.mxu0 0.0
  %1780 = vmatpush1.msra.mxu0 0.0
  %1781 = vmatprep.subr.mxu0 0.0
  %1782 = vmatpush1.msra.mxu0 0.0
  %1783 = vmatprep.subr.mxu0 0.0
  %1784 = vmatpush1.msra.mxu0 %v1742
  %1785 = vmatprep.subr.mxu0 0.0
  %1786 = vmatpush1.msra.mxu0 %v1741
  %1787 = vmatprep.subr.mxu0 0.0
  %1788 = vmatpush1.msra.mxu0 %v1740
  %1789 = vmatprep.subr.mxu0 0.0
  %1790 = vmatpush1.msra.mxu0 %v1739
  %1791 = vmatprep.subr.mxu0 0.0
  %1792 = vmatpush1.msra.mxu0 %v1738
  %1793 = vmatprep.subr.mxu0 0.0
  %1794 = vmatpush1.msra.mxu0 %v1737
  %1795 = vmatprep.subr.mxu0 0.0
  %1796 = vmatpush1.msra.mxu0 %v1736
  %1797 = vmatprep.subr.mxu0 0.0
  %1798 = vmatpush1.msra.mxu0 %v1735
  %1799 = vmatprep.subr.mxu0 0.0
  %1800 = vmatpush2.msra.mxu0 0.0
  %1801 = vmatprep.subr.mxu0 0.0
  %1802 = vmatpush2.msra.mxu0 0.0
  %1803 = vmatprep.subr.mxu0 0.0
  %1804 = vmatpush2.msra.mxu0 0.0
  %1805 = vmatprep.subr.mxu0 0.0
  %1806 = vmatpush2.msra.mxu0 0.0
  %1807 = vmatprep.subr.mxu0 0.0
  %1808 = vmatpush2.msra.mxu0 0.0
  %1809 = vmatprep.subr.mxu0 0.0
  %1810 = vmatpush2.msra.mxu0 0.0
  %1811 = vmatprep.subr.mxu0 0.0
  %1812 = vmatpush2.msra.mxu0 0.0
  %1813 = vmatprep.subr.mxu0 0.0
  %1814 = vmatpush2.msra.mxu0 0.0
  %1815 = vmatprep.subr.mxu0 0.0
  %1816 = vmatpush2.msra.mxu0 0.0
  %1817 = vmatprep.subr.mxu0 0.0
  %1818 = vmatpush2.msra.mxu0 0.0
  %1819 = vmatprep.subr.mxu0 0.0
  %1820 = vmatpush2.msra.mxu0 0.0
  %1821 = vmatprep.subr.mxu0 0.0
  %1822 = vmatpush2.msra.mxu0 0.0
  %1823 = vmatprep.subr.mxu0 0.0
  %1824 = vmatpush2.msra.mxu0 0.0
  %1825 = vmatprep.subr.mxu0 0.0
  %1826 = vmatpush2.msra.mxu0 0.0
  %1827 = vmatprep.subr.mxu0 0.0
  %1828 = vmatpush2.msra.mxu0 0.0
  %1829 = vmatprep.subr.mxu0 0.0
  %1830 = vmatpush2.msra.mxu0 0.0
  %1831 = vmatprep.mubr.f32.mxu0 0.0
  %1832 = vmatmul.mubr.f32.gmra.mxu0 %v1744
  %v1833 = vpop.f32.mrf.mxu0
  %v1834 = vadd.f32 0.0, %v1833
  %v1835 = vpop.f32.mrf.mxu0
  %1836 = vmatprep.mubr.f32.mxu0 0.0
  %1837 = vmatmul.mubr.f32.gmra.mxu0 %v1747
  %v1838 = vpop.f32.mrf.mxu0
  %v1839 = vadd.f32 0.0, %v1838
  %v1840 = vpop.f32.mrf.mxu0
  %1841 = vmatprep.mubr.f32.mxu0 0.0
  %1842 = vmatmul.mubr.f32.gmra.mxu0 %v1750
  %v1843 = vpop.f32.mrf.mxu0
  %v1844 = vadd.f32 0.0, %v1843
  %v1845 = vpop.f32.mrf.mxu0
  %1846 = vmatprep.mubr.f32.mxu0 0.0
  %1847 = vmatmul.mubr.f32.gmra.mxu0 %v1753
  %v1848 = vpop.f32.mrf.mxu0
  %v1849 = vadd.f32 0.0, %v1848
  %v1850 = vpop.f32.mrf.mxu0
  %1851 = vmatprep.mubr.f32.mxu0 0.0
  %1852 = vmatmul.mubr.f32.gmra.mxu0 %v1756
  %v1853 = vpop.f32.mrf.mxu0
  %v1854 = vadd.f32 0.0, %v1853
  %v1855 = vpop.f32.mrf.mxu0
  %1856 = vmatprep.mubr.f32.mxu0 0.0
  %1857 = vmatmul.mubr.f32.gmra.mxu0 %v1759
  %v1858 = vpop.f32.mrf.mxu0
  %v1859 = vadd.f32 0.0, %v1858
  %v1860 = vpop.f32.mrf.mxu0
  %1861 = vmatprep.mubr.f32.mxu0 0.0
  %1862 = vmatmul.mubr.f32.gmra.mxu0 %v1762
  %v1863 = vpop.f32.mrf.mxu0
  %v1864 = vadd.f32 0.0, %v1863
  %v1865 = vpop.f32.mrf.mxu0
  %1866 = vmatprep.mubr.f32.mxu0 0.0
  %1867 = vmatmul.mubr.f32.gmra.mxu0 %v1765
  %v1868 = vpop.f32.mrf.mxu0
  %v1869 = vadd.f32 0.0, %v1868
  %v1870 = vpop.f32.mrf.mxu0
  %1871 = vdwg.mxu0
  %s1872 = scalar_lea.vmem %s5, 128
  %v1873 = vld [vmem:[%s1872] sm:$0xff]
  %v1874 = vld [vmem:[%s1872 + $0x8] sm:$0xff]
  %v1875 = vld [vmem:[%s1872 + $0x10] sm:$0xff]
  %v1876 = vld [vmem:[%s1872 + $0x18] sm:$0xff]
  %v1877 = vld [vmem:[%s1872 + $0x20] sm:$0xff]
  %v1878 = vld [vmem:[%s1872 + $0x28] sm:$0xff]
  %v1879 = vld [vmem:[%s1872 + $0x30] sm:$0xff]
  %v1880 = vld [vmem:[%s1872 + $0x38] sm:$0xff]
  %1881 = vmatprep.subr.mxu0 0.0
  %1882 = vmatpush1.msra.mxu0 0.0
  %1883 = vmatprep.subr.mxu0 0.0
  %1884 = vmatpush1.msra.mxu0 0.0
  %1885 = vmatprep.subr.mxu0 0.0
  %1886 = vmatpush1.msra.mxu0 0.0
  %1887 = vmatprep.subr.mxu0 0.0
  %1888 = vmatpush1.msra.mxu0 0.0
  %1889 = vmatprep.subr.mxu0 0.0
  %1890 = vmatpush1.msra.mxu0 0.0
  %1891 = vmatprep.subr.mxu0 0.0
  %1892 = vmatpush1.msra.mxu0 0.0
  %1893 = vmatprep.subr.mxu0 0.0
  %1894 = vmatpush1.msra.mxu0 0.0
  %1895 = vmatprep.subr.mxu0 0.0
  %1896 = vmatpush1.msra.mxu0 0.0
  %1897 = vmatprep.subr.mxu0 0.0
  %1898 = vmatpush1.msra.mxu0 %v1880
  %1899 = vmatprep.subr.mxu0 0.0
  %1900 = vmatpush1.msra.mxu0 %v1879
  %1901 = vmatprep.subr.mxu0 0.0
  %1902 = vmatpush1.msra.mxu0 %v1878
  %1903 = vmatprep.subr.mxu0 0.0
  %1904 = vmatpush1.msra.mxu0 %v1877
  %1905 = vmatprep.subr.mxu0 0.0
  %1906 = vmatpush1.msra.mxu0 %v1876
  %1907 = vmatprep.subr.mxu0 0.0
  %1908 = vmatpush1.msra.mxu0 %v1875
  %1909 = vmatprep.subr.mxu0 0.0
  %1910 = vmatpush1.msra.mxu0 %v1874
  %1911 = vmatprep.subr.mxu0 0.0
  %1912 = vmatpush1.msra.mxu0 %v1873
  %1913 = vmatprep.subr.mxu0 0.0
  %1914 = vmatpush2.msra.mxu0 0.0
  %1915 = vmatprep.subr.mxu0 0.0
  %1916 = vmatpush2.msra.mxu0 0.0
  %1917 = vmatprep.subr.mxu0 0.0
  %1918 = vmatpush2.msra.mxu0 0.0
  %1919 = vmatprep.subr.mxu0 0.0
  %1920 = vmatpush2.msra.mxu0 0.0
  %1921 = vmatprep.subr.mxu0 0.0
  %1922 = vmatpush2.msra.mxu0 0.0
  %1923 = vmatprep.subr.mxu0 0.0
  %1924 = vmatpush2.msra.mxu0 0.0
  %1925 = vmatprep.subr.mxu0 0.0
  %1926 = vmatpush2.msra.mxu0 0.0
  %1927 = vmatprep.subr.mxu0 0.0
  %1928 = vmatpush2.msra.mxu0 0.0
  %1929 = vmatprep.subr.mxu0 0.0
  %1930 = vmatpush2.msra.mxu0 0.0
  %1931 = vmatprep.subr.mxu0 0.0
  %1932 = vmatpush2.msra.mxu0 0.0
  %1933 = vmatprep.subr.mxu0 0.0
  %1934 = vmatpush2.msra.mxu0 0.0
  %1935 = vmatprep.subr.mxu0 0.0
  %1936 = vmatpush2.msra.mxu0 0.0
  %1937 = vmatprep.subr.mxu0 0.0
  %1938 = vmatpush2.msra.mxu0 0.0
  %1939 = vmatprep.subr.mxu0 0.0
  %1940 = vmatpush2.msra.mxu0 0.0
  %1941 = vmatprep.subr.mxu0 0.0
  %1942 = vmatpush2.msra.mxu0 0.0
  %1943 = vmatprep.subr.mxu0 0.0
  %1944 = vmatpush2.msra.mxu0 0.0
  %1945 = vmatprep.mubr.f32.mxu0 0.0
  %1946 = vmatmul.mubr.f32.gmra.mxu0 %v1744
  %v1947 = vpop.f32.mrf.mxu0
  %v1948 = vadd.f32 0.0, %v1947
  %v1949 = vpop.f32.mrf.mxu0
  %1950 = vmatprep.mubr.f32.mxu0 0.0
  %1951 = vmatmul.mubr.f32.gmra.mxu0 %v1747
  %v1952 = vpop.f32.mrf.mxu0
  %v1953 = vadd.f32 0.0, %v1952
  %v1954 = vpop.f32.mrf.mxu0
  %1955 = vmatprep.mubr.f32.mxu0 0.0
  %1956 = vmatmul.mubr.f32.gmra.mxu0 %v1750
  %v1957 = vpop.f32.mrf.mxu0
  %v1958 = vadd.f32 0.0, %v1957
  %v1959 = vpop.f32.mrf.mxu0
  %1960 = vmatprep.mubr.f32.mxu0 0.0
  %1961 = vmatmul.mubr.f32.gmra.mxu0 %v1753
  %v1962 = vpop.f32.mrf.mxu0
  %v1963 = vadd.f32 0.0, %v1962
  %v1964 = vpop.f32.mrf.mxu0
  %1965 = vmatprep.mubr.f32.mxu0 0.0
  %1966 = vmatmul.mubr.f32.gmra.mxu0 %v1756
  %v1967 = vpop.f32.mrf.mxu0
  %v1968 = vadd.f32 0.0, %v1967
  %v1969 = vpop.f32.mrf.mxu0
  %1970 = vmatprep.mubr.f32.mxu0 0.0
  %1971 = vmatmul.mubr.f32.gmra.mxu0 %v1759
  %v1972 = vpop.f32.mrf.mxu0
  %v1973 = vadd.f32 0.0, %v1972
  %v1974 = vpop.f32.mrf.mxu0
  %1975 = vmatprep.mubr.f32.mxu0 0.0
  %1976 = vmatmul.mubr.f32.gmra.mxu0 %v1762
  %v1977 = vpop.f32.mrf.mxu0
  %v1978 = vadd.f32 0.0, %v1977
  %v1979 = vpop.f32.mrf.mxu0
  %1980 = vmatprep.mubr.f32.mxu0 0.0
  %1981 = vmatmul.mubr.f32.gmra.mxu0 %v1765
  %v1982 = vpop.f32.mrf.mxu0
  %v1983 = vadd.f32 0.0, %v1982
  %v1984 = vpop.f32.mrf.mxu0
  %1985 = vdwg.mxu0
  %v1986 = vadd.f32 %v1583, %v1834
  %v1987 = vadd.f32 %v1588, %v1839
  %v1988 = vadd.f32 %v1593, %v1844
  %v1989 = vadd.f32 %v1598, %v1849
  %v1990 = vadd.f32 %v1603, %v1854
  %v1991 = vadd.f32 %v1608, %v1859
  %v1992 = vadd.f32 %v1613, %v1864
  %v1993 = vadd.f32 %v1618, %v1869
  %v1994 = vadd.f32 %v1688, %v1948
  %v1995 = vadd.f32 %v1693, %v1953
  %v1996 = vadd.f32 %v1698, %v1958
  %v1997 = vadd.f32 %v1703, %v1963
  %v1998 = vadd.f32 %v1708, %v1968
  %v1999 = vadd.f32 %v1713, %v1973
  %v2000 = vadd.f32 %v1718, %v1978
  %v2001 = vadd.f32 %v1723, %v1983
  %v2002 = vld [vmem:[%s6] sm:$0x1]
  %v2004 = vlaneseq
  %v2005 = vshrl.u32 %v2004, 7
  %v2006 = vsub.s32 0, %v2005
  %v2007 = vrot.slane %v2002, %v2006
  %v2009 = vadd.f32 %v1986, %v2007
  %v2010 = vadd.f32 %v1987, %v2007
  %v2011 = vadd.f32 %v1988, %v2007
  %v2012 = vadd.f32 %v1989, %v2007
  %v2013 = vadd.f32 %v1990, %v2007
  %v2014 = vadd.f32 %v1991, %v2007
  %v2015 = vadd.f32 %v1992, %v2007
  %v2016 = vadd.f32 %v1993, %v2007
  %vm2017 = vcmp.ge.f32.partialorder %v2009, 0.0
  %vm2018 = vcmp.ge.f32.partialorder %v2010, 0.0
  %vm2019 = vcmp.ge.f32.partialorder %v2011, 0.0
  %vm2020 = vcmp.ge.f32.partialorder %v2012, 0.0
  %vm2021 = vcmp.ge.f32.partialorder %v2013, 0.0
  %vm2022 = vcmp.ge.f32.partialorder %v2014, 0.0
  %vm2023 = vcmp.ge.f32.partialorder %v2015, 0.0
  %vm2024 = vcmp.ge.f32.partialorder %v2016, 0.0
  %v2025 = vmul.f32 %v2009, 0.15
  %v2026 = vmul.f32 %v2010, 0.15
  %v2027 = vmul.f32 %v2011, 0.15
  %v2028 = vmul.f32 %v2012, 0.15
  %v2029 = vmul.f32 %v2013, 0.15
  %v2030 = vmul.f32 %v2014, 0.15
  %v2031 = vmul.f32 %v2015, 0.15
  %v2032 = vmul.f32 %v2016, 0.15
  %v2033 = vsel %vm2017, %v2009, %v2025
  %v2034 = vsel %vm2018, %v2010, %v2026
  %v2035 = vsel %vm2019, %v2011, %v2027
  %v2036 = vsel %vm2020, %v2012, %v2028
  %v2037 = vsel %vm2021, %v2013, %v2029
  %v2038 = vsel %vm2022, %v2014, %v2030
  %v2039 = vsel %vm2023, %v2015, %v2031
  %v2040 = vsel %vm2024, %v2016, %v2032
  %v2041 = vadd.f32 %v1994, %v2007
  %v2042 = vadd.f32 %v1995, %v2007
  %v2043 = vadd.f32 %v1996, %v2007
  %v2044 = vadd.f32 %v1997, %v2007
  %v2045 = vadd.f32 %v1998, %v2007
  %v2046 = vadd.f32 %v1999, %v2007
  %v2047 = vadd.f32 %v2000, %v2007
  %v2048 = vadd.f32 %v2001, %v2007
  %vm2049 = vcmp.ge.f32.partialorder %v2041, 0.0
  %vm2050 = vcmp.ge.f32.partialorder %v2042, 0.0
  %vm2051 = vcmp.ge.f32.partialorder %v2043, 0.0
  %vm2052 = vcmp.ge.f32.partialorder %v2044, 0.0
  %vm2053 = vcmp.ge.f32.partialorder %v2045, 0.0
  %vm2054 = vcmp.ge.f32.partialorder %v2046, 0.0
  %vm2055 = vcmp.ge.f32.partialorder %v2047, 0.0
  %vm2056 = vcmp.ge.f32.partialorder %v2048, 0.0
  %v2057 = vmul.f32 %v2041, 0.15
  %v2058 = vmul.f32 %v2042, 0.15
  %v2059 = vmul.f32 %v2043, 0.15
  %v2060 = vmul.f32 %v2044, 0.15
  %v2061 = vmul.f32 %v2045, 0.15
  %v2062 = vmul.f32 %v2046, 0.15
  %v2063 = vmul.f32 %v2047, 0.15
  %v2064 = vmul.f32 %v2048, 0.15
  %v2065 = vsel %vm2049, %v2041, %v2057
  %v2066 = vsel %vm2050, %v2042, %v2058
  %v2067 = vsel %vm2051, %v2043, %v2059
  %v2068 = vsel %vm2052, %v2044, %v2060
  %v2069 = vsel %vm2053, %v2045, %v2061
  %v2070 = vsel %vm2054, %v2046, %v2062
  %v2071 = vsel %vm2055, %v2047, %v2063
  %v2072 = vsel %vm2056, %v2048, %v2064
  %v2073 = vmax.f32 %v2033, %v2065
  %v2074 = vmax.f32 %v2034, %v2066
  %v2075 = vmax.f32 %v2035, %v2067
  %v2076 = vmax.f32 %v2036, %v2068
  %v2077 = vmax.f32 %v2037, %v2069
  %v2078 = vmax.f32 %v2038, %v2070
  %v2079 = vmax.f32 %v2039, %v2071
  %v2080 = vmax.f32 %v2040, %v2072
  %2081 = vst.msk [vmem:[#allocation8] sm:$0xff] %vm86, %v2073
  %2082 = vst.msk [vmem:[#allocation8 + $0x8] sm:$0xff] %vm86, %v2074
  %2083 = vst.msk [vmem:[#allocation8 + $0x10] sm:$0xff] %vm86, %v2075
  %2084 = vst.msk [vmem:[#allocation8 + $0x18] sm:$0xff] %vm86, %v2076
  %2085 = vst.msk [vmem:[#allocation8 + $0x20] sm:$0xff] %vm86, %v2077
  %2086 = vst.msk [vmem:[#allocation8 + $0x28] sm:$0xff] %vm86, %v2078
  %2087 = vst.msk [vmem:[#allocation8 + $0x30] sm:$0xff] %vm86, %v2079
  %2088 = vst.msk [vmem:[#allocation8 + $0x38] sm:$0x3f] %vm1183, %v2080
  %v2089 = vld [vmem:[#allocation8] ss:$2 sm:$0xf]
  %s2090 = scalar_lea.vmem [#allocation8], 1
  %v2091 = vld [vmem:[%s2090] ss:$2 sm:$0xf]
  %v2092 = vmax.f32 %v2089, %v2091
  %vm2093 = vcmask 519168
  %2094 = vst.msk [vmem:[#allocation4 + $0x1] sm:$0xf] %vm2093, %v2092
  %s2095 = scalar_lea.vmem [#allocation8], 16
  %v2096 = vld [vmem:[%s2095] ss:$2 sm:$0xf]
  %s2097 = scalar_lea.vmem [#allocation8], 17
  %v2098 = vld [vmem:[%s2097] ss:$2 sm:$0xf]
  %v2099 = vmax.f32 %v2096, %v2098
  %2100 = vst.msk [vmem:[#allocation4 + $0x9] sm:$0xf] %vm2093, %v2099
  %s2101 = scalar_lea.vmem [#allocation8], 32
  %v2102 = vld [vmem:[%s2101] ss:$2 sm:$0xf]
  %s2103 = scalar_lea.vmem [#allocation8], 33
  %v2104 = vld [vmem:[%s2103] ss:$2 sm:$0xf]
  %v2105 = vmax.f32 %v2102, %v2104
  %2106 = vst.msk [vmem:[#allocation4 + $0x11] sm:$0xf] %vm2093, %v2105
  %s2107 = scalar_lea.vmem [#allocation8], 48
  %v2108 = vld [vmem:[%s2107] ss:$2 sm:$0xf]
  %s2109 = scalar_lea.vmem [#allocation8], 49
  %v2110 = vld [vmem:[%s2109] ss:$2 sm:$0xf]
  %v2111 = vmax.f32 %v2108, %v2110
  %2112 = vst.msk [vmem:[#allocation4 + $0x19] sm:$0xf] %vm2093, %v2111
  %v2113 = vld [vmem:[#allocation4] sm:$0xff]
  %v2114 = vld [vmem:[#allocation4 + $0x8] sm:$0xff]
  %v2115 = vld [vmem:[#allocation4 + $0x10] sm:$0xff]
  %v2116 = vld [vmem:[#allocation4 + $0x18] sm:$0x3f]
  %v2117 = vld [vmem:[%s7] sm:$0xff]
  %v2118 = vld [vmem:[%s7 + $0x8] sm:$0xff]
  %v2119 = vld [vmem:[%s7 + $0x10] sm:$0xff]
  %v2120 = vld [vmem:[%s7 + $0x18] sm:$0xff]
  %v2121 = vld [vmem:[%s7 + $0x20] sm:$0xff]
  %v2122 = vld [vmem:[%s7 + $0x28] sm:$0xff]
  %v2123 = vld [vmem:[%s7 + $0x30] sm:$0xff]
  %v2124 = vld [vmem:[%s7 + $0x38] sm:$0xff]
  %v2125 = vld [vmem:[%s8] sm:$0xff]
  %v2126 = vld [vmem:[%s8 + $0x8] sm:$0xff]
  %v2127 = vld [vmem:[%s8 + $0x10] sm:$0xff]
  %v2128 = vld [vmem:[%s8 + $0x18] sm:$0xff]
  %v2129 = vld [vmem:[%s8 + $0x20] sm:$0xff]
  %v2130 = vld [vmem:[%s8 + $0x28] sm:$0xff]
  %v2131 = vld [vmem:[%s8 + $0x30] sm:$0xff]
  %v2132 = vld [vmem:[%s8 + $0x38] sm:$0xff]
  %v2133 = vld [vmem:[#allocation4 + $0x1] sm:$0xff]
  %v2134 = vld [vmem:[#allocation4 + $0x9] sm:$0xff]
  %v2135 = vld [vmem:[#allocation4 + $0x11] sm:$0xff]
  %v2136 = vld [vmem:[#allocation4 + $0x19] sm:$0x3f]
  %s2137 = scalar_lea.vmem %s7, 64
  %v2138 = vld [vmem:[%s2137] sm:$0xff]
  %v2139 = vld [vmem:[%s2137 + $0x8] sm:$0xff]
  %v2140 = vld [vmem:[%s2137 + $0x10] sm:$0xff]
  %v2141 = vld [vmem:[%s2137 + $0x18] sm:$0xff]
  %v2142 = vld [vmem:[%s2137 + $0x20] sm:$0xff]
  %v2143 = vld [vmem:[%s2137 + $0x28] sm:$0xff]
  %v2144 = vld [vmem:[%s2137 + $0x30] sm:$0xff]
  %v2145 = vld [vmem:[%s2137 + $0x38] sm:$0xff]
  %v2147 = vsel %vm86, %v2133, 0
  %v2150 = vsel %vm86, %v2134, 0
  %v2153 = vsel %vm86, %v2135, 0
  %v2156 = vsel %vm86, %v2136, 0
  %2158 = vmatprep.subr.mxu0 0.0
  %2159 = vmatpush1.msra.mxu0 0.0
  %2160 = vmatprep.subr.mxu0 0.0
  %2161 = vmatpush1.msra.mxu0 0.0
  %2162 = vmatprep.subr.mxu0 0.0
  %2163 = vmatpush1.msra.mxu0 0.0
  %2164 = vmatprep.subr.mxu0 0.0
  %2165 = vmatpush1.msra.mxu0 0.0
  %2166 = vmatprep.subr.mxu0 0.0
  %2167 = vmatpush1.msra.mxu0 0.0
  %2168 = vmatprep.subr.mxu0 0.0
  %2169 = vmatpush1.msra.mxu0 0.0
  %2170 = vmatprep.subr.mxu0 0.0
  %2171 = vmatpush1.msra.mxu0 0.0
  %2172 = vmatprep.subr.mxu0 0.0
  %2173 = vmatpush1.msra.mxu0 0.0
  %2174 = vmatprep.subr.mxu0 0.0
  %2175 = vmatpush1.msra.mxu0 %v2145
  %2176 = vmatprep.subr.mxu0 0.0
  %2177 = vmatpush1.msra.mxu0 %v2144
  %2178 = vmatprep.subr.mxu0 0.0
  %2179 = vmatpush1.msra.mxu0 %v2143
  %2180 = vmatprep.subr.mxu0 0.0
  %2181 = vmatpush1.msra.mxu0 %v2142
  %2182 = vmatprep.subr.mxu0 0.0
  %2183 = vmatpush1.msra.mxu0 %v2141
  %2184 = vmatprep.subr.mxu0 0.0
  %2185 = vmatpush1.msra.mxu0 %v2140
  %2186 = vmatprep.subr.mxu0 0.0
  %2187 = vmatpush1.msra.mxu0 %v2139
  %2188 = vmatprep.subr.mxu0 0.0
  %2189 = vmatpush1.msra.mxu0 %v2138
  %2190 = vmatprep.subr.mxu0 0.0
  %2191 = vmatpush2.msra.mxu0 0.0
  %2192 = vmatprep.subr.mxu0 0.0
  %2193 = vmatpush2.msra.mxu0 0.0
  %2194 = vmatprep.subr.mxu0 0.0
  %2195 = vmatpush2.msra.mxu0 0.0
  %2196 = vmatprep.subr.mxu0 0.0
  %2197 = vmatpush2.msra.mxu0 0.0
  %2198 = vmatprep.subr.mxu0 0.0
  %2199 = vmatpush2.msra.mxu0 0.0
  %2200 = vmatprep.subr.mxu0 0.0
  %2201 = vmatpush2.msra.mxu0 0.0
  %2202 = vmatprep.subr.mxu0 0.0
  %2203 = vmatpush2.msra.mxu0 0.0
  %2204 = vmatprep.subr.mxu0 0.0
  %2205 = vmatpush2.msra.mxu0 0.0
  %2206 = vmatprep.subr.mxu0 0.0
  %2207 = vmatpush2.msra.mxu0 0.0
  %2208 = vmatprep.subr.mxu0 0.0
  %2209 = vmatpush2.msra.mxu0 0.0
  %2210 = vmatprep.subr.mxu0 0.0
  %2211 = vmatpush2.msra.mxu0 0.0
  %2212 = vmatprep.subr.mxu0 0.0
  %2213 = vmatpush2.msra.mxu0 0.0
  %2214 = vmatprep.subr.mxu0 0.0
  %2215 = vmatpush2.msra.mxu0 0.0
  %2216 = vmatprep.subr.mxu0 0.0
  %2217 = vmatpush2.msra.mxu0 0.0
  %2218 = vmatprep.subr.mxu0 0.0
  %2219 = vmatpush2.msra.mxu0 0.0
  %2220 = vmatprep.subr.mxu0 0.0
  %2221 = vmatpush2.msra.mxu0 0.0
  %2222 = vmatprep.mubr.f32.mxu0 0.0
  %2223 = vmatmul.mubr.f32.gmra.mxu0 %v2147
  %v2224 = vpop.f32.mrf.mxu0
  %v2225 = vadd.f32 0.0, %v2224
  %v2226 = vpop.f32.mrf.mxu0
  %2227 = vmatprep.mubr.f32.mxu0 0.0
  %2228 = vmatmul.mubr.f32.gmra.mxu0 %v2150
  %v2229 = vpop.f32.mrf.mxu0
  %v2230 = vadd.f32 0.0, %v2229
  %v2231 = vpop.f32.mrf.mxu0
  %2232 = vmatprep.mubr.f32.mxu0 0.0
  %2233 = vmatmul.mubr.f32.gmra.mxu0 %v2153
  %v2234 = vpop.f32.mrf.mxu0
  %v2235 = vadd.f32 0.0, %v2234
  %v2236 = vpop.f32.mrf.mxu0
  %2237 = vmatprep.mubr.f32.mxu0 0.0
  %2238 = vmatmul.mubr.f32.gmra.mxu0 %v2156
  %v2239 = vpop.f32.mrf.mxu0
  %v2240 = vadd.f32 0.0, %v2239
  %v2241 = vpop.f32.mrf.mxu0
  %2242 = vdwg.mxu0
  %s2243 = scalar_lea.vmem %s8, 64
  %v2244 = vld [vmem:[%s2243] sm:$0xff]
  %v2245 = vld [vmem:[%s2243 + $0x8] sm:$0xff]
  %v2246 = vld [vmem:[%s2243 + $0x10] sm:$0xff]
  %v2247 = vld [vmem:[%s2243 + $0x18] sm:$0xff]
  %v2248 = vld [vmem:[%s2243 + $0x20] sm:$0xff]
  %v2249 = vld [vmem:[%s2243 + $0x28] sm:$0xff]
  %v2250 = vld [vmem:[%s2243 + $0x30] sm:$0xff]
  %v2251 = vld [vmem:[%s2243 + $0x38] sm:$0xff]
  %2252 = vmatprep.subr.mxu0 0.0
  %2253 = vmatpush1.msra.mxu0 0.0
  %2254 = vmatprep.subr.mxu0 0.0
  %2255 = vmatpush1.msra.mxu0 0.0
  %2256 = vmatprep.subr.mxu0 0.0
  %2257 = vmatpush1.msra.mxu0 0.0
  %2258 = vmatprep.subr.mxu0 0.0
  %2259 = vmatpush1.msra.mxu0 0.0
  %2260 = vmatprep.subr.mxu0 0.0
  %2261 = vmatpush1.msra.mxu0 0.0
  %2262 = vmatprep.subr.mxu0 0.0
  %2263 = vmatpush1.msra.mxu0 0.0
  %2264 = vmatprep.subr.mxu0 0.0
  %2265 = vmatpush1.msra.mxu0 0.0
  %2266 = vmatprep.subr.mxu0 0.0
  %2267 = vmatpush1.msra.mxu0 0.0
  %2268 = vmatprep.subr.mxu0 0.0
  %2269 = vmatpush1.msra.mxu0 %v2251
  %2270 = vmatprep.subr.mxu0 0.0
  %2271 = vmatpush1.msra.mxu0 %v2250
  %2272 = vmatprep.subr.mxu0 0.0
  %2273 = vmatpush1.msra.mxu0 %v2249
  %2274 = vmatprep.subr.mxu0 0.0
  %2275 = vmatpush1.msra.mxu0 %v2248
  %2276 = vmatprep.subr.mxu0 0.0
  %2277 = vmatpush1.msra.mxu0 %v2247
  %2278 = vmatprep.subr.mxu0 0.0
  %2279 = vmatpush1.msra.mxu0 %v2246
  %2280 = vmatprep.subr.mxu0 0.0
  %2281 = vmatpush1.msra.mxu0 %v2245
  %2282 = vmatprep.subr.mxu0 0.0
  %2283 = vmatpush1.msra.mxu0 %v2244
  %2284 = vmatprep.subr.mxu0 0.0
  %2285 = vmatpush2.msra.mxu0 0.0
  %2286 = vmatprep.subr.mxu0 0.0
  %2287 = vmatpush2.msra.mxu0 0.0
  %2288 = vmatprep.subr.mxu0 0.0
  %2289 = vmatpush2.msra.mxu0 0.0
  %2290 = vmatprep.subr.mxu0 0.0
  %2291 = vmatpush2.msra.mxu0 0.0
  %2292 = vmatprep.subr.mxu0 0.0
  %2293 = vmatpush2.msra.mxu0 0.0
  %2294 = vmatprep.subr.mxu0 0.0
  %2295 = vmatpush2.msra.mxu0 0.0
  %2296 = vmatprep.subr.mxu0 0.0
  %2297 = vmatpush2.msra.mxu0 0.0
  %2298 = vmatprep.subr.mxu0 0.0
  %2299 = vmatpush2.msra.mxu0 0.0
  %2300 = vmatprep.subr.mxu0 0.0
  %2301 = vmatpush2.msra.mxu0 0.0
  %2302 = vmatprep.subr.mxu0 0.0
  %2303 = vmatpush2.msra.mxu0 0.0
  %2304 = vmatprep.subr.mxu0 0.0
  %2305 = vmatpush2.msra.mxu0 0.0
  %2306 = vmatprep.subr.mxu0 0.0
  %2307 = vmatpush2.msra.mxu0 0.0
  %2308 = vmatprep.subr.mxu0 0.0
  %2309 = vmatpush2.msra.mxu0 0.0
  %2310 = vmatprep.subr.mxu0 0.0
  %2311 = vmatpush2.msra.mxu0 0.0
  %2312 = vmatprep.subr.mxu0 0.0
  %2313 = vmatpush2.msra.mxu0 0.0
  %2314 = vmatprep.subr.mxu0 0.0
  %2315 = vmatpush2.msra.mxu0 0.0
  %2316 = vmatprep.mubr.f32.mxu0 0.0
  %2317 = vmatmul.mubr.f32.gmra.mxu0 %v2147
  %v2318 = vpop.f32.mrf.mxu0
  %v2319 = vadd.f32 0.0, %v2318
  %v2320 = vpop.f32.mrf.mxu0
  %2321 = vmatprep.mubr.f32.mxu0 0.0
  %2322 = vmatmul.mubr.f32.gmra.mxu0 %v2150
  %v2323 = vpop.f32.mrf.mxu0
  %v2324 = vadd.f32 0.0, %v2323
  %v2325 = vpop.f32.mrf.mxu0
  %2326 = vmatprep.mubr.f32.mxu0 0.0
  %2327 = vmatmul.mubr.f32.gmra.mxu0 %v2153
  %v2328 = vpop.f32.mrf.mxu0
  %v2329 = vadd.f32 0.0, %v2328
  %v2330 = vpop.f32.mrf.mxu0
  %2331 = vmatprep.mubr.f32.mxu0 0.0
  %2332 = vmatmul.mubr.f32.gmra.mxu0 %v2156
  %v2333 = vpop.f32.mrf.mxu0
  %v2334 = vadd.f32 0.0, %v2333
  %v2335 = vpop.f32.mrf.mxu0
  %2336 = vdwg.mxu0
  %v2338 = vsel %vm86, %v2113, 0
  %v2341 = vsel %vm86, %v2114, 0
  %v2344 = vsel %vm86, %v2115, 0
  %v2347 = vsel %vm86, %v2116, 0
  %2349 = vmatprep.subr.mxu0 0.0
  %2350 = vmatpush1.msra.mxu0 0.0
  %2351 = vmatprep.subr.mxu0 0.0
  %2352 = vmatpush1.msra.mxu0 0.0
  %2353 = vmatprep.subr.mxu0 0.0
  %2354 = vmatpush1.msra.mxu0 0.0
  %2355 = vmatprep.subr.mxu0 0.0
  %2356 = vmatpush1.msra.mxu0 0.0
  %2357 = vmatprep.subr.mxu0 0.0
  %2358 = vmatpush1.msra.mxu0 0.0
  %2359 = vmatprep.subr.mxu0 0.0
  %2360 = vmatpush1.msra.mxu0 0.0
  %2361 = vmatprep.subr.mxu0 0.0
  %2362 = vmatpush1.msra.mxu0 0.0
  %2363 = vmatprep.subr.mxu0 0.0
  %2364 = vmatpush1.msra.mxu0 0.0
  %2365 = vmatprep.subr.mxu0 0.0
  %2366 = vmatpush1.msra.mxu0 %v2124
  %2367 = vmatprep.subr.mxu0 0.0
  %2368 = vmatpush1.msra.mxu0 %v2123
  %2369 = vmatprep.subr.mxu0 0.0
  %2370 = vmatpush1.msra.mxu0 %v2122
  %2371 = vmatprep.subr.mxu0 0.0
  %2372 = vmatpush1.msra.mxu0 %v2121
  %2373 = vmatprep.subr.mxu0 0.0
  %2374 = vmatpush1.msra.mxu0 %v2120
  %2375 = vmatprep.subr.mxu0 0.0
  %2376 = vmatpush1.msra.mxu0 %v2119
  %2377 = vmatprep.subr.mxu0 0.0
  %2378 = vmatpush1.msra.mxu0 %v2118
  %2379 = vmatprep.subr.mxu0 0.0
  %2380 = vmatpush1.msra.mxu0 %v2117
  %2381 = vmatprep.subr.mxu0 0.0
  %2382 = vmatpush2.msra.mxu0 0.0
  %2383 = vmatprep.subr.mxu0 0.0
  %2384 = vmatpush2.msra.mxu0 0.0
  %2385 = vmatprep.subr.mxu0 0.0
  %2386 = vmatpush2.msra.mxu0 0.0
  %2387 = vmatprep.subr.mxu0 0.0
  %2388 = vmatpush2.msra.mxu0 0.0
  %2389 = vmatprep.subr.mxu0 0.0
  %2390 = vmatpush2.msra.mxu0 0.0
  %2391 = vmatprep.subr.mxu0 0.0
  %2392 = vmatpush2.msra.mxu0 0.0
  %2393 = vmatprep.subr.mxu0 0.0
  %2394 = vmatpush2.msra.mxu0 0.0
  %2395 = vmatprep.subr.mxu0 0.0
  %2396 = vmatpush2.msra.mxu0 0.0
  %2397 = vmatprep.subr.mxu0 0.0
  %2398 = vmatpush2.msra.mxu0 0.0
  %2399 = vmatprep.subr.mxu0 0.0
  %2400 = vmatpush2.msra.mxu0 0.0
  %2401 = vmatprep.subr.mxu0 0.0
  %2402 = vmatpush2.msra.mxu0 0.0
  %2403 = vmatprep.subr.mxu0 0.0
  %2404 = vmatpush2.msra.mxu0 0.0
  %2405 = vmatprep.subr.mxu0 0.0
  %2406 = vmatpush2.msra.mxu0 0.0
  %2407 = vmatprep.subr.mxu0 0.0
  %2408 = vmatpush2.msra.mxu0 0.0
  %2409 = vmatprep.subr.mxu0 0.0
  %2410 = vmatpush2.msra.mxu0 0.0
  %2411 = vmatprep.subr.mxu0 0.0
  %2412 = vmatpush2.msra.mxu0 0.0
  %2413 = vmatprep.mubr.f32.mxu0 0.0
  %2414 = vmatmul.mubr.f32.gmra.mxu0 %v2338
  %v2415 = vpop.f32.mrf.mxu0
  %v2416 = vadd.f32 %v2225, %v2415
  %v2417 = vpop.f32.mrf.mxu0
  %2418 = vmatprep.mubr.f32.mxu0 0.0
  %2419 = vmatmul.mubr.f32.gmra.mxu0 %v2341
  %v2420 = vpop.f32.mrf.mxu0
  %v2421 = vadd.f32 %v2230, %v2420
  %v2422 = vpop.f32.mrf.mxu0
  %2423 = vmatprep.mubr.f32.mxu0 0.0
  %2424 = vmatmul.mubr.f32.gmra.mxu0 %v2344
  %v2425 = vpop.f32.mrf.mxu0
  %v2426 = vadd.f32 %v2235, %v2425
  %v2427 = vpop.f32.mrf.mxu0
  %2428 = vmatprep.mubr.f32.mxu0 0.0
  %2429 = vmatmul.mubr.f32.gmra.mxu0 %v2347
  %v2430 = vpop.f32.mrf.mxu0
  %v2431 = vadd.f32 %v2240, %v2430
  %v2432 = vpop.f32.mrf.mxu0
  %2433 = vdwg.mxu0
  %2434 = vmatprep.subr.mxu0 0.0
  %2435 = vmatpush1.msra.mxu0 0.0
  %2436 = vmatprep.subr.mxu0 0.0
  %2437 = vmatpush1.msra.mxu0 0.0
  %2438 = vmatprep.subr.mxu0 0.0
  %2439 = vmatpush1.msra.mxu0 0.0
  %2440 = vmatprep.subr.mxu0 0.0
  %2441 = vmatpush1.msra.mxu0 0.0
  %2442 = vmatprep.subr.mxu0 0.0
  %2443 = vmatpush1.msra.mxu0 0.0
  %2444 = vmatprep.subr.mxu0 0.0
  %2445 = vmatpush1.msra.mxu0 0.0
  %2446 = vmatprep.subr.mxu0 0.0
  %2447 = vmatpush1.msra.mxu0 0.0
  %2448 = vmatprep.subr.mxu0 0.0
  %2449 = vmatpush1.msra.mxu0 0.0
  %2450 = vmatprep.subr.mxu0 0.0
  %2451 = vmatpush1.msra.mxu0 %v2132
  %2452 = vmatprep.subr.mxu0 0.0
  %2453 = vmatpush1.msra.mxu0 %v2131
  %2454 = vmatprep.subr.mxu0 0.0
  %2455 = vmatpush1.msra.mxu0 %v2130
  %2456 = vmatprep.subr.mxu0 0.0
  %2457 = vmatpush1.msra.mxu0 %v2129
  %2458 = vmatprep.subr.mxu0 0.0
  %2459 = vmatpush1.msra.mxu0 %v2128
  %2460 = vmatprep.subr.mxu0 0.0
  %2461 = vmatpush1.msra.mxu0 %v2127
  %2462 = vmatprep.subr.mxu0 0.0
  %2463 = vmatpush1.msra.mxu0 %v2126
  %2464 = vmatprep.subr.mxu0 0.0
  %2465 = vmatpush1.msra.mxu0 %v2125
  %2466 = vmatprep.subr.mxu0 0.0
  %2467 = vmatpush2.msra.mxu0 0.0
  %2468 = vmatprep.subr.mxu0 0.0
  %2469 = vmatpush2.msra.mxu0 0.0
  %2470 = vmatprep.subr.mxu0 0.0
  %2471 = vmatpush2.msra.mxu0 0.0
  %2472 = vmatprep.subr.mxu0 0.0
  %2473 = vmatpush2.msra.mxu0 0.0
  %2474 = vmatprep.subr.mxu0 0.0
  %2475 = vmatpush2.msra.mxu0 0.0
  %2476 = vmatprep.subr.mxu0 0.0
  %2477 = vmatpush2.msra.mxu0 0.0
  %2478 = vmatprep.subr.mxu0 0.0
  %2479 = vmatpush2.msra.mxu0 0.0
  %2480 = vmatprep.subr.mxu0 0.0
  %2481 = vmatpush2.msra.mxu0 0.0
  %2482 = vmatprep.subr.mxu0 0.0
  %2483 = vmatpush2.msra.mxu0 0.0
  %2484 = vmatprep.subr.mxu0 0.0
  %2485 = vmatpush2.msra.mxu0 0.0
  %2486 = vmatprep.subr.mxu0 0.0
  %2487 = vmatpush2.msra.mxu0 0.0
  %2488 = vmatprep.subr.mxu0 0.0
  %2489 = vmatpush2.msra.mxu0 0.0
  %2490 = vmatprep.subr.mxu0 0.0
  %2491 = vmatpush2.msra.mxu0 0.0
  %2492 = vmatprep.subr.mxu0 0.0
  %2493 = vmatpush2.msra.mxu0 0.0
  %2494 = vmatprep.subr.mxu0 0.0
  %2495 = vmatpush2.msra.mxu0 0.0
  %2496 = vmatprep.subr.mxu0 0.0
  %2497 = vmatpush2.msra.mxu0 0.0
  %2498 = vmatprep.mubr.f32.mxu0 0.0
  %2499 = vmatmul.mubr.f32.gmra.mxu0 %v2338
  %v2500 = vpop.f32.mrf.mxu0
  %v2501 = vadd.f32 %v2319, %v2500
  %v2502 = vpop.f32.mrf.mxu0
  %2503 = vmatprep.mubr.f32.mxu0 0.0
  %2504 = vmatmul.mubr.f32.gmra.mxu0 %v2341
  %v2505 = vpop.f32.mrf.mxu0
  %v2506 = vadd.f32 %v2324, %v2505
  %v2507 = vpop.f32.mrf.mxu0
  %2508 = vmatprep.mubr.f32.mxu0 0.0
  %2509 = vmatmul.mubr.f32.gmra.mxu0 %v2344
  %v2510 = vpop.f32.mrf.mxu0
  %v2511 = vadd.f32 %v2329, %v2510
  %v2512 = vpop.f32.mrf.mxu0
  %2513 = vmatprep.mubr.f32.mxu0 0.0
  %2514 = vmatmul.mubr.f32.gmra.mxu0 %v2347
  %v2515 = vpop.f32.mrf.mxu0
  %v2516 = vadd.f32 %v2334, %v2515
  %v2517 = vpop.f32.mrf.mxu0
  %2518 = vdwg.mxu0
  %v2519 = vld [vmem:[#allocation4 + $0x2] sm:$0xff]
  %v2520 = vld [vmem:[#allocation4 + $0xa] sm:$0xff]
  %v2521 = vld [vmem:[#allocation4 + $0x12] sm:$0xff]
  %v2522 = vld [vmem:[#allocation4 + $0x1a] sm:$0x3f]
  %s2523 = scalar_lea.vmem %s7, 128
  %v2524 = vld [vmem:[%s2523] sm:$0xff]
  %v2525 = vld [vmem:[%s2523 + $0x8] sm:$0xff]
  %v2526 = vld [vmem:[%s2523 + $0x10] sm:$0xff]
  %v2527 = vld [vmem:[%s2523 + $0x18] sm:$0xff]
  %v2528 = vld [vmem:[%s2523 + $0x20] sm:$0xff]
  %v2529 = vld [vmem:[%s2523 + $0x28] sm:$0xff]
  %v2530 = vld [vmem:[%s2523 + $0x30] sm:$0xff]
  %v2531 = vld [vmem:[%s2523 + $0x38] sm:$0xff]
  %v2533 = vsel %vm86, %v2519, 0
  %v2536 = vsel %vm86, %v2520, 0
  %v2539 = vsel %vm86, %v2521, 0
  %v2542 = vsel %vm86, %v2522, 0
  %2544 = vmatprep.subr.mxu0 0.0
  %2545 = vmatpush1.msra.mxu0 0.0
  %2546 = vmatprep.subr.mxu0 0.0
  %2547 = vmatpush1.msra.mxu0 0.0
  %2548 = vmatprep.subr.mxu0 0.0
  %2549 = vmatpush1.msra.mxu0 0.0
  %2550 = vmatprep.subr.mxu0 0.0
  %2551 = vmatpush1.msra.mxu0 0.0
  %2552 = vmatprep.subr.mxu0 0.0
  %2553 = vmatpush1.msra.mxu0 0.0
  %2554 = vmatprep.subr.mxu0 0.0
  %2555 = vmatpush1.msra.mxu0 0.0
  %2556 = vmatprep.subr.mxu0 0.0
  %2557 = vmatpush1.msra.mxu0 0.0
  %2558 = vmatprep.subr.mxu0 0.0
  %2559 = vmatpush1.msra.mxu0 0.0
  %2560 = vmatprep.subr.mxu0 0.0
  %2561 = vmatpush1.msra.mxu0 %v2531
  %2562 = vmatprep.subr.mxu0 0.0
  %2563 = vmatpush1.msra.mxu0 %v2530
  %2564 = vmatprep.subr.mxu0 0.0
  %2565 = vmatpush1.msra.mxu0 %v2529
  %2566 = vmatprep.subr.mxu0 0.0
  %2567 = vmatpush1.msra.mxu0 %v2528
  %2568 = vmatprep.subr.mxu0 0.0
  %2569 = vmatpush1.msra.mxu0 %v2527
  %2570 = vmatprep.subr.mxu0 0.0
  %2571 = vmatpush1.msra.mxu0 %v2526
  %2572 = vmatprep.subr.mxu0 0.0
  %2573 = vmatpush1.msra.mxu0 %v2525
  %2574 = vmatprep.subr.mxu0 0.0
  %2575 = vmatpush1.msra.mxu0 %v2524
  %2576 = vmatprep.subr.mxu0 0.0
  %2577 = vmatpush2.msra.mxu0 0.0
  %2578 = vmatprep.subr.mxu0 0.0
  %2579 = vmatpush2.msra.mxu0 0.0
  %2580 = vmatprep.subr.mxu0 0.0
  %2581 = vmatpush2.msra.mxu0 0.0
  %2582 = vmatprep.subr.mxu0 0.0
  %2583 = vmatpush2.msra.mxu0 0.0
  %2584 = vmatprep.subr.mxu0 0.0
  %2585 = vmatpush2.msra.mxu0 0.0
  %2586 = vmatprep.subr.mxu0 0.0
  %2587 = vmatpush2.msra.mxu0 0.0
  %2588 = vmatprep.subr.mxu0 0.0
  %2589 = vmatpush2.msra.mxu0 0.0
  %2590 = vmatprep.subr.mxu0 0.0
  %2591 = vmatpush2.msra.mxu0 0.0
  %2592 = vmatprep.subr.mxu0 0.0
  %2593 = vmatpush2.msra.mxu0 0.0
  %2594 = vmatprep.subr.mxu0 0.0
  %2595 = vmatpush2.msra.mxu0 0.0
  %2596 = vmatprep.subr.mxu0 0.0
  %2597 = vmatpush2.msra.mxu0 0.0
  %2598 = vmatprep.subr.mxu0 0.0
  %2599 = vmatpush2.msra.mxu0 0.0
  %2600 = vmatprep.subr.mxu0 0.0
  %2601 = vmatpush2.msra.mxu0 0.0
  %2602 = vmatprep.subr.mxu0 0.0
  %2603 = vmatpush2.msra.mxu0 0.0
  %2604 = vmatprep.subr.mxu0 0.0
  %2605 = vmatpush2.msra.mxu0 0.0
  %2606 = vmatprep.subr.mxu0 0.0
  %2607 = vmatpush2.msra.mxu0 0.0
  %2608 = vmatprep.mubr.f32.mxu0 0.0
  %2609 = vmatmul.mubr.f32.gmra.mxu0 %v2533
  %v2610 = vpop.f32.mrf.mxu0
  %v2611 = vadd.f32 0.0, %v2610
  %v2612 = vpop.f32.mrf.mxu0
  %2613 = vmatprep.mubr.f32.mxu0 0.0
  %2614 = vmatmul.mubr.f32.gmra.mxu0 %v2536
  %v2615 = vpop.f32.mrf.mxu0
  %v2616 = vadd.f32 0.0, %v2615
  %v2617 = vpop.f32.mrf.mxu0
  %2618 = vmatprep.mubr.f32.mxu0 0.0
  %2619 = vmatmul.mubr.f32.gmra.mxu0 %v2539
  %v2620 = vpop.f32.mrf.mxu0
  %v2621 = vadd.f32 0.0, %v2620
  %v2622 = vpop.f32.mrf.mxu0
  %2623 = vmatprep.mubr.f32.mxu0 0.0
  %2624 = vmatmul.mubr.f32.gmra.mxu0 %v2542
  %v2625 = vpop.f32.mrf.mxu0
  %v2626 = vadd.f32 0.0, %v2625
  %v2627 = vpop.f32.mrf.mxu0
  %2628 = vdwg.mxu0
  %s2629 = scalar_lea.vmem %s8, 128
  %v2630 = vld [vmem:[%s2629] sm:$0xff]
  %v2631 = vld [vmem:[%s2629 + $0x8] sm:$0xff]
  %v2632 = vld [vmem:[%s2629 + $0x10] sm:$0xff]
  %v2633 = vld [vmem:[%s2629 + $0x18] sm:$0xff]
  %v2634 = vld [vmem:[%s2629 + $0x20] sm:$0xff]
  %v2635 = vld [vmem:[%s2629 + $0x28] sm:$0xff]
  %v2636 = vld [vmem:[%s2629 + $0x30] sm:$0xff]
  %v2637 = vld [vmem:[%s2629 + $0x38] sm:$0xff]
  %2638 = vmatprep.subr.mxu0 0.0
  %2639 = vmatpush1.msra.mxu0 0.0
  %2640 = vmatprep.subr.mxu0 0.0
  %2641 = vmatpush1.msra.mxu0 0.0
  %2642 = vmatprep.subr.mxu0 0.0
  %2643 = vmatpush1.msra.mxu0 0.0
  %2644 = vmatprep.subr.mxu0 0.0
  %2645 = vmatpush1.msra.mxu0 0.0
  %2646 = vmatprep.subr.mxu0 0.0
  %2647 = vmatpush1.msra.mxu0 0.0
  %2648 = vmatprep.subr.mxu0 0.0
  %2649 = vmatpush1.msra.mxu0 0.0
  %2650 = vmatprep.subr.mxu0 0.0
  %2651 = vmatpush1.msra.mxu0 0.0
  %2652 = vmatprep.subr.mxu0 0.0
  %2653 = vmatpush1.msra.mxu0 0.0
  %2654 = vmatprep.subr.mxu0 0.0
  %2655 = vmatpush1.msra.mxu0 %v2637
  %2656 = vmatprep.subr.mxu0 0.0
  %2657 = vmatpush1.msra.mxu0 %v2636
  %2658 = vmatprep.subr.mxu0 0.0
  %2659 = vmatpush1.msra.mxu0 %v2635
  %2660 = vmatprep.subr.mxu0 0.0
  %2661 = vmatpush1.msra.mxu0 %v2634
  %2662 = vmatprep.subr.mxu0 0.0
  %2663 = vmatpush1.msra.mxu0 %v2633
  %2664 = vmatprep.subr.mxu0 0.0
  %2665 = vmatpush1.msra.mxu0 %v2632
  %2666 = vmatprep.subr.mxu0 0.0
  %2667 = vmatpush1.msra.mxu0 %v2631
  %2668 = vmatprep.subr.mxu0 0.0
  %2669 = vmatpush1.msra.mxu0 %v2630
  %2670 = vmatprep.subr.mxu0 0.0
  %2671 = vmatpush2.msra.mxu0 0.0
  %2672 = vmatprep.subr.mxu0 0.0
  %2673 = vmatpush2.msra.mxu0 0.0
  %2674 = vmatprep.subr.mxu0 0.0
  %2675 = vmatpush2.msra.mxu0 0.0
  %2676 = vmatprep.subr.mxu0 0.0
  %2677 = vmatpush2.msra.mxu0 0.0
  %2678 = vmatprep.subr.mxu0 0.0
  %2679 = vmatpush2.msra.mxu0 0.0
  %2680 = vmatprep.subr.mxu0 0.0
  %2681 = vmatpush2.msra.mxu0 0.0
  %2682 = vmatprep.subr.mxu0 0.0
  %2683 = vmatpush2.msra.mxu0 0.0
  %2684 = vmatprep.subr.mxu0 0.0
  %2685 = vmatpush2.msra.mxu0 0.0
  %2686 = vmatprep.subr.mxu0 0.0
  %2687 = vmatpush2.msra.mxu0 0.0
  %2688 = vmatprep.subr.mxu0 0.0
  %2689 = vmatpush2.msra.mxu0 0.0
  %2690 = vmatprep.subr.mxu0 0.0
  %2691 = vmatpush2.msra.mxu0 0.0
  %2692 = vmatprep.subr.mxu0 0.0
  %2693 = vmatpush2.msra.mxu0 0.0
  %2694 = vmatprep.subr.mxu0 0.0
  %2695 = vmatpush2.msra.mxu0 0.0
  %2696 = vmatprep.subr.mxu0 0.0
  %2697 = vmatpush2.msra.mxu0 0.0
  %2698 = vmatprep.subr.mxu0 0.0
  %2699 = vmatpush2.msra.mxu0 0.0
  %2700 = vmatprep.subr.mxu0 0.0
  %2701 = vmatpush2.msra.mxu0 0.0
  %2702 = vmatprep.mubr.f32.mxu0 0.0
  %2703 = vmatmul.mubr.f32.gmra.mxu0 %v2533
  %v2704 = vpop.f32.mrf.mxu0
  %v2705 = vadd.f32 0.0, %v2704
  %v2706 = vpop.f32.mrf.mxu0
  %2707 = vmatprep.mubr.f32.mxu0 0.0
  %2708 = vmatmul.mubr.f32.gmra.mxu0 %v2536
  %v2709 = vpop.f32.mrf.mxu0
  %v2710 = vadd.f32 0.0, %v2709
  %v2711 = vpop.f32.mrf.mxu0
  %2712 = vmatprep.mubr.f32.mxu0 0.0
  %2713 = vmatmul.mubr.f32.gmra.mxu0 %v2539
  %v2714 = vpop.f32.mrf.mxu0
  %v2715 = vadd.f32 0.0, %v2714
  %v2716 = vpop.f32.mrf.mxu0
  %2717 = vmatprep.mubr.f32.mxu0 0.0
  %2718 = vmatmul.mubr.f32.gmra.mxu0 %v2542
  %v2719 = vpop.f32.mrf.mxu0
  %v2720 = vadd.f32 0.0, %v2719
  %v2721 = vpop.f32.mrf.mxu0
  %2722 = vdwg.mxu0
  %v2723 = vadd.f32 %v2416, %v2611
  %v2724 = vadd.f32 %v2421, %v2616
  %v2725 = vadd.f32 %v2426, %v2621
  %v2726 = vadd.f32 %v2431, %v2626
  %v2727 = vadd.f32 %v2501, %v2705
  %v2728 = vadd.f32 %v2506, %v2710
  %v2729 = vadd.f32 %v2511, %v2715
  %v2730 = vadd.f32 %v2516, %v2720
  %v2731 = vld [vmem:[%s9] sm:$0x1]
  %v2733 = vlaneseq
  %v2734 = vshrl.u32 %v2733, 7
  %v2735 = vsub.s32 0, %v2734
  %v2736 = vrot.slane %v2731, %v2735
  %v2738 = vadd.f32 %v2723, %v2736
  %v2739 = vadd.f32 %v2724, %v2736
  %v2740 = vadd.f32 %v2725, %v2736
  %v2741 = vadd.f32 %v2726, %v2736
  %vm2742 = vcmp.ge.f32.partialorder %v2738, 0.0
  %vm2743 = vcmp.ge.f32.partialorder %v2739, 0.0
  %vm2744 = vcmp.ge.f32.partialorder %v2740, 0.0
  %vm2745 = vcmp.ge.f32.partialorder %v2741, 0.0
  %v2746 = vmul.f32 %v2738, 0.15
  %v2747 = vmul.f32 %v2739, 0.15
  %v2748 = vmul.f32 %v2740, 0.15
  %v2749 = vmul.f32 %v2741, 0.15
  %v2750 = vsel %vm2742, %v2738, %v2746
  %v2751 = vsel %vm2743, %v2739, %v2747
  %v2752 = vsel %vm2744, %v2740, %v2748
  %v2753 = vsel %vm2745, %v2741, %v2749
  %v2754 = vadd.f32 %v2727, %v2736
  %v2755 = vadd.f32 %v2728, %v2736
  %v2756 = vadd.f32 %v2729, %v2736
  %v2757 = vadd.f32 %v2730, %v2736
  %vm2758 = vcmp.ge.f32.partialorder %v2754, 0.0
  %vm2759 = vcmp.ge.f32.partialorder %v2755, 0.0
  %vm2760 = vcmp.ge.f32.partialorder %v2756, 0.0
  %vm2761 = vcmp.ge.f32.partialorder %v2757, 0.0
  %v2762 = vmul.f32 %v2754, 0.15
  %v2763 = vmul.f32 %v2755, 0.15
  %v2764 = vmul.f32 %v2756, 0.15
  %v2765 = vmul.f32 %v2757, 0.15
  %v2766 = vsel %vm2758, %v2754, %v2762
  %v2767 = vsel %vm2759, %v2755, %v2763
  %v2768 = vsel %vm2760, %v2756, %v2764
  %v2769 = vsel %vm2761, %v2757, %v2765
  %v2770 = vmax.f32 %v2750, %v2766
  %v2771 = vmax.f32 %v2751, %v2767
  %v2772 = vmax.f32 %v2752, %v2768
  %v2773 = vmax.f32 %v2753, %v2769
  %2774 = vst.msk [vmem:[#allocation9] sm:$0xff] %vm86, %v2770
  %2775 = vst.msk [vmem:[#allocation9 + $0x8] sm:$0xff] %vm86, %v2771
  %2776 = vst.msk [vmem:[#allocation9 + $0x10] sm:$0xff] %vm86, %v2772
  %2777 = vst.msk [vmem:[#allocation9 + $0x18] sm:$0x3f] %vm1183, %v2773
  %v2778 = vld [vmem:[#allocation9] ss:$2 sm:$0x3]
  %s2779 = scalar_lea.vmem [#allocation9], 1
  %v2780 = vld [vmem:[%s2779] ss:$2 sm:$0x3]
  %v2781 = vmax.f32 %v2778, %v2780
  %vm2782 = vcmask 517120
  %2783 = vst.msk [vmem:[#allocation5 + $0x1] sm:$0x3] %vm2782, %v2781
  %s2784 = scalar_lea.vmem [#allocation9], 8
  %v2785 = vld [vmem:[%s2784] ss:$2 sm:$0x3]
  %s2786 = scalar_lea.vmem [#allocation9], 9
  %v2787 = vld [vmem:[%s2786] ss:$2 sm:$0x3]
  %v2788 = vmax.f32 %v2785, %v2787
  %2789 = vst.msk [vmem:[#allocation5 + $0x9] sm:$0x3] %vm2782, %v2788
  %s2790 = scalar_lea.vmem [#allocation9], 16
  %v2791 = vld [vmem:[%s2790] ss:$2 sm:$0x3]
  %s2792 = scalar_lea.vmem [#allocation9], 17
  %v2793 = vld [vmem:[%s2792] ss:$2 sm:$0x3]
  %v2794 = vmax.f32 %v2791, %v2793
  %2795 = vst.msk [vmem:[#allocation5 + $0x11] sm:$0x3] %vm2782, %v2794
  %s2796 = scalar_lea.vmem [#allocation9], 24
  %v2797 = vld [vmem:[%s2796] ss:$2 sm:$0x3]
  %s2798 = scalar_lea.vmem [#allocation9], 25
  %v2799 = vld [vmem:[%s2798] ss:$2 sm:$0x3]
  %v2800 = vmax.f32 %v2797, %v2799
  %2801 = vst.msk [vmem:[#allocation5 + $0x19] sm:$0x3] %vm2782, %v2800
  %v2802 = vld [vmem:[#allocation5] sm:$0xff]
  %v2803 = vld [vmem:[#allocation5 + $0x8] sm:$0xff]
  %v2804 = vld [vmem:[#allocation5 + $0x10] sm:$0xff]
  %v2805 = vld [vmem:[#allocation5 + $0x18] sm:$0x3f]
  %v2806 = vld [vmem:[%s10] sm:$0xff]
  %v2807 = vld [vmem:[%s10 + $0x8] sm:$0xff]
  %v2808 = vld [vmem:[%s10 + $0x10] sm:$0xff]
  %v2809 = vld [vmem:[%s10 + $0x18] sm:$0xff]
  %v2810 = vld [vmem:[%s10 + $0x20] sm:$0xff]
  %v2811 = vld [vmem:[%s10 + $0x28] sm:$0xff]
  %v2812 = vld [vmem:[%s10 + $0x30] sm:$0xff]
  %v2813 = vld [vmem:[%s10 + $0x38] sm:$0xff]
  %v2814 = vld [vmem:[%s11] sm:$0xff]
  %v2815 = vld [vmem:[%s11 + $0x8] sm:$0xff]
  %v2816 = vld [vmem:[%s11 + $0x10] sm:$0xff]
  %v2817 = vld [vmem:[%s11 + $0x18] sm:$0xff]
  %v2818 = vld [vmem:[%s11 + $0x20] sm:$0xff]
  %v2819 = vld [vmem:[%s11 + $0x28] sm:$0xff]
  %v2820 = vld [vmem:[%s11 + $0x30] sm:$0xff]
  %v2821 = vld [vmem:[%s11 + $0x38] sm:$0xff]
  %v2822 = vld [vmem:[#allocation5 + $0x1] sm:$0xff]
  %v2823 = vld [vmem:[#allocation5 + $0x9] sm:$0xff]
  %v2824 = vld [vmem:[#allocation5 + $0x11] sm:$0xff]
  %v2825 = vld [vmem:[#allocation5 + $0x19] sm:$0x3f]
  %s2826 = scalar_lea.vmem %s10, 64
  %v2827 = vld [vmem:[%s2826] sm:$0xff]
  %v2828 = vld [vmem:[%s2826 + $0x8] sm:$0xff]
  %v2829 = vld [vmem:[%s2826 + $0x10] sm:$0xff]
  %v2830 = vld [vmem:[%s2826 + $0x18] sm:$0xff]
  %v2831 = vld [vmem:[%s2826 + $0x20] sm:$0xff]
  %v2832 = vld [vmem:[%s2826 + $0x28] sm:$0xff]
  %v2833 = vld [vmem:[%s2826 + $0x30] sm:$0xff]
  %v2834 = vld [vmem:[%s2826 + $0x38] sm:$0xff]
  %v2836 = vsel %vm86, %v2822, 0
  %v2839 = vsel %vm86, %v2823, 0
  %v2842 = vsel %vm86, %v2824, 0
  %v2845 = vsel %vm86, %v2825, 0
  %2847 = vmatprep.subr.mxu0 0.0
  %2848 = vmatpush1.msra.mxu0 0.0
  %2849 = vmatprep.subr.mxu0 0.0
  %2850 = vmatpush1.msra.mxu0 0.0
  %2851 = vmatprep.subr.mxu0 0.0
  %2852 = vmatpush1.msra.mxu0 0.0
  %2853 = vmatprep.subr.mxu0 0.0
  %2854 = vmatpush1.msra.mxu0 0.0
  %2855 = vmatprep.subr.mxu0 0.0
  %2856 = vmatpush1.msra.mxu0 0.0
  %2857 = vmatprep.subr.mxu0 0.0
  %2858 = vmatpush1.msra.mxu0 0.0
  %2859 = vmatprep.subr.mxu0 0.0
  %2860 = vmatpush1.msra.mxu0 0.0
  %2861 = vmatprep.subr.mxu0 0.0
  %2862 = vmatpush1.msra.mxu0 0.0
  %2863 = vmatprep.subr.mxu0 0.0
  %2864 = vmatpush1.msra.mxu0 %v2834
  %2865 = vmatprep.subr.mxu0 0.0
  %2866 = vmatpush1.msra.mxu0 %v2833
  %2867 = vmatprep.subr.mxu0 0.0
  %2868 = vmatpush1.msra.mxu0 %v2832
  %2869 = vmatprep.subr.mxu0 0.0
  %2870 = vmatpush1.msra.mxu0 %v2831
  %2871 = vmatprep.subr.mxu0 0.0
  %2872 = vmatpush1.msra.mxu0 %v2830
  %2873 = vmatprep.subr.mxu0 0.0
  %2874 = vmatpush1.msra.mxu0 %v2829
  %2875 = vmatprep.subr.mxu0 0.0
  %2876 = vmatpush1.msra.mxu0 %v2828
  %2877 = vmatprep.subr.mxu0 0.0
  %2878 = vmatpush1.msra.mxu0 %v2827
  %2879 = vmatprep.subr.mxu0 0.0
  %2880 = vmatpush2.msra.mxu0 0.0
  %2881 = vmatprep.subr.mxu0 0.0
  %2882 = vmatpush2.msra.mxu0 0.0
  %2883 = vmatprep.subr.mxu0 0.0
  %2884 = vmatpush2.msra.mxu0 0.0
  %2885 = vmatprep.subr.mxu0 0.0
  %2886 = vmatpush2.msra.mxu0 0.0
  %2887 = vmatprep.subr.mxu0 0.0
  %2888 = vmatpush2.msra.mxu0 0.0
  %2889 = vmatprep.subr.mxu0 0.0
  %2890 = vmatpush2.msra.mxu0 0.0
  %2891 = vmatprep.subr.mxu0 0.0
  %2892 = vmatpush2.msra.mxu0 0.0
  %2893 = vmatprep.subr.mxu0 0.0
  %2894 = vmatpush2.msra.mxu0 0.0
  %2895 = vmatprep.subr.mxu0 0.0
  %2896 = vmatpush2.msra.mxu0 0.0
  %2897 = vmatprep.subr.mxu0 0.0
  %2898 = vmatpush2.msra.mxu0 0.0
  %2899 = vmatprep.subr.mxu0 0.0
  %2900 = vmatpush2.msra.mxu0 0.0
  %2901 = vmatprep.subr.mxu0 0.0
  %2902 = vmatpush2.msra.mxu0 0.0
  %2903 = vmatprep.subr.mxu0 0.0
  %2904 = vmatpush2.msra.mxu0 0.0
  %2905 = vmatprep.subr.mxu0 0.0
  %2906 = vmatpush2.msra.mxu0 0.0
  %2907 = vmatprep.subr.mxu0 0.0
  %2908 = vmatpush2.msra.mxu0 0.0
  %2909 = vmatprep.subr.mxu0 0.0
  %2910 = vmatpush2.msra.mxu0 0.0
  %2911 = vmatprep.mubr.f32.mxu0 0.0
  %2912 = vmatmul.mubr.f32.gmra.mxu0 %v2836
  %v2913 = vpop.f32.mrf.mxu0
  %v2914 = vadd.f32 0.0, %v2913
  %v2915 = vpop.f32.mrf.mxu0
  %2916 = vmatprep.mubr.f32.mxu0 0.0
  %2917 = vmatmul.mubr.f32.gmra.mxu0 %v2839
  %v2918 = vpop.f32.mrf.mxu0
  %v2919 = vadd.f32 0.0, %v2918
  %v2920 = vpop.f32.mrf.mxu0
  %2921 = vmatprep.mubr.f32.mxu0 0.0
  %2922 = vmatmul.mubr.f32.gmra.mxu0 %v2842
  %v2923 = vpop.f32.mrf.mxu0
  %v2924 = vadd.f32 0.0, %v2923
  %v2925 = vpop.f32.mrf.mxu0
  %2926 = vmatprep.mubr.f32.mxu0 0.0
  %2927 = vmatmul.mubr.f32.gmra.mxu0 %v2845
  %v2928 = vpop.f32.mrf.mxu0
  %v2929 = vadd.f32 0.0, %v2928
  %v2930 = vpop.f32.mrf.mxu0
  %2931 = vdwg.mxu0
  %s2932 = scalar_lea.vmem %s11, 64
  %v2933 = vld [vmem:[%s2932] sm:$0xff]
  %v2934 = vld [vmem:[%s2932 + $0x8] sm:$0xff]
  %v2935 = vld [vmem:[%s2932 + $0x10] sm:$0xff]
  %v2936 = vld [vmem:[%s2932 + $0x18] sm:$0xff]
  %v2937 = vld [vmem:[%s2932 + $0x20] sm:$0xff]
  %v2938 = vld [vmem:[%s2932 + $0x28] sm:$0xff]
  %v2939 = vld [vmem:[%s2932 + $0x30] sm:$0xff]
  %v2940 = vld [vmem:[%s2932 + $0x38] sm:$0xff]
  %2941 = vmatprep.subr.mxu0 0.0
  %2942 = vmatpush1.msra.mxu0 0.0
  %2943 = vmatprep.subr.mxu0 0.0
  %2944 = vmatpush1.msra.mxu0 0.0
  %2945 = vmatprep.subr.mxu0 0.0
  %2946 = vmatpush1.msra.mxu0 0.0
  %2947 = vmatprep.subr.mxu0 0.0
  %2948 = vmatpush1.msra.mxu0 0.0
  %2949 = vmatprep.subr.mxu0 0.0
  %2950 = vmatpush1.msra.mxu0 0.0
  %2951 = vmatprep.subr.mxu0 0.0
  %2952 = vmatpush1.msra.mxu0 0.0
  %2953 = vmatprep.subr.mxu0 0.0
  %2954 = vmatpush1.msra.mxu0 0.0
  %2955 = vmatprep.subr.mxu0 0.0
  %2956 = vmatpush1.msra.mxu0 0.0
  %2957 = vmatprep.subr.mxu0 0.0
  %2958 = vmatpush1.msra.mxu0 %v2940
  %2959 = vmatprep.subr.mxu0 0.0
  %2960 = vmatpush1.msra.mxu0 %v2939
  %2961 = vmatprep.subr.mxu0 0.0
  %2962 = vmatpush1.msra.mxu0 %v2938
  %2963 = vmatprep.subr.mxu0 0.0
  %2964 = vmatpush1.msra.mxu0 %v2937
  %2965 = vmatprep.subr.mxu0 0.0
  %2966 = vmatpush1.msra.mxu0 %v2936
  %2967 = vmatprep.subr.mxu0 0.0
  %2968 = vmatpush1.msra.mxu0 %v2935
  %2969 = vmatprep.subr.mxu0 0.0
  %2970 = vmatpush1.msra.mxu0 %v2934
  %2971 = vmatprep.subr.mxu0 0.0
  %2972 = vmatpush1.msra.mxu0 %v2933
  %2973 = vmatprep.subr.mxu0 0.0
  %2974 = vmatpush2.msra.mxu0 0.0
  %2975 = vmatprep.subr.mxu0 0.0
  %2976 = vmatpush2.msra.mxu0 0.0
  %2977 = vmatprep.subr.mxu0 0.0
  %2978 = vmatpush2.msra.mxu0 0.0
  %2979 = vmatprep.subr.mxu0 0.0
  %2980 = vmatpush2.msra.mxu0 0.0
  %2981 = vmatprep.subr.mxu0 0.0
  %2982 = vmatpush2.msra.mxu0 0.0
  %2983 = vmatprep.subr.mxu0 0.0
  %2984 = vmatpush2.msra.mxu0 0.0
  %2985 = vmatprep.subr.mxu0 0.0
  %2986 = vmatpush2.msra.mxu0 0.0
  %2987 = vmatprep.subr.mxu0 0.0
  %2988 = vmatpush2.msra.mxu0 0.0
  %2989 = vmatprep.subr.mxu0 0.0
  %2990 = vmatpush2.msra.mxu0 0.0
  %2991 = vmatprep.subr.mxu0 0.0
  %2992 = vmatpush2.msra.mxu0 0.0
  %2993 = vmatprep.subr.mxu0 0.0
  %2994 = vmatpush2.msra.mxu0 0.0
  %2995 = vmatprep.subr.mxu0 0.0
  %2996 = vmatpush2.msra.mxu0 0.0
  %2997 = vmatprep.subr.mxu0 0.0
  %2998 = vmatpush2.msra.mxu0 0.0
  %2999 = vmatprep.subr.mxu0 0.0
  %3000 = vmatpush2.msra.mxu0 0.0
  %3001 = vmatprep.subr.mxu0 0.0
  %3002 = vmatpush2.msra.mxu0 0.0
  %3003 = vmatprep.subr.mxu0 0.0
  %3004 = vmatpush2.msra.mxu0 0.0
  %3005 = vmatprep.mubr.f32.mxu0 0.0
  %3006 = vmatmul.mubr.f32.gmra.mxu0 %v2836
  %v3007 = vpop.f32.mrf.mxu0
  %v3008 = vadd.f32 0.0, %v3007
  %v3009 = vpop.f32.mrf.mxu0
  %3010 = vmatprep.mubr.f32.mxu0 0.0
  %3011 = vmatmul.mubr.f32.gmra.mxu0 %v2839
  %v3012 = vpop.f32.mrf.mxu0
  %v3013 = vadd.f32 0.0, %v3012
  %v3014 = vpop.f32.mrf.mxu0
  %3015 = vmatprep.mubr.f32.mxu0 0.0
  %3016 = vmatmul.mubr.f32.gmra.mxu0 %v2842
  %v3017 = vpop.f32.mrf.mxu0
  %v3018 = vadd.f32 0.0, %v3017
  %v3019 = vpop.f32.mrf.mxu0
  %3020 = vmatprep.mubr.f32.mxu0 0.0
  %3021 = vmatmul.mubr.f32.gmra.mxu0 %v2845
  %v3022 = vpop.f32.mrf.mxu0
  %v3023 = vadd.f32 0.0, %v3022
  %v3024 = vpop.f32.mrf.mxu0
  %3025 = vdwg.mxu0
  %v3027 = vsel %vm86, %v2802, 0
  %v3030 = vsel %vm86, %v2803, 0
  %v3033 = vsel %vm86, %v2804, 0
  %v3036 = vsel %vm86, %v2805, 0
  %3038 = vmatprep.subr.mxu0 0.0
  %3039 = vmatpush1.msra.mxu0 0.0
  %3040 = vmatprep.subr.mxu0 0.0
  %3041 = vmatpush1.msra.mxu0 0.0
  %3042 = vmatprep.subr.mxu0 0.0
  %3043 = vmatpush1.msra.mxu0 0.0
  %3044 = vmatprep.subr.mxu0 0.0
  %3045 = vmatpush1.msra.mxu0 0.0
  %3046 = vmatprep.subr.mxu0 0.0
  %3047 = vmatpush1.msra.mxu0 0.0
  %3048 = vmatprep.subr.mxu0 0.0
  %3049 = vmatpush1.msra.mxu0 0.0
  %3050 = vmatprep.subr.mxu0 0.0
  %3051 = vmatpush1.msra.mxu0 0.0
  %3052 = vmatprep.subr.mxu0 0.0
  %3053 = vmatpush1.msra.mxu0 0.0
  %3054 = vmatprep.subr.mxu0 0.0
  %3055 = vmatpush1.msra.mxu0 %v2813
  %3056 = vmatprep.subr.mxu0 0.0
  %3057 = vmatpush1.msra.mxu0 %v2812
  %3058 = vmatprep.subr.mxu0 0.0
  %3059 = vmatpush1.msra.mxu0 %v2811
  %3060 = vmatprep.subr.mxu0 0.0
  %3061 = vmatpush1.msra.mxu0 %v2810
  %3062 = vmatprep.subr.mxu0 0.0
  %3063 = vmatpush1.msra.mxu0 %v2809
  %3064 = vmatprep.subr.mxu0 0.0
  %3065 = vmatpush1.msra.mxu0 %v2808
  %3066 = vmatprep.subr.mxu0 0.0
  %3067 = vmatpush1.msra.mxu0 %v2807
  %3068 = vmatprep.subr.mxu0 0.0
  %3069 = vmatpush1.msra.mxu0 %v2806
  %3070 = vmatprep.subr.mxu0 0.0
  %3071 = vmatpush2.msra.mxu0 0.0
  %3072 = vmatprep.subr.mxu0 0.0
  %3073 = vmatpush2.msra.mxu0 0.0
  %3074 = vmatprep.subr.mxu0 0.0
  %3075 = vmatpush2.msra.mxu0 0.0
  %3076 = vmatprep.subr.mxu0 0.0
  %3077 = vmatpush2.msra.mxu0 0.0
  %3078 = vmatprep.subr.mxu0 0.0
  %3079 = vmatpush2.msra.mxu0 0.0
  %3080 = vmatprep.subr.mxu0 0.0
  %3081 = vmatpush2.msra.mxu0 0.0
  %3082 = vmatprep.subr.mxu0 0.0
  %3083 = vmatpush2.msra.mxu0 0.0
  %3084 = vmatprep.subr.mxu0 0.0
  %3085 = vmatpush2.msra.mxu0 0.0
  %3086 = vmatprep.subr.mxu0 0.0
  %3087 = vmatpush2.msra.mxu0 0.0
  %3088 = vmatprep.subr.mxu0 0.0
  %3089 = vmatpush2.msra.mxu0 0.0
  %3090 = vmatprep.subr.mxu0 0.0
  %3091 = vmatpush2.msra.mxu0 0.0
  %3092 = vmatprep.subr.mxu0 0.0
  %3093 = vmatpush2.msra.mxu0 0.0
  %3094 = vmatprep.subr.mxu0 0.0
  %3095 = vmatpush2.msra.mxu0 0.0
  %3096 = vmatprep.subr.mxu0 0.0
  %3097 = vmatpush2.msra.mxu0 0.0
  %3098 = vmatprep.subr.mxu0 0.0
  %3099 = vmatpush2.msra.mxu0 0.0
  %3100 = vmatprep.subr.mxu0 0.0
  %3101 = vmatpush2.msra.mxu0 0.0
  %3102 = vmatprep.mubr.f32.mxu0 0.0
  %3103 = vmatmul.mubr.f32.gmra.mxu0 %v3027
  %v3104 = vpop.f32.mrf.mxu0
  %v3105 = vadd.f32 %v2914, %v3104
  %v3106 = vpop.f32.mrf.mxu0
  %3107 = vmatprep.mubr.f32.mxu0 0.0
  %3108 = vmatmul.mubr.f32.gmra.mxu0 %v3030
  %v3109 = vpop.f32.mrf.mxu0
  %v3110 = vadd.f32 %v2919, %v3109
  %v3111 = vpop.f32.mrf.mxu0
  %3112 = vmatprep.mubr.f32.mxu0 0.0
  %3113 = vmatmul.mubr.f32.gmra.mxu0 %v3033
  %v3114 = vpop.f32.mrf.mxu0
  %v3115 = vadd.f32 %v2924, %v3114
  %v3116 = vpop.f32.mrf.mxu0
  %3117 = vmatprep.mubr.f32.mxu0 0.0
  %3118 = vmatmul.mubr.f32.gmra.mxu0 %v3036
  %v3119 = vpop.f32.mrf.mxu0
  %v3120 = vadd.f32 %v2929, %v3119
  %v3121 = vpop.f32.mrf.mxu0
  %3122 = vdwg.mxu0
  %3123 = vmatprep.subr.mxu0 0.0
  %3124 = vmatpush1.msra.mxu0 0.0
  %3125 = vmatprep.subr.mxu0 0.0
  %3126 = vmatpush1.msra.mxu0 0.0
  %3127 = vmatprep.subr.mxu0 0.0
  %3128 = vmatpush1.msra.mxu0 0.0
  %3129 = vmatprep.subr.mxu0 0.0
  %3130 = vmatpush1.msra.mxu0 0.0
  %3131 = vmatprep.subr.mxu0 0.0
  %3132 = vmatpush1.msra.mxu0 0.0
  %3133 = vmatprep.subr.mxu0 0.0
  %3134 = vmatpush1.msra.mxu0 0.0
  %3135 = vmatprep.subr.mxu0 0.0
  %3136 = vmatpush1.msra.mxu0 0.0
  %3137 = vmatprep.subr.mxu0 0.0
  %3138 = vmatpush1.msra.mxu0 0.0
  %3139 = vmatprep.subr.mxu0 0.0
  %3140 = vmatpush1.msra.mxu0 %v2821
  %3141 = vmatprep.subr.mxu0 0.0
  %3142 = vmatpush1.msra.mxu0 %v2820
  %3143 = vmatprep.subr.mxu0 0.0
  %3144 = vmatpush1.msra.mxu0 %v2819
  %3145 = vmatprep.subr.mxu0 0.0
  %3146 = vmatpush1.msra.mxu0 %v2818
  %3147 = vmatprep.subr.mxu0 0.0
  %3148 = vmatpush1.msra.mxu0 %v2817
  %3149 = vmatprep.subr.mxu0 0.0
  %3150 = vmatpush1.msra.mxu0 %v2816
  %3151 = vmatprep.subr.mxu0 0.0
  %3152 = vmatpush1.msra.mxu0 %v2815
  %3153 = vmatprep.subr.mxu0 0.0
  %3154 = vmatpush1.msra.mxu0 %v2814
  %3155 = vmatprep.subr.mxu0 0.0
  %3156 = vmatpush2.msra.mxu0 0.0
  %3157 = vmatprep.subr.mxu0 0.0
  %3158 = vmatpush2.msra.mxu0 0.0
  %3159 = vmatprep.subr.mxu0 0.0
  %3160 = vmatpush2.msra.mxu0 0.0
  %3161 = vmatprep.subr.mxu0 0.0
  %3162 = vmatpush2.msra.mxu0 0.0
  %3163 = vmatprep.subr.mxu0 0.0
  %3164 = vmatpush2.msra.mxu0 0.0
  %3165 = vmatprep.subr.mxu0 0.0
  %3166 = vmatpush2.msra.mxu0 0.0
  %3167 = vmatprep.subr.mxu0 0.0
  %3168 = vmatpush2.msra.mxu0 0.0
  %3169 = vmatprep.subr.mxu0 0.0
  %3170 = vmatpush2.msra.mxu0 0.0
  %3171 = vmatprep.subr.mxu0 0.0
  %3172 = vmatpush2.msra.mxu0 0.0
  %3173 = vmatprep.subr.mxu0 0.0
  %3174 = vmatpush2.msra.mxu0 0.0
  %3175 = vmatprep.subr.mxu0 0.0
  %3176 = vmatpush2.msra.mxu0 0.0
  %3177 = vmatprep.subr.mxu0 0.0
  %3178 = vmatpush2.msra.mxu0 0.0
  %3179 = vmatprep.subr.mxu0 0.0
  %3180 = vmatpush2.msra.mxu0 0.0
  %3181 = vmatprep.subr.mxu0 0.0
  %3182 = vmatpush2.msra.mxu0 0.0
  %3183 = vmatprep.subr.mxu0 0.0
  %3184 = vmatpush2.msra.mxu0 0.0
  %3185 = vmatprep.subr.mxu0 0.0
  %3186 = vmatpush2.msra.mxu0 0.0
  %3187 = vmatprep.mubr.f32.mxu0 0.0
  %3188 = vmatmul.mubr.f32.gmra.mxu0 %v3027
  %v3189 = vpop.f32.mrf.mxu0
  %v3190 = vadd.f32 %v3008, %v3189
  %v3191 = vpop.f32.mrf.mxu0
  %3192 = vmatprep.mubr.f32.mxu0 0.0
  %3193 = vmatmul.mubr.f32.gmra.mxu0 %v3030
  %v3194 = vpop.f32.mrf.mxu0
  %v3195 = vadd.f32 %v3013, %v3194
  %v3196 = vpop.f32.mrf.mxu0
  %3197 = vmatprep.mubr.f32.mxu0 0.0
  %3198 = vmatmul.mubr.f32.gmra.mxu0 %v3033
  %v3199 = vpop.f32.mrf.mxu0
  %v3200 = vadd.f32 %v3018, %v3199
  %v3201 = vpop.f32.mrf.mxu0
  %3202 = vmatprep.mubr.f32.mxu0 0.0
  %3203 = vmatmul.mubr.f32.gmra.mxu0 %v3036
  %v3204 = vpop.f32.mrf.mxu0
  %v3205 = vadd.f32 %v3023, %v3204
  %v3206 = vpop.f32.mrf.mxu0
  %3207 = vdwg.mxu0
  %v3208 = vld [vmem:[#allocation5 + $0x2] sm:$0xff]
  %v3209 = vld [vmem:[#allocation5 + $0xa] sm:$0xff]
  %v3210 = vld [vmem:[#allocation5 + $0x12] sm:$0xff]
  %v3211 = vld [vmem:[#allocation5 + $0x1a] sm:$0x3f]
  %s3212 = scalar_lea.vmem %s10, 128
  %v3213 = vld [vmem:[%s3212] sm:$0xff]
  %v3214 = vld [vmem:[%s3212 + $0x8] sm:$0xff]
  %v3215 = vld [vmem:[%s3212 + $0x10] sm:$0xff]
  %v3216 = vld [vmem:[%s3212 + $0x18] sm:$0xff]
  %v3217 = vld [vmem:[%s3212 + $0x20] sm:$0xff]
  %v3218 = vld [vmem:[%s3212 + $0x28] sm:$0xff]
  %v3219 = vld [vmem:[%s3212 + $0x30] sm:$0xff]
  %v3220 = vld [vmem:[%s3212 + $0x38] sm:$0xff]
  %v3222 = vsel %vm86, %v3208, 0
  %v3225 = vsel %vm86, %v3209, 0
  %v3228 = vsel %vm86, %v3210, 0
  %v3231 = vsel %vm86, %v3211, 0
  %3233 = vmatprep.subr.mxu0 0.0
  %3234 = vmatpush1.msra.mxu0 0.0
  %3235 = vmatprep.subr.mxu0 0.0
  %3236 = vmatpush1.msra.mxu0 0.0
  %3237 = vmatprep.subr.mxu0 0.0
  %3238 = vmatpush1.msra.mxu0 0.0
  %3239 = vmatprep.subr.mxu0 0.0
  %3240 = vmatpush1.msra.mxu0 0.0
  %3241 = vmatprep.subr.mxu0 0.0
  %3242 = vmatpush1.msra.mxu0 0.0
  %3243 = vmatprep.subr.mxu0 0.0
  %3244 = vmatpush1.msra.mxu0 0.0
  %3245 = vmatprep.subr.mxu0 0.0
  %3246 = vmatpush1.msra.mxu0 0.0
  %3247 = vmatprep.subr.mxu0 0.0
  %3248 = vmatpush1.msra.mxu0 0.0
  %3249 = vmatprep.subr.mxu0 0.0
  %3250 = vmatpush1.msra.mxu0 %v3220
  %3251 = vmatprep.subr.mxu0 0.0
  %3252 = vmatpush1.msra.mxu0 %v3219
  %3253 = vmatprep.subr.mxu0 0.0
  %3254 = vmatpush1.msra.mxu0 %v3218
  %3255 = vmatprep.subr.mxu0 0.0
  %3256 = vmatpush1.msra.mxu0 %v3217
  %3257 = vmatprep.subr.mxu0 0.0
  %3258 = vmatpush1.msra.mxu0 %v3216
  %3259 = vmatprep.subr.mxu0 0.0
  %3260 = vmatpush1.msra.mxu0 %v3215
  %3261 = vmatprep.subr.mxu0 0.0
  %3262 = vmatpush1.msra.mxu0 %v3214
  %3263 = vmatprep.subr.mxu0 0.0
  %3264 = vmatpush1.msra.mxu0 %v3213
  %3265 = vmatprep.subr.mxu0 0.0
  %3266 = vmatpush2.msra.mxu0 0.0
  %3267 = vmatprep.subr.mxu0 0.0
  %3268 = vmatpush2.msra.mxu0 0.0
  %3269 = vmatprep.subr.mxu0 0.0
  %3270 = vmatpush2.msra.mxu0 0.0
  %3271 = vmatprep.subr.mxu0 0.0
  %3272 = vmatpush2.msra.mxu0 0.0
  %3273 = vmatprep.subr.mxu0 0.0
  %3274 = vmatpush2.msra.mxu0 0.0
  %3275 = vmatprep.subr.mxu0 0.0
  %3276 = vmatpush2.msra.mxu0 0.0
  %3277 = vmatprep.subr.mxu0 0.0
  %3278 = vmatpush2.msra.mxu0 0.0
  %3279 = vmatprep.subr.mxu0 0.0
  %3280 = vmatpush2.msra.mxu0 0.0
  %3281 = vmatprep.subr.mxu0 0.0
  %3282 = vmatpush2.msra.mxu0 0.0
  %3283 = vmatprep.subr.mxu0 0.0
  %3284 = vmatpush2.msra.mxu0 0.0
  %3285 = vmatprep.subr.mxu0 0.0
  %3286 = vmatpush2.msra.mxu0 0.0
  %3287 = vmatprep.subr.mxu0 0.0
  %3288 = vmatpush2.msra.mxu0 0.0
  %3289 = vmatprep.subr.mxu0 0.0
  %3290 = vmatpush2.msra.mxu0 0.0
  %3291 = vmatprep.subr.mxu0 0.0
  %3292 = vmatpush2.msra.mxu0 0.0
  %3293 = vmatprep.subr.mxu0 0.0
  %3294 = vmatpush2.msra.mxu0 0.0
  %3295 = vmatprep.subr.mxu0 0.0
  %3296 = vmatpush2.msra.mxu0 0.0
  %3297 = vmatprep.mubr.f32.mxu0 0.0
  %3298 = vmatmul.mubr.f32.gmra.mxu0 %v3222
  %v3299 = vpop.f32.mrf.mxu0
  %v3300 = vadd.f32 0.0, %v3299
  %v3301 = vpop.f32.mrf.mxu0
  %3302 = vmatprep.mubr.f32.mxu0 0.0
  %3303 = vmatmul.mubr.f32.gmra.mxu0 %v3225
  %v3304 = vpop.f32.mrf.mxu0
  %v3305 = vadd.f32 0.0, %v3304
  %v3306 = vpop.f32.mrf.mxu0
  %3307 = vmatprep.mubr.f32.mxu0 0.0
  %3308 = vmatmul.mubr.f32.gmra.mxu0 %v3228
  %v3309 = vpop.f32.mrf.mxu0
  %v3310 = vadd.f32 0.0, %v3309
  %v3311 = vpop.f32.mrf.mxu0
  %3312 = vmatprep.mubr.f32.mxu0 0.0
  %3313 = vmatmul.mubr.f32.gmra.mxu0 %v3231
  %v3314 = vpop.f32.mrf.mxu0
  %v3315 = vadd.f32 0.0, %v3314
  %v3316 = vpop.f32.mrf.mxu0
  %3317 = vdwg.mxu0
  %s3318 = scalar_lea.vmem %s11, 128
  %v3319 = vld [vmem:[%s3318] sm:$0xff]
  %v3320 = vld [vmem:[%s3318 + $0x8] sm:$0xff]
  %v3321 = vld [vmem:[%s3318 + $0x10] sm:$0xff]
  %v3322 = vld [vmem:[%s3318 + $0x18] sm:$0xff]
  %v3323 = vld [vmem:[%s3318 + $0x20] sm:$0xff]
  %v3324 = vld [vmem:[%s3318 + $0x28] sm:$0xff]
  %v3325 = vld [vmem:[%s3318 + $0x30] sm:$0xff]
  %v3326 = vld [vmem:[%s3318 + $0x38] sm:$0xff]
  %3327 = vmatprep.subr.mxu0 0.0
  %3328 = vmatpush1.msra.mxu0 0.0
  %3329 = vmatprep.subr.mxu0 0.0
  %3330 = vmatpush1.msra.mxu0 0.0
  %3331 = vmatprep.subr.mxu0 0.0
  %3332 = vmatpush1.msra.mxu0 0.0
  %3333 = vmatprep.subr.mxu0 0.0
  %3334 = vmatpush1.msra.mxu0 0.0
  %3335 = vmatprep.subr.mxu0 0.0
  %3336 = vmatpush1.msra.mxu0 0.0
  %3337 = vmatprep.subr.mxu0 0.0
  %3338 = vmatpush1.msra.mxu0 0.0
  %3339 = vmatprep.subr.mxu0 0.0
  %3340 = vmatpush1.msra.mxu0 0.0
  %3341 = vmatprep.subr.mxu0 0.0
  %3342 = vmatpush1.msra.mxu0 0.0
  %3343 = vmatprep.subr.mxu0 0.0
  %3344 = vmatpush1.msra.mxu0 %v3326
  %3345 = vmatprep.subr.mxu0 0.0
  %3346 = vmatpush1.msra.mxu0 %v3325
  %3347 = vmatprep.subr.mxu0 0.0
  %3348 = vmatpush1.msra.mxu0 %v3324
  %3349 = vmatprep.subr.mxu0 0.0
  %3350 = vmatpush1.msra.mxu0 %v3323
  %3351 = vmatprep.subr.mxu0 0.0
  %3352 = vmatpush1.msra.mxu0 %v3322
  %3353 = vmatprep.subr.mxu0 0.0
  %3354 = vmatpush1.msra.mxu0 %v3321
  %3355 = vmatprep.subr.mxu0 0.0
  %3356 = vmatpush1.msra.mxu0 %v3320
  %3357 = vmatprep.subr.mxu0 0.0
  %3358 = vmatpush1.msra.mxu0 %v3319
  %3359 = vmatprep.subr.mxu0 0.0
  %3360 = vmatpush2.msra.mxu0 0.0
  %3361 = vmatprep.subr.mxu0 0.0
  %3362 = vmatpush2.msra.mxu0 0.0
  %3363 = vmatprep.subr.mxu0 0.0
  %3364 = vmatpush2.msra.mxu0 0.0
  %3365 = vmatprep.subr.mxu0 0.0
  %3366 = vmatpush2.msra.mxu0 0.0
  %3367 = vmatprep.subr.mxu0 0.0
  %3368 = vmatpush2.msra.mxu0 0.0
  %3369 = vmatprep.subr.mxu0 0.0
  %3370 = vmatpush2.msra.mxu0 0.0
  %3371 = vmatprep.subr.mxu0 0.0
  %3372 = vmatpush2.msra.mxu0 0.0
  %3373 = vmatprep.subr.mxu0 0.0
  %3374 = vmatpush2.msra.mxu0 0.0
  %3375 = vmatprep.subr.mxu0 0.0
  %3376 = vmatpush2.msra.mxu0 0.0
  %3377 = vmatprep.subr.mxu0 0.0
  %3378 = vmatpush2.msra.mxu0 0.0
  %3379 = vmatprep.subr.mxu0 0.0
  %3380 = vmatpush2.msra.mxu0 0.0
  %3381 = vmatprep.subr.mxu0 0.0
  %3382 = vmatpush2.msra.mxu0 0.0
  %3383 = vmatprep.subr.mxu0 0.0
  %3384 = vmatpush2.msra.mxu0 0.0
  %3385 = vmatprep.subr.mxu0 0.0
  %3386 = vmatpush2.msra.mxu0 0.0
  %3387 = vmatprep.subr.mxu0 0.0
  %3388 = vmatpush2.msra.mxu0 0.0
  %3389 = vmatprep.subr.mxu0 0.0
  %3390 = vmatpush2.msra.mxu0 0.0
  %3391 = vmatprep.mubr.f32.mxu0 0.0
  %3392 = vmatmul.mubr.f32.gmra.mxu0 %v3222
  %v3393 = vpop.f32.mrf.mxu0
  %v3394 = vadd.f32 0.0, %v3393
  %v3395 = vpop.f32.mrf.mxu0
  %3396 = vmatprep.mubr.f32.mxu0 0.0
  %3397 = vmatmul.mubr.f32.gmra.mxu0 %v3225
  %v3398 = vpop.f32.mrf.mxu0
  %v3399 = vadd.f32 0.0, %v3398
  %v3400 = vpop.f32.mrf.mxu0
  %3401 = vmatprep.mubr.f32.mxu0 0.0
  %3402 = vmatmul.mubr.f32.gmra.mxu0 %v3228
  %v3403 = vpop.f32.mrf.mxu0
  %v3404 = vadd.f32 0.0, %v3403
  %v3405 = vpop.f32.mrf.mxu0
  %3406 = vmatprep.mubr.f32.mxu0 0.0
  %3407 = vmatmul.mubr.f32.gmra.mxu0 %v3231
  %v3408 = vpop.f32.mrf.mxu0
  %v3409 = vadd.f32 0.0, %v3408
  %v3410 = vpop.f32.mrf.mxu0
  %3411 = vdwg.mxu0
  %v3412 = vadd.f32 %v3105, %v3300
  %v3413 = vadd.f32 %v3110, %v3305
  %v3414 = vadd.f32 %v3115, %v3310
  %v3415 = vadd.f32 %v3120, %v3315
  %v3416 = vadd.f32 %v3190, %v3394
  %v3417 = vadd.f32 %v3195, %v3399
  %v3418 = vadd.f32 %v3200, %v3404
  %v3419 = vadd.f32 %v3205, %v3409
  %v3420 = vld [vmem:[%s12] sm:$0x1]
  %v3422 = vlaneseq
  %v3423 = vshrl.u32 %v3422, 7
  %v3424 = vsub.s32 0, %v3423
  %v3425 = vrot.slane %v3420, %v3424
  %v3427 = vadd.f32 %v3412, %v3425
  %v3428 = vadd.f32 %v3413, %v3425
  %v3429 = vadd.f32 %v3414, %v3425
  %v3430 = vadd.f32 %v3415, %v3425
  %vm3431 = vcmp.ge.f32.partialorder %v3427, 0.0
  %vm3432 = vcmp.ge.f32.partialorder %v3428, 0.0
  %vm3433 = vcmp.ge.f32.partialorder %v3429, 0.0
  %vm3434 = vcmp.ge.f32.partialorder %v3430, 0.0
  %v3435 = vmul.f32 %v3427, 0.15
  %v3436 = vmul.f32 %v3428, 0.15
  %v3437 = vmul.f32 %v3429, 0.15
  %v3438 = vmul.f32 %v3430, 0.15
  %v3439 = vsel %vm3431, %v3427, %v3435
  %v3440 = vsel %vm3432, %v3428, %v3436
  %v3441 = vsel %vm3433, %v3429, %v3437
  %v3442 = vsel %vm3434, %v3430, %v3438
  %v3443 = vadd.f32 %v3416, %v3425
  %v3444 = vadd.f32 %v3417, %v3425
  %v3445 = vadd.f32 %v3418, %v3425
  %v3446 = vadd.f32 %v3419, %v3425
  %vm3447 = vcmp.ge.f32.partialorder %v3443, 0.0
  %vm3448 = vcmp.ge.f32.partialorder %v3444, 0.0
  %vm3449 = vcmp.ge.f32.partialorder %v3445, 0.0
  %vm3450 = vcmp.ge.f32.partialorder %v3446, 0.0
  %v3451 = vmul.f32 %v3443, 0.15
  %v3452 = vmul.f32 %v3444, 0.15
  %v3453 = vmul.f32 %v3445, 0.15
  %v3454 = vmul.f32 %v3446, 0.15
  %v3455 = vsel %vm3447, %v3443, %v3451
  %v3456 = vsel %vm3448, %v3444, %v3452
  %v3457 = vsel %vm3449, %v3445, %v3453
  %v3458 = vsel %vm3450, %v3446, %v3454
  %v3459 = vmax.f32 %v3439, %v3455
  %v3460 = vmax.f32 %v3440, %v3456
  %v3461 = vmax.f32 %v3441, %v3457
  %v3462 = vmax.f32 %v3442, %v3458
  %3463 = vst.msk [vmem:[#allocation10] sm:$0xff] %vm86, %v3459
  %3464 = vst.msk [vmem:[#allocation10 + $0x8] sm:$0xff] %vm86, %v3460
  %3465 = vst.msk [vmem:[#allocation10 + $0x10] sm:$0xff] %vm86, %v3461
  %3466 = vst.msk [vmem:[#allocation10 + $0x18] sm:$0x3f] %vm1183, %v3462
  %v3467 = vld [vmem:[#allocation10] sm:$0x1]
  %v3468 = vld [vmem:[#allocation10 + $0x1] sm:$0x1]
  %v3469 = vmax.f32 %v3467, %v3468
  %vm3470 = vcmask 516096
  %3471 = vst.msk [vmem:[#allocation6 + $0x1] sm:$0x1] %vm3470, %v3469
  %v3472 = vld [vmem:[#allocation10 + $0x8] sm:$0x1]
  %v3473 = vld [vmem:[#allocation10 + $0x9] sm:$0x1]
  %v3474 = vmax.f32 %v3472, %v3473
  %3475 = vst.msk [vmem:[#allocation6 + $0x9] sm:$0x1] %vm3470, %v3474
  %v3476 = vld [vmem:[#allocation10 + $0x10] sm:$0x1]
  %v3477 = vld [vmem:[#allocation10 + $0x11] sm:$0x1]
  %v3478 = vmax.f32 %v3476, %v3477
  %3479 = vst.msk [vmem:[#allocation6 + $0x11] sm:$0x1] %vm3470, %v3478
  %v3480 = vld [vmem:[#allocation10 + $0x18] sm:$0x1]
  %v3481 = vld [vmem:[#allocation10 + $0x19] sm:$0x1]
  %v3482 = vmax.f32 %v3480, %v3481
  %3483 = vst.msk [vmem:[#allocation6 + $0x19] sm:$0x1] %vm3470, %v3482
  %v3484 = vld [vmem:[#allocation6] sm:$0xff]
  %v3485 = vld [vmem:[#allocation6 + $0x8] sm:$0xff]
  %v3486 = vld [vmem:[#allocation6 + $0x10] sm:$0xff]
  %v3487 = vld [vmem:[#allocation6 + $0x18] sm:$0x3f]
  %v3488 = vld [vmem:[%s13] sm:$0xff]
  %v3489 = vld [vmem:[%s13 + $0x8] sm:$0xff]
  %v3490 = vld [vmem:[%s13 + $0x10] sm:$0xff]
  %v3491 = vld [vmem:[%s13 + $0x18] sm:$0xff]
  %v3492 = vld [vmem:[%s13 + $0x20] sm:$0xff]
  %v3493 = vld [vmem:[%s13 + $0x28] sm:$0xff]
  %v3494 = vld [vmem:[%s13 + $0x30] sm:$0xff]
  %v3495 = vld [vmem:[%s13 + $0x38] sm:$0xff]
  %v3496 = vld [vmem:[#allocation6 + $0x1] sm:$0xff]
  %v3497 = vld [vmem:[#allocation6 + $0x9] sm:$0xff]
  %v3498 = vld [vmem:[#allocation6 + $0x11] sm:$0xff]
  %v3499 = vld [vmem:[#allocation6 + $0x19] sm:$0x3f]
  %s3500 = scalar_lea.vmem %s13, 64
  %v3501 = vld [vmem:[%s3500] sm:$0xff]
  %v3502 = vld [vmem:[%s3500 + $0x8] sm:$0xff]
  %v3503 = vld [vmem:[%s3500 + $0x10] sm:$0xff]
  %v3504 = vld [vmem:[%s3500 + $0x18] sm:$0xff]
  %v3505 = vld [vmem:[%s3500 + $0x20] sm:$0xff]
  %v3506 = vld [vmem:[%s3500 + $0x28] sm:$0xff]
  %v3507 = vld [vmem:[%s3500 + $0x30] sm:$0xff]
  %v3508 = vld [vmem:[%s3500 + $0x38] sm:$0xff]
  %v3510 = vsel %vm86, %v3496, 0
  %v3513 = vsel %vm86, %v3497, 0
  %v3516 = vsel %vm86, %v3498, 0
  %v3519 = vsel %vm86, %v3499, 0
  %3521 = vmatprep.subr.mxu0 0.0
  %3522 = vmatpush1.msra.mxu0 0.0
  %3523 = vmatprep.subr.mxu0 0.0
  %3524 = vmatpush1.msra.mxu0 0.0
  %3525 = vmatprep.subr.mxu0 0.0
  %3526 = vmatpush1.msra.mxu0 0.0
  %3527 = vmatprep.subr.mxu0 0.0
  %3528 = vmatpush1.msra.mxu0 0.0
  %3529 = vmatprep.subr.mxu0 0.0
  %3530 = vmatpush1.msra.mxu0 0.0
  %3531 = vmatprep.subr.mxu0 0.0
  %3532 = vmatpush1.msra.mxu0 0.0
  %3533 = vmatprep.subr.mxu0 0.0
  %3534 = vmatpush1.msra.mxu0 0.0
  %3535 = vmatprep.subr.mxu0 0.0
  %3536 = vmatpush1.msra.mxu0 0.0
  %3537 = vmatprep.subr.mxu0 0.0
  %3538 = vmatpush1.msra.mxu0 %v3508
  %3539 = vmatprep.subr.mxu0 0.0
  %3540 = vmatpush1.msra.mxu0 %v3507
  %3541 = vmatprep.subr.mxu0 0.0
  %3542 = vmatpush1.msra.mxu0 %v3506
  %3543 = vmatprep.subr.mxu0 0.0
  %3544 = vmatpush1.msra.mxu0 %v3505
  %3545 = vmatprep.subr.mxu0 0.0
  %3546 = vmatpush1.msra.mxu0 %v3504
  %3547 = vmatprep.subr.mxu0 0.0
  %3548 = vmatpush1.msra.mxu0 %v3503
  %3549 = vmatprep.subr.mxu0 0.0
  %3550 = vmatpush1.msra.mxu0 %v3502
  %3551 = vmatprep.subr.mxu0 0.0
  %3552 = vmatpush1.msra.mxu0 %v3501
  %3553 = vmatprep.subr.mxu0 0.0
  %3554 = vmatpush2.msra.mxu0 0.0
  %3555 = vmatprep.subr.mxu0 0.0
  %3556 = vmatpush2.msra.mxu0 0.0
  %3557 = vmatprep.subr.mxu0 0.0
  %3558 = vmatpush2.msra.mxu0 0.0
  %3559 = vmatprep.subr.mxu0 0.0
  %3560 = vmatpush2.msra.mxu0 0.0
  %3561 = vmatprep.subr.mxu0 0.0
  %3562 = vmatpush2.msra.mxu0 0.0
  %3563 = vmatprep.subr.mxu0 0.0
  %3564 = vmatpush2.msra.mxu0 0.0
  %3565 = vmatprep.subr.mxu0 0.0
  %3566 = vmatpush2.msra.mxu0 0.0
  %3567 = vmatprep.subr.mxu0 0.0
  %3568 = vmatpush2.msra.mxu0 0.0
  %3569 = vmatprep.subr.mxu0 0.0
  %3570 = vmatpush2.msra.mxu0 0.0
  %3571 = vmatprep.subr.mxu0 0.0
  %3572 = vmatpush2.msra.mxu0 0.0
  %3573 = vmatprep.subr.mxu0 0.0
  %3574 = vmatpush2.msra.mxu0 0.0
  %3575 = vmatprep.subr.mxu0 0.0
  %3576 = vmatpush2.msra.mxu0 0.0
  %3577 = vmatprep.subr.mxu0 0.0
  %3578 = vmatpush2.msra.mxu0 0.0
  %3579 = vmatprep.subr.mxu0 0.0
  %3580 = vmatpush2.msra.mxu0 0.0
  %3581 = vmatprep.subr.mxu0 0.0
  %3582 = vmatpush2.msra.mxu0 0.0
  %3583 = vmatprep.subr.mxu0 0.0
  %3584 = vmatpush2.msra.mxu0 0.0
  %3585 = vmatprep.mubr.f32.mxu0 0.0
  %3586 = vmatmul.mubr.f32.gmra.mxu0 %v3510
  %v3587 = vpop.f32.mrf.mxu0
  %v3588 = vadd.f32 0.0, %v3587
  %v3589 = vpop.f32.mrf.mxu0
  %3590 = vmatprep.mubr.f32.mxu0 0.0
  %3591 = vmatmul.mubr.f32.gmra.mxu0 %v3513
  %v3592 = vpop.f32.mrf.mxu0
  %v3593 = vadd.f32 0.0, %v3592
  %v3594 = vpop.f32.mrf.mxu0
  %3595 = vmatprep.mubr.f32.mxu0 0.0
  %3596 = vmatmul.mubr.f32.gmra.mxu0 %v3516
  %v3597 = vpop.f32.mrf.mxu0
  %v3598 = vadd.f32 0.0, %v3597
  %v3599 = vpop.f32.mrf.mxu0
  %3600 = vmatprep.mubr.f32.mxu0 0.0
  %3601 = vmatmul.mubr.f32.gmra.mxu0 %v3519
  %v3602 = vpop.f32.mrf.mxu0
  %v3603 = vadd.f32 0.0, %v3602
  %v3604 = vpop.f32.mrf.mxu0
  %3605 = vdwg.mxu0
  %v3607 = vsel %vm86, %v3484, 0
  %v3610 = vsel %vm86, %v3485, 0
  %v3613 = vsel %vm86, %v3486, 0
  %v3616 = vsel %vm86, %v3487, 0
  %3618 = vmatprep.subr.mxu0 0.0
  %3619 = vmatpush1.msra.mxu0 0.0
  %3620 = vmatprep.subr.mxu0 0.0
  %3621 = vmatpush1.msra.mxu0 0.0
  %3622 = vmatprep.subr.mxu0 0.0
  %3623 = vmatpush1.msra.mxu0 0.0
  %3624 = vmatprep.subr.mxu0 0.0
  %3625 = vmatpush1.msra.mxu0 0.0
  %3626 = vmatprep.subr.mxu0 0.0
  %3627 = vmatpush1.msra.mxu0 0.0
  %3628 = vmatprep.subr.mxu0 0.0
  %3629 = vmatpush1.msra.mxu0 0.0
  %3630 = vmatprep.subr.mxu0 0.0
  %3631 = vmatpush1.msra.mxu0 0.0
  %3632 = vmatprep.subr.mxu0 0.0
  %3633 = vmatpush1.msra.mxu0 0.0
  %3634 = vmatprep.subr.mxu0 0.0
  %3635 = vmatpush1.msra.mxu0 %v3495
  %3636 = vmatprep.subr.mxu0 0.0
  %3637 = vmatpush1.msra.mxu0 %v3494
  %3638 = vmatprep.subr.mxu0 0.0
  %3639 = vmatpush1.msra.mxu0 %v3493
  %3640 = vmatprep.subr.mxu0 0.0
  %3641 = vmatpush1.msra.mxu0 %v3492
  %3642 = vmatprep.subr.mxu0 0.0
  %3643 = vmatpush1.msra.mxu0 %v3491
  %3644 = vmatprep.subr.mxu0 0.0
  %3645 = vmatpush1.msra.mxu0 %v3490
  %3646 = vmatprep.subr.mxu0 0.0
  %3647 = vmatpush1.msra.mxu0 %v3489
  %3648 = vmatprep.subr.mxu0 0.0
  %3649 = vmatpush1.msra.mxu0 %v3488
  %3650 = vmatprep.subr.mxu0 0.0
  %3651 = vmatpush2.msra.mxu0 0.0
  %3652 = vmatprep.subr.mxu0 0.0
  %3653 = vmatpush2.msra.mxu0 0.0
  %3654 = vmatprep.subr.mxu0 0.0
  %3655 = vmatpush2.msra.mxu0 0.0
  %3656 = vmatprep.subr.mxu0 0.0
  %3657 = vmatpush2.msra.mxu0 0.0
  %3658 = vmatprep.subr.mxu0 0.0
  %3659 = vmatpush2.msra.mxu0 0.0
  %3660 = vmatprep.subr.mxu0 0.0
  %3661 = vmatpush2.msra.mxu0 0.0
  %3662 = vmatprep.subr.mxu0 0.0
  %3663 = vmatpush2.msra.mxu0 0.0
  %3664 = vmatprep.subr.mxu0 0.0
  %3665 = vmatpush2.msra.mxu0 0.0
  %3666 = vmatprep.subr.mxu0 0.0
  %3667 = vmatpush2.msra.mxu0 0.0
  %3668 = vmatprep.subr.mxu0 0.0
  %3669 = vmatpush2.msra.mxu0 0.0
  %3670 = vmatprep.subr.mxu0 0.0
  %3671 = vmatpush2.msra.mxu0 0.0
  %3672 = vmatprep.subr.mxu0 0.0
  %3673 = vmatpush2.msra.mxu0 0.0
  %3674 = vmatprep.subr.mxu0 0.0
  %3675 = vmatpush2.msra.mxu0 0.0
  %3676 = vmatprep.subr.mxu0 0.0
  %3677 = vmatpush2.msra.mxu0 0.0
  %3678 = vmatprep.subr.mxu0 0.0
  %3679 = vmatpush2.msra.mxu0 0.0
  %3680 = vmatprep.subr.mxu0 0.0
  %3681 = vmatpush2.msra.mxu0 0.0
  %3682 = vmatprep.mubr.f32.mxu0 0.0
  %3683 = vmatmul.mubr.f32.gmra.mxu0 %v3607
  %v3684 = vpop.f32.mrf.mxu0
  %v3685 = vadd.f32 %v3588, %v3684
  %v3686 = vpop.f32.mrf.mxu0
  %3687 = vmatprep.mubr.f32.mxu0 0.0
  %3688 = vmatmul.mubr.f32.gmra.mxu0 %v3610
  %v3689 = vpop.f32.mrf.mxu0
  %v3690 = vadd.f32 %v3593, %v3689
  %v3691 = vpop.f32.mrf.mxu0
  %3692 = vmatprep.mubr.f32.mxu0 0.0
  %3693 = vmatmul.mubr.f32.gmra.mxu0 %v3613
  %v3694 = vpop.f32.mrf.mxu0
  %v3695 = vadd.f32 %v3598, %v3694
  %v3696 = vpop.f32.mrf.mxu0
  %3697 = vmatprep.mubr.f32.mxu0 0.0
  %3698 = vmatmul.mubr.f32.gmra.mxu0 %v3616
  %v3699 = vpop.f32.mrf.mxu0
  %v3700 = vadd.f32 %v3603, %v3699
  %v3701 = vpop.f32.mrf.mxu0
  %3702 = vdwg.mxu0
  %v3703 = vld [vmem:[#allocation6 + $0x2] sm:$0xff]
  %v3704 = vld [vmem:[#allocation6 + $0xa] sm:$0xff]
  %v3705 = vld [vmem:[#allocation6 + $0x12] sm:$0xff]
  %v3706 = vld [vmem:[#allocation6 + $0x1a] sm:$0x3f]
  %s3707 = scalar_lea.vmem %s13, 128
  %v3708 = vld [vmem:[%s3707] sm:$0xff]
  %v3709 = vld [vmem:[%s3707 + $0x8] sm:$0xff]
  %v3710 = vld [vmem:[%s3707 + $0x10] sm:$0xff]
  %v3711 = vld [vmem:[%s3707 + $0x18] sm:$0xff]
  %v3712 = vld [vmem:[%s3707 + $0x20] sm:$0xff]
  %v3713 = vld [vmem:[%s3707 + $0x28] sm:$0xff]
  %v3714 = vld [vmem:[%s3707 + $0x30] sm:$0xff]
  %v3715 = vld [vmem:[%s3707 + $0x38] sm:$0xff]
  %v3717 = vsel %vm86, %v3703, 0
  %v3720 = vsel %vm86, %v3704, 0
  %v3723 = vsel %vm86, %v3705, 0
  %v3726 = vsel %vm86, %v3706, 0
  %3728 = vmatprep.subr.mxu0 0.0
  %3729 = vmatpush1.msra.mxu0 0.0
  %3730 = vmatprep.subr.mxu0 0.0
  %3731 = vmatpush1.msra.mxu0 0.0
  %3732 = vmatprep.subr.mxu0 0.0
  %3733 = vmatpush1.msra.mxu0 0.0
  %3734 = vmatprep.subr.mxu0 0.0
  %3735 = vmatpush1.msra.mxu0 0.0
  %3736 = vmatprep.subr.mxu0 0.0
  %3737 = vmatpush1.msra.mxu0 0.0
  %3738 = vmatprep.subr.mxu0 0.0
  %3739 = vmatpush1.msra.mxu0 0.0
  %3740 = vmatprep.subr.mxu0 0.0
  %3741 = vmatpush1.msra.mxu0 0.0
  %3742 = vmatprep.subr.mxu0 0.0
  %3743 = vmatpush1.msra.mxu0 0.0
  %3744 = vmatprep.subr.mxu0 0.0
  %3745 = vmatpush1.msra.mxu0 %v3715
  %3746 = vmatprep.subr.mxu0 0.0
  %3747 = vmatpush1.msra.mxu0 %v3714
  %3748 = vmatprep.subr.mxu0 0.0
  %3749 = vmatpush1.msra.mxu0 %v3713
  %3750 = vmatprep.subr.mxu0 0.0
  %3751 = vmatpush1.msra.mxu0 %v3712
  %3752 = vmatprep.subr.mxu0 0.0
  %3753 = vmatpush1.msra.mxu0 %v3711
  %3754 = vmatprep.subr.mxu0 0.0
  %3755 = vmatpush1.msra.mxu0 %v3710
  %3756 = vmatprep.subr.mxu0 0.0
  %3757 = vmatpush1.msra.mxu0 %v3709
  %3758 = vmatprep.subr.mxu0 0.0
  %3759 = vmatpush1.msra.mxu0 %v3708
  %3760 = vmatprep.subr.mxu0 0.0
  %3761 = vmatpush2.msra.mxu0 0.0
  %3762 = vmatprep.subr.mxu0 0.0
  %3763 = vmatpush2.msra.mxu0 0.0
  %3764 = vmatprep.subr.mxu0 0.0
  %3765 = vmatpush2.msra.mxu0 0.0
  %3766 = vmatprep.subr.mxu0 0.0
  %3767 = vmatpush2.msra.mxu0 0.0
  %3768 = vmatprep.subr.mxu0 0.0
  %3769 = vmatpush2.msra.mxu0 0.0
  %3770 = vmatprep.subr.mxu0 0.0
  %3771 = vmatpush2.msra.mxu0 0.0
  %3772 = vmatprep.subr.mxu0 0.0
  %3773 = vmatpush2.msra.mxu0 0.0
  %3774 = vmatprep.subr.mxu0 0.0
  %3775 = vmatpush2.msra.mxu0 0.0
  %3776 = vmatprep.subr.mxu0 0.0
  %3777 = vmatpush2.msra.mxu0 0.0
  %3778 = vmatprep.subr.mxu0 0.0
  %3779 = vmatpush2.msra.mxu0 0.0
  %3780 = vmatprep.subr.mxu0 0.0
  %3781 = vmatpush2.msra.mxu0 0.0
  %3782 = vmatprep.subr.mxu0 0.0
  %3783 = vmatpush2.msra.mxu0 0.0
  %3784 = vmatprep.subr.mxu0 0.0
  %3785 = vmatpush2.msra.mxu0 0.0
  %3786 = vmatprep.subr.mxu0 0.0
  %3787 = vmatpush2.msra.mxu0 0.0
  %3788 = vmatprep.subr.mxu0 0.0
  %3789 = vmatpush2.msra.mxu0 0.0
  %3790 = vmatprep.subr.mxu0 0.0
  %3791 = vmatpush2.msra.mxu0 0.0
  %3792 = vmatprep.mubr.f32.mxu0 0.0
  %3793 = vmatmul.mubr.f32.gmra.mxu0 %v3717
  %v3794 = vpop.f32.mrf.mxu0
  %v3795 = vadd.f32 0.0, %v3794
  %v3796 = vpop.f32.mrf.mxu0
  %3797 = vmatprep.mubr.f32.mxu0 0.0
  %3798 = vmatmul.mubr.f32.gmra.mxu0 %v3720
  %v3799 = vpop.f32.mrf.mxu0
  %v3800 = vadd.f32 0.0, %v3799
  %v3801 = vpop.f32.mrf.mxu0
  %3802 = vmatprep.mubr.f32.mxu0 0.0
  %3803 = vmatmul.mubr.f32.gmra.mxu0 %v3723
  %v3804 = vpop.f32.mrf.mxu0
  %v3805 = vadd.f32 0.0, %v3804
  %v3806 = vpop.f32.mrf.mxu0
  %3807 = vmatprep.mubr.f32.mxu0 0.0
  %3808 = vmatmul.mubr.f32.gmra.mxu0 %v3726
  %v3809 = vpop.f32.mrf.mxu0
  %v3810 = vadd.f32 0.0, %v3809
  %v3811 = vpop.f32.mrf.mxu0
  %3812 = vdwg.mxu0
  %v3813 = vadd.f32 %v3685, %v3795
  %v3814 = vadd.f32 %v3690, %v3800
  %v3815 = vadd.f32 %v3695, %v3805
  %v3816 = vadd.f32 %v3700, %v3810
  %v3817 = vld [vmem:[%s14] sm:$0x1]
  %v3819 = vlaneseq
  %v3820 = vshrl.u32 %v3819, 7
  %v3821 = vsub.s32 0, %v3820
  %v3822 = vrot.slane %v3817, %v3821
  %v3824 = vadd.f32 %v3813, %v3822
  %v3825 = vadd.f32 %v3814, %v3822
  %v3826 = vadd.f32 %v3815, %v3822
  %v3827 = vadd.f32 %v3816, %v3822
  %vm3828 = vcmp.ge.f32.partialorder %v3824, 0.0
  %vm3829 = vcmp.ge.f32.partialorder %v3825, 0.0
  %vm3830 = vcmp.ge.f32.partialorder %v3826, 0.0
  %vm3831 = vcmp.ge.f32.partialorder %v3827, 0.0
  %v3832 = vmul.f32 %v3824, 0.15
  %v3833 = vmul.f32 %v3825, 0.15
  %v3834 = vmul.f32 %v3826, 0.15
  %v3835 = vmul.f32 %v3827, 0.15
  %v3836 = vsel %vm3828, %v3824, %v3832
  %v3837 = vsel %vm3829, %v3825, %v3833
  %v3838 = vsel %vm3830, %v3826, %v3834
  %v3839 = vsel %vm3831, %v3827, %v3835
  %v3840 = vld [vmem:[%s15] sm:$0xf]
  %vm3841 = vcmask 244736
  %v3843 = vsel %vm3841, %v3840, 0
  %vm3845 = vcmask 1045504
  %v3847 = vsel %vm3845, %v3839, 0
  %3849 = vmatprep.subr.mxu0 0.0
  %3850 = vmatpush1.msra.mxu0 0.0
  %3851 = vmatprep.subr.mxu0 0.0
  %3852 = vmatpush1.msra.mxu0 0.0
  %3853 = vmatprep.subr.mxu0 0.0
  %3854 = vmatpush1.msra.mxu0 0.0
  %3855 = vmatprep.subr.mxu0 0.0
  %3856 = vmatpush1.msra.mxu0 0.0
  %3857 = vmatprep.subr.mxu0 0.0
  %3858 = vmatpush1.msra.mxu0 0.0
  %3859 = vmatprep.subr.mxu0 0.0
  %3860 = vmatpush1.msra.mxu0 0.0
  %3861 = vmatprep.subr.mxu0 0.0
  %3862 = vmatpush1.msra.mxu0 0.0
  %3863 = vmatprep.subr.mxu0 0.0
  %3864 = vmatpush1.msra.mxu0 0.0
  %3865 = vmatprep.subr.mxu0 0.0
  %3866 = vmatpush1.msra.mxu0 0.0
  %3867 = vmatprep.subr.mxu0 0.0
  %3868 = vmatpush1.msra.mxu0 0.0
  %3869 = vmatprep.subr.mxu0 0.0
  %3870 = vmatpush1.msra.mxu0 0.0
  %3871 = vmatprep.subr.mxu0 0.0
  %3872 = vmatpush1.msra.mxu0 0.0
  %3873 = vmatprep.subr.mxu0 0.0
  %3874 = vmatpush1.msra.mxu0 %v3847
  %3875 = vmatprep.subr.mxu0 0.0
  %3876 = vmatpush1.msra.mxu0 %v3838
  %3877 = vmatprep.subr.mxu0 0.0
  %3878 = vmatpush1.msra.mxu0 %v3837
  %3879 = vmatprep.subr.mxu0 0.0
  %3880 = vmatpush1.msra.mxu0 %v3836
  %3881 = vmatprep.subr.mxu0 0.0
  %3882 = vmatpush2.msra.mxu0 0.0
  %3883 = vmatprep.subr.mxu0 0.0
  %3884 = vmatpush2.msra.mxu0 0.0
  %3885 = vmatprep.subr.mxu0 0.0
  %3886 = vmatpush2.msra.mxu0 0.0
  %3887 = vmatprep.subr.mxu0 0.0
  %3888 = vmatpush2.msra.mxu0 0.0
  %3889 = vmatprep.subr.mxu0 0.0
  %3890 = vmatpush2.msra.mxu0 0.0
  %3891 = vmatprep.subr.mxu0 0.0
  %3892 = vmatpush2.msra.mxu0 0.0
  %3893 = vmatprep.subr.mxu0 0.0
  %3894 = vmatpush2.msra.mxu0 0.0
  %3895 = vmatprep.subr.mxu0 0.0
  %3896 = vmatpush2.msra.mxu0 0.0
  %3897 = vmatprep.subr.mxu0 0.0
  %3898 = vmatpush2.msra.mxu0 0.0
  %3899 = vmatprep.subr.mxu0 0.0
  %3900 = vmatpush2.msra.mxu0 0.0
  %3901 = vmatprep.subr.mxu0 0.0
  %3902 = vmatpush2.msra.mxu0 0.0
  %3903 = vmatprep.subr.mxu0 0.0
  %3904 = vmatpush2.msra.mxu0 0.0
  %3905 = vmatprep.subr.mxu0 0.0
  %3906 = vmatpush2.msra.mxu0 0.0
  %3907 = vmatprep.subr.mxu0 0.0
  %3908 = vmatpush2.msra.mxu0 0.0
  %3909 = vmatprep.subr.mxu0 0.0
  %3910 = vmatpush2.msra.mxu0 0.0
  %3911 = vmatprep.subr.mxu0 0.0
  %3912 = vmatpush2.msra.mxu0 0.0
  %3913 = vmatprep.mubr.f32.mxu0 0.0
  %3914 = vmatmul.mubr.f32.gmra.mxu0 %v3843
  %v3915 = vpop.f32.mrf.mxu0
  %v3916 = vadd.f32 0.0, %v3915
  %v3917 = vpop.f32.mrf.mxu0
  %3918 = vdwg.mxu0
  %v3919 = vld [vmem:[%s16] sm:$0xff]
  %v3920 = vld [vmem:[%s16 + $0x8] sm:$0xff]
  %v3921 = vld [vmem:[%s16 + $0x10] sm:$0xff]
  %v3922 = vld [vmem:[%s16 + $0x18] sm:$0xff]
  %vm3923 = vcmask 261120
  %v3925 = vsel %vm3923, %v3916, 0
  %3927 = vmatprep.subr.mxu0 0.0
  %3928 = vmatpush1.msra.mxu0 0.0
  %3929 = vmatprep.subr.mxu0 0.0
  %3930 = vmatpush1.msra.mxu0 0.0
  %3931 = vmatprep.subr.mxu0 0.0
  %3932 = vmatpush1.msra.mxu0 0.0
  %3933 = vmatprep.subr.mxu0 0.0
  %3934 = vmatpush1.msra.mxu0 0.0
  %3935 = vmatprep.subr.mxu0 0.0
  %3936 = vmatpush1.msra.mxu0 0.0
  %3937 = vmatprep.subr.mxu0 0.0
  %3938 = vmatpush1.msra.mxu0 0.0
  %3939 = vmatprep.subr.mxu0 0.0
  %3940 = vmatpush1.msra.mxu0 0.0
  %3941 = vmatprep.subr.mxu0 0.0
  %3942 = vmatpush1.msra.mxu0 0.0
  %3943 = vmatprep.subr.mxu0 0.0
  %3944 = vmatpush1.msra.mxu0 0.0
  %3945 = vmatprep.subr.mxu0 0.0
  %3946 = vmatpush1.msra.mxu0 0.0
  %3947 = vmatprep.subr.mxu0 0.0
  %3948 = vmatpush1.msra.mxu0 0.0
  %3949 = vmatprep.subr.mxu0 0.0
  %3950 = vmatpush1.msra.mxu0 0.0
  %3951 = vmatprep.subr.mxu0 0.0
  %3952 = vmatpush1.msra.mxu0 %v3922
  %3953 = vmatprep.subr.mxu0 0.0
  %3954 = vmatpush1.msra.mxu0 %v3921
  %3955 = vmatprep.subr.mxu0 0.0
  %3956 = vmatpush1.msra.mxu0 %v3920
  %3957 = vmatprep.subr.mxu0 0.0
  %3958 = vmatpush1.msra.mxu0 %v3919
  %3959 = vmatprep.subr.mxu0 0.0
  %3960 = vmatpush2.msra.mxu0 0.0
  %3961 = vmatprep.subr.mxu0 0.0
  %3962 = vmatpush2.msra.mxu0 0.0
  %3963 = vmatprep.subr.mxu0 0.0
  %3964 = vmatpush2.msra.mxu0 0.0
  %3965 = vmatprep.subr.mxu0 0.0
  %3966 = vmatpush2.msra.mxu0 0.0
  %3967 = vmatprep.subr.mxu0 0.0
  %3968 = vmatpush2.msra.mxu0 0.0
  %3969 = vmatprep.subr.mxu0 0.0
  %3970 = vmatpush2.msra.mxu0 0.0
  %3971 = vmatprep.subr.mxu0 0.0
  %3972 = vmatpush2.msra.mxu0 0.0
  %3973 = vmatprep.subr.mxu0 0.0
  %3974 = vmatpush2.msra.mxu0 0.0
  %3975 = vmatprep.subr.mxu0 0.0
  %3976 = vmatpush2.msra.mxu0 0.0
  %3977 = vmatprep.subr.mxu0 0.0
  %3978 = vmatpush2.msra.mxu0 0.0
  %3979 = vmatprep.subr.mxu0 0.0
  %3980 = vmatpush2.msra.mxu0 0.0
  %3981 = vmatprep.subr.mxu0 0.0
  %3982 = vmatpush2.msra.mxu0 0.0
  %3983 = vmatprep.subr.mxu0 0.0
  %3984 = vmatpush2.msra.mxu0 0.0
  %3985 = vmatprep.subr.mxu0 0.0
  %3986 = vmatpush2.msra.mxu0 0.0
  %3987 = vmatprep.subr.mxu0 0.0
  %3988 = vmatpush2.msra.mxu0 0.0
  %3989 = vmatprep.subr.mxu0 0.0
  %3990 = vmatpush2.msra.mxu0 0.0
  %3991 = vmatprep.mubr.f32.mxu0 0.0
  %3992 = vmatmul.mubr.f32.gmra.mxu0 %v3925
  %v3993 = vpop.f32.mrf.mxu0
  %v3994 = vadd.f32 0.0, %v3993
  %v3995 = vpop.f32.mrf.mxu0
  %3996 = vdwg.mxu0
  %v3997 = vmul.f32 %v3994, %v3994
  %vm3998 = vcmask 257024
  %v3999 = vsel %vm3998, %v3997, 0.0
  %4000 = vadd.xlane.f32.xlu0 %v3999
  %v4001 = vpop.xlane.xlu0 %4000
  %v4002 = vmax.f32 %v4001, 1e-24
  %v4003 = vrsqrt.pop %v4002
  %v4004 = vmul.f32 %v3994, %v4003
  %v4005 = vld [vmem:[%s17] sm:$0x3]
  %vm4006 = vcmask 31744
  %v4008 = vsel %vm4006, %v4005, 0
  %vm4010 = vcmask 1043456
  %v4012 = vsel %vm4010, %v4004, 0
  %4014 = vmatprep.subr.mxu0 0.0
  %4015 = vmatpush1.msra.mxu0 0.0
  %4016 = vmatprep.subr.mxu0 0.0
  %4017 = vmatpush1.msra.mxu0 0.0
  %4018 = vmatprep.subr.mxu0 0.0
  %4019 = vmatpush1.msra.mxu0 0.0
  %4020 = vmatprep.subr.mxu0 0.0
  %4021 = vmatpush1.msra.mxu0 0.0
  %4022 = vmatprep.subr.mxu0 0.0
  %4023 = vmatpush1.msra.mxu0 0.0
  %4024 = vmatprep.subr.mxu0 0.0
  %4025 = vmatpush1.msra.mxu0 0.0
  %4026 = vmatprep.subr.mxu0 0.0
  %4027 = vmatpush1.msra.mxu0 0.0
  %4028 = vmatprep.subr.mxu0 0.0
  %4029 = vmatpush1.msra.mxu0 0.0
  %4030 = vmatprep.subr.mxu0 0.0
  %4031 = vmatpush1.msra.mxu0 0.0
  %4032 = vmatprep.subr.mxu0 0.0
  %4033 = vmatpush1.msra.mxu0 0.0
  %4034 = vmatprep.subr.mxu0 0.0
  %4035 = vmatpush1.msra.mxu0 0.0
  %4036 = vmatprep.subr.mxu0 0.0
  %4037 = vmatpush1.msra.mxu0 0.0
  %4038 = vmatprep.subr.mxu0 0.0
  %4039 = vmatpush1.msra.mxu0 0.0
  %4040 = vmatprep.subr.mxu0 0.0
  %4041 = vmatpush1.msra.mxu0 0.0
  %4042 = vmatprep.subr.mxu0 0.0
  %4043 = vmatpush1.msra.mxu0 0.0
  %4044 = vmatprep.subr.mxu0 0.0
  %4045 = vmatpush1.msra.mxu0 %v4012
  %4046 = vmatprep.subr.mxu0 0.0
  %4047 = vmatpush2.msra.mxu0 0.0
  %4048 = vmatprep.subr.mxu0 0.0
  %4049 = vmatpush2.msra.mxu0 0.0
  %4050 = vmatprep.subr.mxu0 0.0
  %4051 = vmatpush2.msra.mxu0 0.0
  %4052 = vmatprep.subr.mxu0 0.0
  %4053 = vmatpush2.msra.mxu0 0.0
  %4054 = vmatprep.subr.mxu0 0.0
  %4055 = vmatpush2.msra.mxu0 0.0
  %4056 = vmatprep.subr.mxu0 0.0
  %4057 = vmatpush2.msra.mxu0 0.0
  %4058 = vmatprep.subr.mxu0 0.0
  %4059 = vmatpush2.msra.mxu0 0.0
  %4060 = vmatprep.subr.mxu0 0.0
  %4061 = vmatpush2.msra.mxu0 0.0
  %4062 = vmatprep.subr.mxu0 0.0
  %4063 = vmatpush2.msra.mxu0 0.0
  %4064 = vmatprep.subr.mxu0 0.0
  %4065 = vmatpush2.msra.mxu0 0.0
  %4066 = vmatprep.subr.mxu0 0.0
  %4067 = vmatpush2.msra.mxu0 0.0
  %4068 = vmatprep.subr.mxu0 0.0
  %4069 = vmatpush2.msra.mxu0 0.0
  %4070 = vmatprep.subr.mxu0 0.0
  %4071 = vmatpush2.msra.mxu0 0.0
  %4072 = vmatprep.subr.mxu0 0.0
  %4073 = vmatpush2.msra.mxu0 0.0
  %4074 = vmatprep.subr.mxu0 0.0
  %4075 = vmatpush2.msra.mxu0 0.0
  %4076 = vmatprep.subr.mxu0 0.0
  %4077 = vmatpush2.msra.mxu0 0.0
  %4078 = vmatprep.mubr.f32.mxu0 0.0
  %4079 = vmatmul.mubr.f32.gmra.mxu0 %v4008
  %v4080 = vpop.f32.mrf.mxu0
  %v4081 = vadd.f32 0.0, %v4080
  %v4082 = vpop.f32.mrf.mxu0
  %4083 = vdwg.mxu0
  %v4084 = vmul.f32 %v4081, %v4081
  %v4085 = vld [vmem:[%s18] sm:$0xff]
  %v4086 = vld [vmem:[%s18 + $0x8] sm:$0xff]
  %v4087 = vld [vmem:[%s18 + $0x10] sm:$0xff]
  %v4088 = vld [vmem:[%s18 + $0x18] sm:$0xff]
  %v4089 = vld [vmem:[%s19] sm:$0x1]
  %v4091 = vlaneseq
  %v4092 = vshrl.u32 %v4091, 7
  %v4093 = vsub.s32 0, %v4092
  %v4094 = vrot.slane %v4089, %v4093
  %v4097 = vsel %vm3923, %v4084, 0
  %4099 = vmatprep.subr.mxu0 0.0
  %4100 = vmatpush1.msra.mxu0 0.0
  %4101 = vmatprep.subr.mxu0 0.0
  %4102 = vmatpush1.msra.mxu0 0.0
  %4103 = vmatprep.subr.mxu0 0.0
  %4104 = vmatpush1.msra.mxu0 0.0
  %4105 = vmatprep.subr.mxu0 0.0
  %4106 = vmatpush1.msra.mxu0 0.0
  %4107 = vmatprep.subr.mxu0 0.0
  %4108 = vmatpush1.msra.mxu0 0.0
  %4109 = vmatprep.subr.mxu0 0.0
  %4110 = vmatpush1.msra.mxu0 0.0
  %4111 = vmatprep.subr.mxu0 0.0
  %4112 = vmatpush1.msra.mxu0 0.0
  %4113 = vmatprep.subr.mxu0 0.0
  %4114 = vmatpush1.msra.mxu0 0.0
  %4115 = vmatprep.subr.mxu0 0.0
  %4116 = vmatpush1.msra.mxu0 0.0
  %4117 = vmatprep.subr.mxu0 0.0
  %4118 = vmatpush1.msra.mxu0 0.0
  %4119 = vmatprep.subr.mxu0 0.0
  %4120 = vmatpush1.msra.mxu0 0.0
  %4121 = vmatprep.subr.mxu0 0.0
  %4122 = vmatpush1.msra.mxu0 0.0
  %4123 = vmatprep.subr.mxu0 0.0
  %4124 = vmatpush1.msra.mxu0 %v4088
  %4125 = vmatprep.subr.mxu0 0.0
  %4126 = vmatpush1.msra.mxu0 %v4087
  %4127 = vmatprep.subr.mxu0 0.0
  %4128 = vmatpush1.msra.mxu0 %v4086
  %4129 = vmatprep.subr.mxu0 0.0
  %4130 = vmatpush1.msra.mxu0 %v4085
  %4131 = vmatprep.subr.mxu0 0.0
  %4132 = vmatpush2.msra.mxu0 0.0
  %4133 = vmatprep.subr.mxu0 0.0
  %4134 = vmatpush2.msra.mxu0 0.0
  %4135 = vmatprep.subr.mxu0 0.0
  %4136 = vmatpush2.msra.mxu0 0.0
  %4137 = vmatprep.subr.mxu0 0.0
  %4138 = vmatpush2.msra.mxu0 0.0
  %4139 = vmatprep.subr.mxu0 0.0
  %4140 = vmatpush2.msra.mxu0 0.0
  %4141 = vmatprep.subr.mxu0 0.0
  %4142 = vmatpush2.msra.mxu0 0.0
  %4143 = vmatprep.subr.mxu0 0.0
  %4144 = vmatpush2.msra.mxu0 0.0
  %4145 = vmatprep.subr.mxu0 0.0
  %4146 = vmatpush2.msra.mxu0 0.0
  %4147 = vmatprep.subr.mxu0 0.0
  %4148 = vmatpush2.msra.mxu0 0.0
  %4149 = vmatprep.subr.mxu0 0.0
  %4150 = vmatpush2.msra.mxu0 0.0
  %4151 = vmatprep.subr.mxu0 0.0
  %4152 = vmatpush2.msra.mxu0 0.0
  %4153 = vmatprep.subr.mxu0 0.0
  %4154 = vmatpush2.msra.mxu0 0.0
  %4155 = vmatprep.subr.mxu0 0.0
  %4156 = vmatpush2.msra.mxu0 0.0
  %4157 = vmatprep.subr.mxu0 0.0
  %4158 = vmatpush2.msra.mxu0 0.0
  %4159 = vmatprep.subr.mxu0 0.0
  %4160 = vmatpush2.msra.mxu0 0.0
  %4161 = vmatprep.subr.mxu0 0.0
  %4162 = vmatpush2.msra.mxu0 0.0
  %4163 = vmatprep.mubr.f32.mxu0 0.0
  %4164 = vmatmul.mubr.f32.gmra.mxu0 %v4097
  %v4165 = vpop.f32.mrf.mxu0
  %v4166 = vadd.f32 %v4094, %v4165
  %v4167 = vpop.f32.mrf.mxu0
  %4168 = vdwg.mxu0
  %vm4169 = vcmp.ge.f32.partialorder %v4166, 0.0
  %v4170 = vmul.f32 %v4166, 0.15
  %v4171 = vsel %vm4169, %v4166, %v4170
  %v4172 = vld [vmem:[%s20] sm:$0xff]
  %v4173 = vld [vmem:[%s20 + $0x8] sm:$0xff]
  %v4174 = vld [vmem:[#allocation11] sm:$0x1]
  %v4176 = vlaneseq
  %v4177 = vshrl.u32 %v4176, 7
  %v4178 = vsub.s32 0, %v4177
  %v4179 = vrot.slane %v4174, %v4178
  %v4182 = vsel %vm73, %v4171, 0
  %4184 = vmatprep.subr.mxu0 0.0
  %4185 = vmatpush1.msra.mxu0 0.0
  %4186 = vmatprep.subr.mxu0 0.0
  %4187 = vmatpush1.msra.mxu0 0.0
  %4188 = vmatprep.subr.mxu0 0.0
  %4189 = vmatpush1.msra.mxu0 0.0
  %4190 = vmatprep.subr.mxu0 0.0
  %4191 = vmatpush1.msra.mxu0 0.0
  %4192 = vmatprep.subr.mxu0 0.0
  %4193 = vmatpush1.msra.mxu0 0.0
  %4194 = vmatprep.subr.mxu0 0.0
  %4195 = vmatpush1.msra.mxu0 0.0
  %4196 = vmatprep.subr.mxu0 0.0
  %4197 = vmatpush1.msra.mxu0 0.0
  %4198 = vmatprep.subr.mxu0 0.0
  %4199 = vmatpush1.msra.mxu0 0.0
  %4200 = vmatprep.subr.mxu0 0.0
  %4201 = vmatpush1.msra.mxu0 0.0
  %4202 = vmatprep.subr.mxu0 0.0
  %4203 = vmatpush1.msra.mxu0 0.0
  %4204 = vmatprep.subr.mxu0 0.0
  %4205 = vmatpush1.msra.mxu0 0.0
  %4206 = vmatprep.subr.mxu0 0.0
  %4207 = vmatpush1.msra.mxu0 0.0
  %4208 = vmatprep.subr.mxu0 0.0
  %4209 = vmatpush1.msra.mxu0 0.0
  %4210 = vmatprep.subr.mxu0 0.0
  %4211 = vmatpush1.msra.mxu0 0.0
  %4212 = vmatprep.subr.mxu0 0.0
  %4213 = vmatpush1.msra.mxu0 %v4173
  %4214 = vmatprep.subr.mxu0 0.0
  %4215 = vmatpush1.msra.mxu0 %v4172
  %4216 = vmatprep.subr.mxu0 0.0
  %4217 = vmatpush2.msra.mxu0 0.0
  %4218 = vmatprep.subr.mxu0 0.0
  %4219 = vmatpush2.msra.mxu0 0.0
  %4220 = vmatprep.subr.mxu0 0.0
  %4221 = vmatpush2.msra.mxu0 0.0
  %4222 = vmatprep.subr.mxu0 0.0
  %4223 = vmatpush2.msra.mxu0 0.0
  %4224 = vmatprep.subr.mxu0 0.0
  %4225 = vmatpush2.msra.mxu0 0.0
  %4226 = vmatprep.subr.mxu0 0.0
  %4227 = vmatpush2.msra.mxu0 0.0
  %4228 = vmatprep.subr.mxu0 0.0
  %4229 = vmatpush2.msra.mxu0 0.0
  %4230 = vmatprep.subr.mxu0 0.0
  %4231 = vmatpush2.msra.mxu0 0.0
  %4232 = vmatprep.subr.mxu0 0.0
  %4233 = vmatpush2.msra.mxu0 0.0
  %4234 = vmatprep.subr.mxu0 0.0
  %4235 = vmatpush2.msra.mxu0 0.0
  %4236 = vmatprep.subr.mxu0 0.0
  %4237 = vmatpush2.msra.mxu0 0.0
  %4238 = vmatprep.subr.mxu0 0.0
  %4239 = vmatpush2.msra.mxu0 0.0
  %4240 = vmatprep.subr.mxu0 0.0
  %4241 = vmatpush2.msra.mxu0 0.0
  %4242 = vmatprep.subr.mxu0 0.0
  %4243 = vmatpush2.msra.mxu0 0.0
  %4244 = vmatprep.subr.mxu0 0.0
  %4245 = vmatpush2.msra.mxu0 0.0
  %4246 = vmatprep.subr.mxu0 0.0
  %4247 = vmatpush2.msra.mxu0 0.0
  %4248 = vmatprep.mubr.f32.mxu0 0.0
  %4249 = vmatmul.mubr.f32.gmra.mxu0 %v4182
  %v4250 = vpop.f32.mrf.mxu0
  %v4251 = vadd.f32 %v4179, %v4250
  %v4252 = vpop.f32.mrf.mxu0
  %4253 = vdwg.mxu0
  %v4254 = vxor.u32 %v4251, 2147483648
  %v4255 = vmul.f32 %v4254, 1.442695
  %v4256 = vpow.pop %v4255
  %v4257 = vadd.f32 %v4256, 1.0
  %v4258 = vrcp.pop %v4257
  %v4259 = vmul.f32 1.0, %v4258
  %vm4260 = vcmask 1024
  %4261 = vst.msk [vmem:[%s22] sm:$0x3] %vm4260, %v4259
  // Predicated region
  $region90: #{siamese_forward.1} parent=0 // pred_check
    _
  $region91: #{siamese_forward.1} parent=0 // pred_check_branch
    %4263 = sbr.rel (0) target = $region93
  $region92: #{siamese_forward.1} parent=0 // pred_region
    _
  $region93: #{siamese_forward.1} parent=0 // pred_fallthru
    _
  // Predicated region
  $region94: #{siamese_forward.1} parent=0 // pred_check
    _
  $region95: #{siamese_forward.1} parent=0 // pred_check_branch
    %4265 = sbr.rel (0) target = $region97
  $region96: #{siamese_forward.1} parent=0 // pred_region
    _
  $region97: #{siamese_forward.1} parent=0 // pred_fallthru
    _

</llo_original>
